<compile_context>
chip_gen: v7x
topology: tpu7x:2x2x1
jax: 0.10.0
libtpu: 0.0.40
codegen_flags: <defaults>
</compile_context>

<pallas_src>
import jax
import jax.numpy as jnp
from jax.experimental import pallas as pl
from jax.experimental.pallas import tpu as pltpu

K = 7              # largest kernel size -> unified 7x7x7 window
PAD = K // 2       # 3 ("same" padding of the 7^3 branch)
NTAP2 = K * K      # 49 (kd, kh) taps = matmul contraction axis
KDIM = 56          # 49 padded up to a multiple of 8


def _round_up(x, m):
    return (x + m - 1) // m * m


# ----------------------------- Pallas kernel --------------------------------
def _make_kernel(tq, win, row_offs, center):
    tqe = tq + 128  # patch-row length: covers the 7 width-tap lane shifts

    def kernel(xflat_ref, w_ref, b_cat_ref, w_red_ref, b_red_ref, o_ref):
        # xflat_ref : (1, 1, L)   zero-padded flattened volume (VMEM)
        # w_ref     : (7, 32, 56) per-width-tap embedded branch weights (bf16)
        # b_cat_ref : (32, 1)     concat-branch biases
        # w_red_ref : (1, 32)     1x1x1 reduce-conv weights
        # b_red_ref : (1,)        reduce-conv bias (SMEM scalar)
        # o_ref     : (1, 1, TQ)  lane-dense output tile
        q0 = pl.multiple_of(pl.program_id(1) * tq, 128)
        xwin = xflat_ref[0, :, pl.ds(q0, win)]                 # (1, WIN) f32

        # Build the 49 (kd, kh) patch rows from static lane slices of the
        # window; pad the contraction axis to 56 with zero rows.
        rows = [xwin[:, off:off + tqe] for off in row_offs]    # 49 x (1, TQE)
        rows.append(jnp.zeros((KDIM - NTAP2, tqe), jnp.float32))
        m = jnp.concatenate(rows, axis=0).astype(jnp.bfloat16)  # (56, TQE)

        # 7 width taps -> 7 MXU matmuls, f32 accumulation, P on lanes.
        acc = jnp.zeros((32, tq), jnp.float32)
        for kw in range(K):
            acc += jnp.dot(w_ref[kw], m[:, kw:kw + tq],
                           preferred_element_type=jnp.float32)
        h = jnp.maximum(acc + b_cat_ref[...], 0.0)             # (32, TQ)

        # 1x1x1 reduce conv as a second tiny MXU matmul -> (1, TQ) lane-dense.
        red = jnp.dot(w_red_ref[...], h, preferred_element_type=jnp.float32)
        red = jnp.maximum(red + b_red_ref[0], 0.0)

        res = xwin[:, center:center + tq]                      # residual (f32)
        o_ref[0, :, :] = red + res

    return kernel


# ----------------------------- JAX glue --------------------------------------
def _prepare_params(params):
    """Embed the 4 branch kernels centered in a 7^3 window, reorder for the
    transposed matmul: w_all[kw, c, kd*7+kh] = W_full[c, kd, kh, kw]."""
    mats = []
    for name in ("w1", "w3", "w5", "w7"):       # torch.cat channel order
        w = params[name]                         # (8, 1, k, k, k)
        k = w.shape[-1]
        o = (K - k) // 2
        full = jnp.zeros((w.shape[0], K, K, K), w.dtype)
        full = full.at[:, o:o + k, o:o + k, o:o + k].set(w[:, 0])
        mats.append(full)
    w_full = jnp.concatenate(mats, axis=0)                     # (32, 7, 7, 7)
    w_all = jnp.transpose(w_full, (3, 0, 1, 2)).reshape(K, 32, NTAP2)
    w_all = jnp.pad(w_all, ((0, 0), (0, 0), (0, KDIM - NTAP2)))
    w_all = w_all.astype(jnp.bfloat16)                         # (7, 32, 56)
    b_cat = jnp.concatenate([params["b1"], params["b3"],
                             params["b5"], params["b7"]]).reshape(32, 1)
    w_red = params["wr"].reshape(1, 32)
    b_red = params["br"].reshape(1)
    return w_all, b_cat, w_red, b_red


def mase_forward(x, params, *, tile_q=512):
    """x: (N, 1, D, H, W) float32 (NCDHW, like the PyTorch module)."""
    N, C, D, H, W = x.shape
    assert C == 1
    Dp, Hp, Wp = D + 2 * PAD, H + 2 * PAD, W + 2 * PAD
    hpwp = Hp * Wp

    # Layout glue (tiny, pure JAX): zero-pad the volume and flatten it.
    xp = jnp.pad(x[:, 0], ((0, 0), (PAD, PAD), (PAD, PAD), (PAD, PAD)))
    xflat = xp.reshape(N, Dp * hpwp)

    # Over-computed flat output domain and tiling.
    q_valid = (D - 1) * hpwp + (H - 1) * Wp + W     # max valid flat index + 1
    tq = tile_q                                      # multiple of 128
    nq = pl.cdiv(q_valid, tq)
    qp = nq * tq

    row_offs = [kd * hpwp + kh * Wp for kd in range(K) for kh in range(K)]
    center = PAD * hpwp + PAD * Wp + PAD
    win = _round_up(row_offs[-1] + 128, 128) + tq    # covers all tap offsets

    L = _round_up(max(Dp * hpwp, (nq - 1) * tq + win), 128)
    xflat = jnp.pad(xflat, ((0, 0), (0, L - Dp * hpwp)))[:, None, :]  # (N,1,L)

    w_all, b_cat, w_red, b_red = _prepare_params(params)

    kernel = _make_kernel(tq, win, row_offs, center)
    out = pl.pallas_call(
        kernel,
        out_shape=jax.ShapeDtypeStruct((N, 1, qp), jnp.float32),
        grid=(N, nq),
        in_specs=[
            pl.BlockSpec((1, 1, L), lambda n, j: (n, 0, 0)),      # flat volume
            pl.BlockSpec((K, 32, KDIM), lambda n, j: (0, 0, 0)),  # branch wts
            pl.BlockSpec((32, 1), lambda n, j: (0, 0)),           # branch bias
            pl.BlockSpec((1, 32), lambda n, j: (0, 0)),           # reduce wts
            pl.BlockSpec(memory_space=pltpu.SMEM),                # reduce bias
        ],
        out_specs=pl.BlockSpec((1, 1, tq), lambda n, j: (n, 0, j)),
        compiler_params=pltpu.CompilerParams(
            dimension_semantics=("parallel", "parallel")),
    )(xflat, w_all, b_cat, w_red, b_red)

    # Discard the padding-straddling (over-computed) columns.
    full_len = D * hpwp
    out = out.reshape(N, qp)
    if qp < full_len:
        out = jnp.pad(out, ((0, 0), (0, full_len - qp)))
    else:
        out = out[:, :full_len]
    out = out.reshape(N, D, Hp, Wp)[:, :, :H, :W]
    return out.reshape(N, 1, D, H, W)


# ----------------------------- reference (pure JAX) ---------------------------
def mase_reference(x, params):
    dn = ("NCDHW", "OIDHW", "NCDHW")

    def conv(inp, w, b, pad):
        y = jax.lax.conv_general_dilated(
            inp, w, (1, 1, 1), [(pad, pad)] * 3, dimension_numbers=dn,
            precision=jax.lax.Precision.DEFAULT)
        return y + b.reshape(1, -1, 1, 1, 1)

    x1 = jax.nn.relu(conv(x, params["w1"], params["b1"], 0))
    x3 = jax.nn.relu(conv(x, params["w3"], params["b3"], 1))
    x5 = jax.nn.relu(conv(x, params["w5"], params["b5"], 2))
    x7 = jax.nn.relu(conv(x, params["w7"], params["b7"], 3))
    cat = jnp.concatenate([x1, x3, x5, x7], axis=1)
    red = conv(cat, params["wr"], params["br"], 0)
    return jax.nn.relu(red) + x


# ----------------------------- main -------------------------------------------
if __name__ == "__main__":
    key = jax.random.PRNGKey(0)
    ks = jax.random.split(key, 11)

    params = {
        "w1": jax.random.normal(ks[0], (8, 1, 1, 1, 1), jnp.float32) * 0.1,
        "b1": jax.random.normal(ks[1], (8,), jnp.float32) * 0.1,
        "w3": jax.random.normal(ks[2], (8, 1, 3, 3, 3), jnp.float32) * 0.1,
        "b3": jax.random.normal(ks[3], (8,), jnp.float32) * 0.1,
        "w5": jax.random.normal(ks[4], (8, 1, 5, 5, 5), jnp.float32) * 0.1,
        "b5": jax.random.normal(ks[5], (8,), jnp.float32) * 0.1,
        "w7": jax.random.normal(ks[6], (8, 1, 7, 7, 7), jnp.float32) * 0.1,
        "b7": jax.random.normal(ks[7], (8,), jnp.float32) * 0.1,
        "wr": jax.random.normal(ks[8], (1, 32, 1, 1, 1), jnp.float32) * 0.1,
        "br": jax.random.normal(ks[9], (1,), jnp.float32) * 0.1,
    }

    # NCDHW input, single channel (matches the PyTorch module's Conv3d(1, ...))
    x = jax.random.normal(ks[10], (2, 1, 8, 8, 8), jnp.float32)

    out = jax.block_until_ready(mase_forward(x, params))
    ref = jax.block_until_ready(mase_reference(x, params))

    assert out.shape == (2, 1, 8, 8, 8)
    # Both kernel and reference use single-pass bf16 MXU matmuls with f32
    # accumulation; remaining differences are accumulation-order noise plus
    # occasional 1-ulp bf16 rounding flips of the intermediate activations.
    err = jnp.max(jnp.abs(out - ref))
    assert err < 5e-3, f"max abs error too large: {err}"

    print("KERNEL_OK")
</pallas_src>

<mosaic_0001>
module attributes {stable_mosaic.version = 11 : i64} {
  func.func @kernel(%arg0: i32, %arg1: i32, %arg2: memref<1x1x2944xf32, #tpu.memory_space<vmem>>, %arg3: memref<7x32x56xbf16, #tpu.memory_space<vmem>>, %arg4: memref<32x1xf32, #tpu.memory_space<vmem>>, %arg5: memref<1x32xf32, #tpu.memory_space<vmem>>, %arg6: memref<1xf32, #tpu.memory_space<smem>>, %arg7: memref<1x1x512xf32, #tpu.memory_space<vmem>>) attributes {dimension_semantics = [#tpu.dimension_semantics<parallel>, #tpu.dimension_semantics<parallel>], iteration_bounds = array<i64: 2, 3>, scalar_prefetch = 0 : i64, scratch_operands = 0 : i64, tpu.core_type = #tpu.core_type<tc>, window_params = [{transform_indices = @transform_0, window_bounds = array<i64: 1, 1, 2944>}, {pipeline_mode = #tpu.pipeline_mode<synchronous>, transform_indices = @transform_1, window_bounds = array<i64: 7, 32, 56>}, {pipeline_mode = #tpu.pipeline_mode<synchronous>, transform_indices = @transform_2, window_bounds = array<i64: 32, 1>}, {pipeline_mode = #tpu.pipeline_mode<synchronous>, transform_indices = @transform_3, window_bounds = array<i64: 1, 32>}, {transform_indices = @transform_4, window_bounds = array<i64: 1>}, {transform_indices = @transform_5, window_bounds = array<i64: 1, 1, 512>}]} {
    %c512_i32 = arith.constant 512 : i32
    %0 = arith.muli %arg1, %c512_i32 : i32
    %1 = tpu.assume_multiple %0, 128 : i32
    %c0 = arith.constant 0 : index
    %c0_0 = arith.constant 0 : index
    %2 = arith.index_cast %1 : i32 to index
    %3 = vector.load %arg2[%c0, %c0_0, %2] : memref<1x1x2944xf32, #tpu.memory_space<vmem>>, vector<1x1x1920xf32>
    %4 = vector.shape_cast %3 : vector<1x1x1920xf32> to vector<1x1920xf32>
    %5 = vector.extract_strided_slice %4 {offsets = [0, 0], sizes = [1, 640], strides = [1, 1]} : vector<1x1920xf32> to vector<1x640xf32>
    %6 = vector.extract_strided_slice %4 {offsets = [0, 14], sizes = [1, 640], strides = [1, 1]} : vector<1x1920xf32> to vector<1x640xf32>
    %7 = vector.extract_strided_slice %4 {offsets = [0, 28], sizes = [1, 640], strides = [1, 1]} : vector<1x1920xf32> to vector<1x640xf32>
    %8 = vector.extract_strided_slice %4 {offsets = [0, 42], sizes = [1, 640], strides = [1, 1]} : vector<1x1920xf32> to vector<1x640xf32>
    %9 = vector.extract_strided_slice %4 {offsets = [0, 56], sizes = [1, 640], strides = [1, 1]} : vector<1x1920xf32> to vector<1x640xf32>
    %10 = vector.extract_strided_slice %4 {offsets = [0, 70], sizes = [1, 640], strides = [1, 1]} : vector<1x1920xf32> to vector<1x640xf32>
    %11 = vector.extract_strided_slice %4 {offsets = [0, 84], sizes = [1, 640], strides = [1, 1]} : vector<1x1920xf32> to vector<1x640xf32>
    %12 = vector.extract_strided_slice %4 {offsets = [0, 196], sizes = [1, 640], strides = [1, 1]} : vector<1x1920xf32> to vector<1x640xf32>
    %13 = vector.extract_strided_slice %4 {offsets = [0, 210], sizes = [1, 640], strides = [1, 1]} : vector<1x1920xf32> to vector<1x640xf32>
    %14 = vector.extract_strided_slice %4 {offsets = [0, 224], sizes = [1, 640], strides = [1, 1]} : vector<1x1920xf32> to vector<1x640xf32>
    %15 = vector.extract_strided_slice %4 {offsets = [0, 238], sizes = [1, 640], strides = [1, 1]} : vector<1x1920xf32> to vector<1x640xf32>
    %16 = vector.extract_strided_slice %4 {offsets = [0, 252], sizes = [1, 640], strides = [1, 1]} : vector<1x1920xf32> to vector<1x640xf32>
    %17 = vector.extract_strided_slice %4 {offsets = [0, 266], sizes = [1, 640], strides = [1, 1]} : vector<1x1920xf32> to vector<1x640xf32>
    %18 = vector.extract_strided_slice %4 {offsets = [0, 280], sizes = [1, 640], strides = [1, 1]} : vector<1x1920xf32> to vector<1x640xf32>
    %19 = vector.extract_strided_slice %4 {offsets = [0, 392], sizes = [1, 640], strides = [1, 1]} : vector<1x1920xf32> to vector<1x640xf32>
    %20 = vector.extract_strided_slice %4 {offsets = [0, 406], sizes = [1, 640], strides = [1, 1]} : vector<1x1920xf32> to vector<1x640xf32>
    %21 = vector.extract_strided_slice %4 {offsets = [0, 420], sizes = [1, 640], strides = [1, 1]} : vector<1x1920xf32> to vector<1x640xf32>
    %22 = vector.extract_strided_slice %4 {offsets = [0, 434], sizes = [1, 640], strides = [1, 1]} : vector<1x1920xf32> to vector<1x640xf32>
    %23 = vector.extract_strided_slice %4 {offsets = [0, 448], sizes = [1, 640], strides = [1, 1]} : vector<1x1920xf32> to vector<1x640xf32>
    %24 = vector.extract_strided_slice %4 {offsets = [0, 462], sizes = [1, 640], strides = [1, 1]} : vector<1x1920xf32> to vector<1x640xf32>
    %25 = vector.extract_strided_slice %4 {offsets = [0, 476], sizes = [1, 640], strides = [1, 1]} : vector<1x1920xf32> to vector<1x640xf32>
    %26 = vector.extract_strided_slice %4 {offsets = [0, 588], sizes = [1, 640], strides = [1, 1]} : vector<1x1920xf32> to vector<1x640xf32>
    %27 = vector.extract_strided_slice %4 {offsets = [0, 602], sizes = [1, 640], strides = [1, 1]} : vector<1x1920xf32> to vector<1x640xf32>
    %28 = vector.extract_strided_slice %4 {offsets = [0, 616], sizes = [1, 640], strides = [1, 1]} : vector<1x1920xf32> to vector<1x640xf32>
    %29 = vector.extract_strided_slice %4 {offsets = [0, 630], sizes = [1, 640], strides = [1, 1]} : vector<1x1920xf32> to vector<1x640xf32>
    %30 = vector.extract_strided_slice %4 {offsets = [0, 644], sizes = [1, 640], strides = [1, 1]} : vector<1x1920xf32> to vector<1x640xf32>
    %31 = vector.extract_strided_slice %4 {offsets = [0, 658], sizes = [1, 640], strides = [1, 1]} : vector<1x1920xf32> to vector<1x640xf32>
    %32 = vector.extract_strided_slice %4 {offsets = [0, 672], sizes = [1, 640], strides = [1, 1]} : vector<1x1920xf32> to vector<1x640xf32>
    %33 = vector.extract_strided_slice %4 {offsets = [0, 784], sizes = [1, 640], strides = [1, 1]} : vector<1x1920xf32> to vector<1x640xf32>
    %34 = vector.extract_strided_slice %4 {offsets = [0, 798], sizes = [1, 640], strides = [1, 1]} : vector<1x1920xf32> to vector<1x640xf32>
    %35 = vector.extract_strided_slice %4 {offsets = [0, 812], sizes = [1, 640], strides = [1, 1]} : vector<1x1920xf32> to vector<1x640xf32>
    %36 = vector.extract_strided_slice %4 {offsets = [0, 826], sizes = [1, 640], strides = [1, 1]} : vector<1x1920xf32> to vector<1x640xf32>
    %37 = vector.extract_strided_slice %4 {offsets = [0, 840], sizes = [1, 640], strides = [1, 1]} : vector<1x1920xf32> to vector<1x640xf32>
    %38 = vector.extract_strided_slice %4 {offsets = [0, 854], sizes = [1, 640], strides = [1, 1]} : vector<1x1920xf32> to vector<1x640xf32>
    %39 = vector.extract_strided_slice %4 {offsets = [0, 868], sizes = [1, 640], strides = [1, 1]} : vector<1x1920xf32> to vector<1x640xf32>
    %40 = vector.extract_strided_slice %4 {offsets = [0, 980], sizes = [1, 640], strides = [1, 1]} : vector<1x1920xf32> to vector<1x640xf32>
    %41 = vector.extract_strided_slice %4 {offsets = [0, 994], sizes = [1, 640], strides = [1, 1]} : vector<1x1920xf32> to vector<1x640xf32>
    %42 = vector.extract_strided_slice %4 {offsets = [0, 1008], sizes = [1, 640], strides = [1, 1]} : vector<1x1920xf32> to vector<1x640xf32>
    %43 = vector.extract_strided_slice %4 {offsets = [0, 1022], sizes = [1, 640], strides = [1, 1]} : vector<1x1920xf32> to vector<1x640xf32>
    %44 = vector.extract_strided_slice %4 {offsets = [0, 1036], sizes = [1, 640], strides = [1, 1]} : vector<1x1920xf32> to vector<1x640xf32>
    %45 = vector.extract_strided_slice %4 {offsets = [0, 1050], sizes = [1, 640], strides = [1, 1]} : vector<1x1920xf32> to vector<1x640xf32>
    %46 = vector.extract_strided_slice %4 {offsets = [0, 1064], sizes = [1, 640], strides = [1, 1]} : vector<1x1920xf32> to vector<1x640xf32>
    %47 = vector.extract_strided_slice %4 {offsets = [0, 1176], sizes = [1, 640], strides = [1, 1]} : vector<1x1920xf32> to vector<1x640xf32>
    %48 = vector.extract_strided_slice %4 {offsets = [0, 1190], sizes = [1, 640], strides = [1, 1]} : vector<1x1920xf32> to vector<1x640xf32>
    %49 = vector.extract_strided_slice %4 {offsets = [0, 1204], sizes = [1, 640], strides = [1, 1]} : vector<1x1920xf32> to vector<1x640xf32>
    %50 = vector.extract_strided_slice %4 {offsets = [0, 1218], sizes = [1, 640], strides = [1, 1]} : vector<1x1920xf32> to vector<1x640xf32>
    %51 = vector.extract_strided_slice %4 {offsets = [0, 1232], sizes = [1, 640], strides = [1, 1]} : vector<1x1920xf32> to vector<1x640xf32>
    %52 = vector.extract_strided_slice %4 {offsets = [0, 1246], sizes = [1, 640], strides = [1, 1]} : vector<1x1920xf32> to vector<1x640xf32>
    %53 = vector.extract_strided_slice %4 {offsets = [0, 1260], sizes = [1, 640], strides = [1, 1]} : vector<1x1920xf32> to vector<1x640xf32>
    %cst = arith.constant 0.000000e+00 : f32
    %54 = vector.broadcast %cst : f32 to vector<7x640xf32>
    %55 = tpu.concatenate %5, %6, %7, %8, %9, %10, %11, %12, %13, %14, %15, %16, %17, %18, %19, %20 in 0 : vector<1x640xf32>, vector<1x640xf32>, vector<1x640xf32>, vector<1x640xf32>, vector<1x640xf32>, vector<1x640xf32>, vector<1x640xf32>, vector<1x640xf32>, vector<1x640xf32>, vector<1x640xf32>, vector<1x640xf32>, vector<1x640xf32>, vector<1x640xf32>, vector<1x640xf32>, vector<1x640xf32>, vector<1x640xf32> -> vector<16x640xf32>
    %56 = tpu.concatenate %21, %22, %23, %24, %25, %26, %27, %28, %29, %30, %31, %32, %33, %34, %35, %36 in 0 : vector<1x640xf32>, vector<1x640xf32>, vector<1x640xf32>, vector<1x640xf32>, vector<1x640xf32>, vector<1x640xf32>, vector<1x640xf32>, vector<1x640xf32>, vector<1x640xf32>, vector<1x640xf32>, vector<1x640xf32>, vector<1x640xf32>, vector<1x640xf32>, vector<1x640xf32>, vector<1x640xf32>, vector<1x640xf32> -> vector<16x640xf32>
    %57 = tpu.concatenate %37, %38, %39, %40, %41, %42, %43, %44, %45, %46, %47, %48, %49, %50, %51, %52 in 0 : vector<1x640xf32>, vector<1x640xf32>, vector<1x640xf32>, vector<1x640xf32>, vector<1x640xf32>, vector<1x640xf32>, vector<1x640xf32>, vector<1x640xf32>, vector<1x640xf32>, vector<1x640xf32>, vector<1x640xf32>, vector<1x640xf32>, vector<1x640xf32>, vector<1x640xf32>, vector<1x640xf32>, vector<1x640xf32> -> vector<16x640xf32>
    %58 = tpu.concatenate %53, %54 in 0 : vector<1x640xf32>, vector<7x640xf32> -> vector<8x640xf32>
    %59 = tpu.concatenate %55, %56, %57, %58 in 0 : vector<16x640xf32>, vector<16x640xf32>, vector<16x640xf32>, vector<8x640xf32> -> vector<56x640xf32>
    %60 = arith.truncf %59 : vector<56x640xf32> to vector<56x640xbf16>
    %cst_1 = arith.constant 0.000000e+00 : f32
    %61 = vector.broadcast %cst_1 : f32 to vector<32x512xf32>
    %c0_2 = arith.constant 0 : index
    %c0_3 = arith.constant 0 : index
    %c0_4 = arith.constant 0 : index
    %62 = vector.load %arg3[%c0_2, %c0_3, %c0_4] : memref<7x32x56xbf16, #tpu.memory_space<vmem>>, vector<1x32x56xbf16>
    %63 = vector.shape_cast %62 : vector<1x32x56xbf16> to vector<32x56xbf16>
    %64 = vector.extract_strided_slice %60 {offsets = [0, 0], sizes = [56, 512], strides = [1, 1]} : vector<56x640xbf16> to vector<56x512xbf16>
    %cst_5 = arith.constant dense<0.000000e+00> : vector<32x512xf32>
    %65 = tpu.matmul %63, %64, %cst_5 {dimension_numbers = #tpu.dot_dimension_numbers<[1], [0], [0], [1], [0, 0, 1, 1], [], []>} : vector<32x56xbf16>, vector<56x512xbf16>, vector<32x512xf32> -> vector<32x512xf32>
    %66 = arith.addf %61, %65 : vector<32x512xf32>
    %c1 = arith.constant 1 : index
    %c0_6 = arith.constant 0 : index
    %c0_7 = arith.constant 0 : index
    %67 = vector.load %arg3[%c1, %c0_6, %c0_7] : memref<7x32x56xbf16, #tpu.memory_space<vmem>>, vector<1x32x56xbf16>
    %68 = vector.shape_cast %67 : vector<1x32x56xbf16> to vector<32x56xbf16>
    %69 = vector.extract_strided_slice %60 {offsets = [0, 1], sizes = [56, 512], strides = [1, 1]} : vector<56x640xbf16> to vector<56x512xbf16>
    %cst_8 = arith.constant dense<0.000000e+00> : vector<32x512xf32>
    %70 = tpu.matmul %68, %69, %cst_8 {dimension_numbers = #tpu.dot_dimension_numbers<[1], [0], [0], [1], [0, 0, 1, 1], [], []>} : vector<32x56xbf16>, vector<56x512xbf16>, vector<32x512xf32> -> vector<32x512xf32>
    %71 = arith.addf %66, %70 : vector<32x512xf32>
    %c2 = arith.constant 2 : index
    %c0_9 = arith.constant 0 : index
    %c0_10 = arith.constant 0 : index
    %72 = vector.load %arg3[%c2, %c0_9, %c0_10] : memref<7x32x56xbf16, #tpu.memory_space<vmem>>, vector<1x32x56xbf16>
    %73 = vector.shape_cast %72 : vector<1x32x56xbf16> to vector<32x56xbf16>
    %74 = vector.extract_strided_slice %60 {offsets = [0, 2], sizes = [56, 512], strides = [1, 1]} : vector<56x640xbf16> to vector<56x512xbf16>
    %cst_11 = arith.constant dense<0.000000e+00> : vector<32x512xf32>
    %75 = tpu.matmul %73, %74, %cst_11 {dimension_numbers = #tpu.dot_dimension_numbers<[1], [0], [0], [1], [0, 0, 1, 1], [], []>} : vector<32x56xbf16>, vector<56x512xbf16>, vector<32x512xf32> -> vector<32x512xf32>
    %76 = arith.addf %71, %75 : vector<32x512xf32>
    %c3 = arith.constant 3 : index
    %c0_12 = arith.constant 0 : index
    %c0_13 = arith.constant 0 : index
    %77 = vector.load %arg3[%c3, %c0_12, %c0_13] : memref<7x32x56xbf16, #tpu.memory_space<vmem>>, vector<1x32x56xbf16>
    %78 = vector.shape_cast %77 : vector<1x32x56xbf16> to vector<32x56xbf16>
    %79 = vector.extract_strided_slice %60 {offsets = [0, 3], sizes = [56, 512], strides = [1, 1]} : vector<56x640xbf16> to vector<56x512xbf16>
    %cst_14 = arith.constant dense<0.000000e+00> : vector<32x512xf32>
    %80 = tpu.matmul %78, %79, %cst_14 {dimension_numbers = #tpu.dot_dimension_numbers<[1], [0], [0], [1], [0, 0, 1, 1], [], []>} : vector<32x56xbf16>, vector<56x512xbf16>, vector<32x512xf32> -> vector<32x512xf32>
    %81 = arith.addf %76, %80 : vector<32x512xf32>
    %c4 = arith.constant 4 : index
    %c0_15 = arith.constant 0 : index
    %c0_16 = arith.constant 0 : index
    %82 = vector.load %arg3[%c4, %c0_15, %c0_16] : memref<7x32x56xbf16, #tpu.memory_space<vmem>>, vector<1x32x56xbf16>
    %83 = vector.shape_cast %82 : vector<1x32x56xbf16> to vector<32x56xbf16>
    %84 = vector.extract_strided_slice %60 {offsets = [0, 4], sizes = [56, 512], strides = [1, 1]} : vector<56x640xbf16> to vector<56x512xbf16>
    %cst_17 = arith.constant dense<0.000000e+00> : vector<32x512xf32>
    %85 = tpu.matmul %83, %84, %cst_17 {dimension_numbers = #tpu.dot_dimension_numbers<[1], [0], [0], [1], [0, 0, 1, 1], [], []>} : vector<32x56xbf16>, vector<56x512xbf16>, vector<32x512xf32> -> vector<32x512xf32>
    %86 = arith.addf %81, %85 : vector<32x512xf32>
    %c5 = arith.constant 5 : index
    %c0_18 = arith.constant 0 : index
    %c0_19 = arith.constant 0 : index
    %87 = vector.load %arg3[%c5, %c0_18, %c0_19] : memref<7x32x56xbf16, #tpu.memory_space<vmem>>, vector<1x32x56xbf16>
    %88 = vector.shape_cast %87 : vector<1x32x56xbf16> to vector<32x56xbf16>
    %89 = vector.extract_strided_slice %60 {offsets = [0, 5], sizes = [56, 512], strides = [1, 1]} : vector<56x640xbf16> to vector<56x512xbf16>
    %cst_20 = arith.constant dense<0.000000e+00> : vector<32x512xf32>
    %90 = tpu.matmul %88, %89, %cst_20 {dimension_numbers = #tpu.dot_dimension_numbers<[1], [0], [0], [1], [0, 0, 1, 1], [], []>} : vector<32x56xbf16>, vector<56x512xbf16>, vector<32x512xf32> -> vector<32x512xf32>
    %91 = arith.addf %86, %90 : vector<32x512xf32>
    %c6 = arith.constant 6 : index
    %c0_21 = arith.constant 0 : index
    %c0_22 = arith.constant 0 : index
    %92 = vector.load %arg3[%c6, %c0_21, %c0_22] : memref<7x32x56xbf16, #tpu.memory_space<vmem>>, vector<1x32x56xbf16>
    %93 = vector.shape_cast %92 : vector<1x32x56xbf16> to vector<32x56xbf16>
    %94 = vector.extract_strided_slice %60 {offsets = [0, 6], sizes = [56, 512], strides = [1, 1]} : vector<56x640xbf16> to vector<56x512xbf16>
    %cst_23 = arith.constant dense<0.000000e+00> : vector<32x512xf32>
    %95 = tpu.matmul %93, %94, %cst_23 {dimension_numbers = #tpu.dot_dimension_numbers<[1], [0], [0], [1], [0, 0, 1, 1], [], []>} : vector<32x56xbf16>, vector<56x512xbf16>, vector<32x512xf32> -> vector<32x512xf32>
    %96 = arith.addf %91, %95 : vector<32x512xf32>
    %c0_24 = arith.constant 0 : index
    %c0_25 = arith.constant 0 : index
    %97 = vector.load %arg4[%c0_24, %c0_25] : memref<32x1xf32, #tpu.memory_space<vmem>>, vector<32x1xf32>
    %98 = vector.broadcast %97 : vector<32x1xf32> to vector<32x512xf32>
    %99 = arith.addf %96, %98 : vector<32x512xf32>
    %cst_26 = arith.constant 0.000000e+00 : f32
    %100 = vector.broadcast %cst_26 : f32 to vector<32x512xf32>
    %101 = arith.maximumf %99, %100 : vector<32x512xf32>
    %c0_27 = arith.constant 0 : index
    %c0_28 = arith.constant 0 : index
    %102 = vector.load %arg5[%c0_27, %c0_28] : memref<1x32xf32, #tpu.memory_space<vmem>>, vector<1x32xf32>
    %cst_29 = arith.constant dense<0.000000e+00> : vector<1x512xf32>
    %103 = tpu.matmul %102, %101, %cst_29 {dimension_numbers = #tpu.dot_dimension_numbers<[1], [0], [0], [1], [0, 0, 1, 1], [], []>} : vector<1x32xf32>, vector<32x512xf32>, vector<1x512xf32> -> vector<1x512xf32>
    %c0_30 = arith.constant 0 : index
    %104 = memref.load %arg6[%c0_30] : memref<1xf32, #tpu.memory_space<smem>>
    %105 = vector.broadcast %104 : f32 to vector<1x512xf32>
    %106 = arith.addf %103, %105 : vector<1x512xf32>
    %cst_31 = arith.constant 0.000000e+00 : f32
    %107 = vector.broadcast %cst_31 : f32 to vector<1x512xf32>
    %108 = arith.maximumf %106, %107 : vector<1x512xf32>
    %109 = vector.extract_strided_slice %4 {offsets = [0, 633], sizes = [1, 512], strides = [1, 1]} : vector<1x1920xf32> to vector<1x512xf32>
    %110 = arith.addf %108, %109 : vector<1x512xf32>
    %c0_32 = arith.constant 0 : index
    %c0_33 = arith.constant 0 : index
    %c0_34 = arith.constant 0 : index
    %111 = vector.load %arg7[%c0_32, %c0_33, %c0_34] : memref<1x1x512xf32, #tpu.memory_space<vmem>>, vector<1x1x512xf32>
    %112 = vector.shape_cast %111 : vector<1x1x512xf32> to vector<1x512xf32>
    %113 = vector.shape_cast %110 : vector<1x512xf32> to vector<1x1x512xf32>
    tpu.vector_store %arg7[%c0_32, %c0_33, %c0_34], %113 {strides = array<i32>} : memref<1x1x512xf32, #tpu.memory_space<vmem>>, vector<1x1x512xf32>,
    return
  }
  func.func @transform_0(%arg0: i32, %arg1: i32) -> (i32, i32, i32) {
    %c0_i32 = arith.constant 0 : i32
    %c0_i32_0 = arith.constant 0 : i32
    %c0_i32_1 = arith.constant 0 : i32
    return %arg0, %c0_i32, %c0_i32_0 : i32, i32, i32
  }
  func.func @transform_1(%arg0: i32, %arg1: i32) -> (i32, i32, i32) {
    %c0_i32 = arith.constant 0 : i32
    %c0_i32_0 = arith.constant 0 : i32
    %c0_i32_1 = arith.constant 0 : i32
    %c0_i32_2 = arith.constant 0 : i32
    return %c0_i32, %c0_i32_0, %c0_i32_1 : i32, i32, i32
  }
  func.func @transform_2(%arg0: i32, %arg1: i32) -> (i32, i32) {
    %c0_i32 = arith.constant 0 : i32
    %c0_i32_0 = arith.constant 0 : i32
    %c0_i32_1 = arith.constant 0 : i32
    return %c0_i32, %c0_i32_0 : i32, i32
  }
  func.func @transform_3(%arg0: i32, %arg1: i32) -> (i32, i32) {
    %c0_i32 = arith.constant 0 : i32
    %c0_i32_0 = arith.constant 0 : i32
    %c0_i32_1 = arith.constant 0 : i32
    return %c0_i32, %c0_i32_0 : i32, i32
  }
  func.func @transform_4(%arg0: i32, %arg1: i32) -> i32 {
    %c0_i32 = arith.constant 0 : i32
    %c0_i32_0 = arith.constant 0 : i32
    return %c0_i32 : i32
  }
  func.func @transform_5(%arg0: i32, %arg1: i32) -> (i32, i32, i32) {
    %c0_i32 = arith.constant 0 : i32
    %c0_i32_0 = arith.constant 0 : i32
    return %arg0, %c0_i32, %arg1 : i32, i32, i32
  }
}

</mosaic_0001>

<llo_original>
// kernel: tpu_custom_call.1
$region0: #{tpu_custom_call.1}
  #allocation0 [shape = 'u32[]', space=smem, size = 0x4, offset = 0x4, fixed_abs, tag = 'smem constant byte address 0x4 - core index']
  #allocation1 [shape = 'u32[144,128]{1,0:T(1,128)}', space=vmem, size = 0x12000, scoped, tag = 'internal scratch']
  #allocation2 [shape = 'f32[1]{0:T(128)S(6)}', space=smem, size = 0x200, scoped, tag = 'scoped memory for tpu_custom_call.1']
  %s0 = inlined_call_operand.hbm [shape: f32[2,1,2944], index: 0, kind: input, shape index: {}]
  %s1 = inlined_call_operand.hbm [shape: bf16[7,32,56], index: 1, kind: input, shape index: {}]
  %s2 = inlined_call_operand.vmem [shape: f32[32,1], index: 2, kind: input, shape index: {}]
  %s3 = inlined_call_operand.vmem [shape: f32[1,32], index: 3, kind: input, shape index: {}]
  %s4 = inlined_call_operand.<no memory space> [shape: f32[1], index: 4, kind: input, shape index: {}]
  %s5 = inlined_call_operand.hbm [shape: f32[2,1,1536], index: 5, kind: output, shape index: {}]
  %s6 = sld [smem:[#allocation0]]
  $region61: #{tpu_custom_call.1} parent=0
    _
  %s8 = ssub.s32 1, %s6
  %s9 = scalar_select 0, %s8, %s6
  %10 = sst [smem:[#allocation2]] %s4
  $region1: #{tpu_custom_call.1} parent=0
    #allocation3 [shape = 'u8[23552]{0}', space=vmem, size = 0x5c00, scoped, tag = 'input window, operand 0']
    #allocation4 [shape = 's32[2]{0}', space=sflag, size = 0x8, scoped, tag = 'scoped memory for tpu_custom_call.1']
    #allocation5 [shape = 's32[2]{0}', space=sflag, size = 0x8, scoped, tag = 'scoped memory for tpu_custom_call.1']
    #allocation6 [shape = 'u8[57344]{0}', space=vmem, size = 0xe000, scoped, tag = 'input window, operand 1, single buffered']
    #allocation7 [shape = 's32[1]{0}', space=sflag, size = 0x4, scoped, tag = 'scoped memory for tpu_custom_call.1']
    #allocation8 [shape = 'u8[4096]{0}', space=vmem, size = 0x1000, scoped, tag = 'output window, operand 0']
    %11 = vsyncpa [#allocation4], 0
    %s12 = scalar_lea.sflag [#allocation4], 1
    %13 = vsyncpa %s12, 0
    %14 = vsyncpa [#allocation7], 0
    %15 = vsyncpa [#allocation5], 0
    %s16 = scalar_lea.sflag [#allocation5], 1
    %17 = vsyncpa %s16, 0
    loop: start=0, step=1, limit=8
    $region2: #{tpu_custom_call.1} parent=1 // loop_pre_header
      _
    $region3: #{tpu_custom_call.1} parent=1 // loop_header
      %s19 = sphi 0, %s23
      %p20 = scmp.ge.s32.totalorder %s19, 8
      %s26 = sphi 0, %s38
      %s27 = sphi 0, %s34
      %s28 = sphi 0, %s26
      %s29 = sphi 0, %s27
      %s30 = sphi 0, %s28
      %s31 = sphi 0, %s29
      %s41 = sphi 0, %s43
      %s44 = sphi 0, %s41
      %s45 = sphi 0, %s44
      %s61 = sphi 0, %s45
      %s65 = sphi 0, %s65
      %s67 = sphi 0, %s65
      %s68 = sphi 0, %s67
      %s82 = sphi 0, %s68
      %s86 = sphi 0, %s86
      %s88 = sphi 0, %s86
      %s89 = sphi 0, %s88
      %s103 = sphi 0, %s89
      %s107 = sphi 0, %s107
      %s109 = sphi 0, %s107
      %s110 = sphi 0, %s109
      %s124 = sphi 0, %s110
      %s128 = sphi 0, %s128
      %s130 = sphi 0, %s128
      %s131 = sphi 0, %s130
      %s145 = sphi 0, %s131
      %s153 = sphi 0, %s155
      %s156 = sphi 0, %s153
      %s157 = sphi 0, %s156
      %s173 = sphi 0, %s157
    $region4: #{tpu_custom_call.1} parent=1 // loop_header_branch
      %22 = sbr.rel (%p20) target = $region8
    $region5: #{tpu_custom_call.1} parent=1 // loop_body
      %s24 = ssub.s32 %s19, 1
      %s25 = ssub.s32 %s19, 2
      %s32 = sadd.s32 1, %s27
      %p33 = scmp.ge.s32.totalorder %s32, 3
      %s34 = scalar_select %p33, 0, %s32
      %s35 = sadd.s32 1, %s26
      %s36 = scalar_select %p33, %s35, %s26
      %p37 = scmp.ge.s32.totalorder %s36, 2
      %s38 = scalar_select %p37, 0, %s36
      %s39 = ssub.s32 %s26, %s38
      %p40 = scmp.eq.s32.totalorder %s39, 0
      %s42 = sadd.s32 %s41, 1
      %s43 = scalar_select %p40, %s41, %s42
      %p46 = pneg %p40
      %p47 = scmp.eq.s32.totalorder %s19, 5
      %p48 = por %p46, %p47
      %p49 = scmp.ne.s32.totalorder %s41, %s44
      %p50 = scmp.eq.s32.totalorder %s19, 0
      %p51 = por %p49, %p50
      %p52 = scmp.ne.s32.totalorder %s41, %s44
      %p53 = scmp.eq.s32.totalorder %s24, 5
      %p54 = por %p52, %p53
      %p55 = scmp.ne.s32.totalorder %s44, %s45
      %p56 = scmp.eq.s32.totalorder %s24, 0
      %p57 = por %p55, %p56
      %p58 = scmp.ne.s32.totalorder %s44, %s45
      %p59 = scmp.eq.s32.totalorder %s25, 5
      %p60 = por %p58, %p59
      %p62 = scmp.ne.s32.totalorder %s45, %s61
      %p63 = scmp.eq.s32.totalorder %s25, 0
      %p64 = por %p62, %p63
      %s66 = sadd.s32 %s65, 1
      %p69 = scmp.eq.s32.totalorder %s19, 5
      %p70 = scmp.ne.s32.totalorder %s65, %s67
      %p71 = scmp.eq.s32.totalorder %s19, 0
      %p72 = por %p70, %p71
      %p73 = scmp.ne.s32.totalorder %s65, %s67
      %p74 = scmp.eq.s32.totalorder %s24, 5
      %p75 = por %p73, %p74
      %p76 = scmp.ne.s32.totalorder %s67, %s68
      %p77 = scmp.eq.s32.totalorder %s24, 0
      %p78 = por %p76, %p77
      %p79 = scmp.ne.s32.totalorder %s67, %s68
      %p80 = scmp.eq.s32.totalorder %s25, 5
      %p81 = por %p79, %p80
      %p83 = scmp.ne.s32.totalorder %s68, %s82
      %p84 = scmp.eq.s32.totalorder %s25, 0
      %p85 = por %p83, %p84
      %s87 = sadd.s32 %s86, 1
      %p90 = scmp.eq.s32.totalorder %s19, 5
      %p91 = scmp.ne.s32.totalorder %s86, %s88
      %p92 = scmp.eq.s32.totalorder %s19, 0
      %p93 = por %p91, %p92
      %p94 = scmp.ne.s32.totalorder %s86, %s88
      %p95 = scmp.eq.s32.totalorder %s24, 5
      %p96 = por %p94, %p95
      %p97 = scmp.ne.s32.totalorder %s88, %s89
      %p98 = scmp.eq.s32.totalorder %s24, 0
      %p99 = por %p97, %p98
      %p100 = scmp.ne.s32.totalorder %s88, %s89
      %p101 = scmp.eq.s32.totalorder %s25, 5
      %p102 = por %p100, %p101
      %p104 = scmp.ne.s32.totalorder %s89, %s103
      %p105 = scmp.eq.s32.totalorder %s25, 0
      %p106 = por %p104, %p105
      %s108 = sadd.s32 %s107, 1
      %p111 = scmp.eq.s32.totalorder %s19, 5
      %p112 = scmp.ne.s32.totalorder %s107, %s109
      %p113 = scmp.eq.s32.totalorder %s19, 0
      %p114 = por %p112, %p113
      %p115 = scmp.ne.s32.totalorder %s107, %s109
      %p116 = scmp.eq.s32.totalorder %s24, 5
      %p117 = por %p115, %p116
      %p118 = scmp.ne.s32.totalorder %s109, %s110
      %p119 = scmp.eq.s32.totalorder %s24, 0
      %p120 = por %p118, %p119
      %p121 = scmp.ne.s32.totalorder %s109, %s110
      %p122 = scmp.eq.s32.totalorder %s25, 5
      %p123 = por %p121, %p122
      %p125 = scmp.ne.s32.totalorder %s110, %s124
      %p126 = scmp.eq.s32.totalorder %s25, 0
      %p127 = por %p125, %p126
      %s129 = sadd.s32 %s128, 1
      %p132 = scmp.eq.s32.totalorder %s19, 5
      %p133 = scmp.ne.s32.totalorder %s128, %s130
      %p134 = scmp.eq.s32.totalorder %s19, 0
      %p135 = por %p133, %p134
      %p136 = scmp.ne.s32.totalorder %s128, %s130
      %p137 = scmp.eq.s32.totalorder %s24, 5
      %p138 = por %p136, %p137
      %p139 = scmp.ne.s32.totalorder %s130, %s131
      %p140 = scmp.eq.s32.totalorder %s24, 0
      %p141 = por %p139, %p140
      %p142 = scmp.ne.s32.totalorder %s130, %s131
      %p143 = scmp.eq.s32.totalorder %s25, 5
      %p144 = por %p142, %p143
      %p146 = scmp.ne.s32.totalorder %s131, %s145
      %p147 = scmp.eq.s32.totalorder %s25, 0
      %p148 = por %p146, %p147
      %s149 = ssub.s32 %s26, %s38
      %s150 = ssub.s32 %s27, %s34
      %s151 = sor.u32 %s149, %s150
      %p152 = scmp.eq.s32.totalorder %s151, 0
      %s154 = sadd.s32 %s153, 1
      %s155 = scalar_select %p152, %s153, %s154
      %p158 = pneg %p152
      %p159 = scmp.eq.s32.totalorder %s19, 5
      %p160 = por %p158, %p159
      %p161 = scmp.ne.s32.totalorder %s153, %s156
      %p162 = scmp.eq.s32.totalorder %s19, 0
      %p163 = por %p161, %p162
      %p164 = scmp.ne.s32.totalorder %s153, %s156
      %p165 = scmp.eq.s32.totalorder %s24, 5
      %p166 = por %p164, %p165
      %p167 = scmp.ne.s32.totalorder %s156, %s157
      %p168 = scmp.eq.s32.totalorder %s24, 0
      %p169 = por %p167, %p168
      %p170 = scmp.ne.s32.totalorder %s156, %s157
      %p171 = scmp.eq.s32.totalorder %s25, 5
      %p172 = por %p170, %p171
      %p174 = scmp.ne.s32.totalorder %s157, %s173
      %p175 = scmp.eq.s32.totalorder %s25, 0
      %p176 = por %p174, %p175
      %p177 = scmp.le.s32.totalorder 1, %s19
      %p178 = scmp.lt.s32.totalorder %s19, 7
      %p179 = pnand %p177, %p178
      %p180 = pneg %p179
      // Predicated region
      $region9: #{tpu_custom_call.1} parent=5 // pred_check
        _
      $region10: #{tpu_custom_call.1} parent=5 // pred_check_branch
        %182 = sbr.rel (%p179) target = $region12
      $region11: #{tpu_custom_call.1} parent=5 // pred_region
        %s183 = ssub.s32 %s19, 1
        // Predicated region
        $region13: #{tpu_custom_call.1} parent=11 // pred_check
          %p184 = pneg %p78
        $region14: #{tpu_custom_call.1} parent=11 // pred_check_branch
          %186 = sbr.rel (%p184) target = $region16
        $region15: #{tpu_custom_call.1} parent=11 // pred_region
          %s188 = ssub.s32 1792, 1792
          %189 = vsyncadd [#allocation7], %s188
          %s190 = sshll.u32 [#allocation6], 4
          %s191 = int_to_ptr.vmem [resolvable:$true] %s190
          %196 = dma.hbm_to_vmem [thread:$0]  %s1, 1792, %s191, [#allocation7], 64, 64, 4
        $region16: #{tpu_custom_call.1} parent=11 // pred_fallthru
          _
        // Predicated region
        $region17: #{tpu_custom_call.1} parent=11 // pred_check
          %p197 = pneg %p99
        $region18: #{tpu_custom_call.1} parent=11 // pred_check_branch
          %199 = sbr.rel (%p197) target = $region20
        $region19: #{tpu_custom_call.1} parent=11 // pred_region
          _
        $region20: #{tpu_custom_call.1} parent=11 // pred_fallthru
          _
        // Predicated region
        $region21: #{tpu_custom_call.1} parent=11 // pred_check
          %p200 = pneg %p120
        $region22: #{tpu_custom_call.1} parent=11 // pred_check_branch
          %202 = sbr.rel (%p200) target = $region24
        $region23: #{tpu_custom_call.1} parent=11 // pred_region
          _
        $region24: #{tpu_custom_call.1} parent=11 // pred_fallthru
          _
        // Predicated region
        $region25: #{tpu_custom_call.1} parent=11 // pred_check
          %p203 = pneg %p141
        $region26: #{tpu_custom_call.1} parent=11 // pred_check_branch
          %205 = sbr.rel (%p203) target = $region28
        $region27: #{tpu_custom_call.1} parent=11 // pred_region
          _
        $region28: #{tpu_custom_call.1} parent=11 // pred_fallthru
          _
      $region12: #{tpu_custom_call.1} parent=5 // pred_fallthru
        _
      %p206 = scmp.lt.s32.totalorder %s19, 6
      // Predicated region
      $region29: #{tpu_custom_call.1} parent=5 // pred_check
        %p207 = pneg %p206
      $region30: #{tpu_custom_call.1} parent=5 // pred_check_branch
        %209 = sbr.rel (%p207) target = $region32
      $region31: #{tpu_custom_call.1} parent=5 // pred_region
        // Predicated region
        $region33: #{tpu_custom_call.1} parent=31 // pred_check
          %p210 = pneg %p51
        $region34: #{tpu_custom_call.1} parent=31 // pred_check_branch
          %212 = sbr.rel (%p210) target = $region36
        $region35: #{tpu_custom_call.1} parent=31 // pred_region
          %s213 = sand.u32 %s41, 1
          %s214 = scalar_lea.sflag [#allocation4], %s213
          %s215 = sand.u32 %s41, 1
          %s216 = smul.addr %s215, 23
          %s217 = scalar_lea.vmem [#allocation3], %s216
          %s219 = ssub.s32 368, 368
          %220 = vsyncadd %s214, %s219
          %s221 = smul.addr %s26, 23
          %s222 = smul.addr %s221, 16
          %s223 = scalar_lea.hbm %s0, %s222
          %s225 = sshll.u32 %s217, 4
          %s226 = int_to_ptr.vmem [resolvable:$true] %s225
          %228 = dma.hbm_to_vmem [thread:$0]  %s223, 368, %s226, %s214
        $region36: #{tpu_custom_call.1} parent=31 // pred_fallthru
          _
      $region32: #{tpu_custom_call.1} parent=5 // pred_fallthru
        _
      %p229 = scmp.le.s32.totalorder 1, %s19
      %p230 = scmp.lt.s32.totalorder %s19, 7
      %p231 = pnand %p229, %p230
      %p232 = pneg %p231
      // Predicated region
      $region37: #{tpu_custom_call.1} parent=5 // pred_check
        _
      $region38: #{tpu_custom_call.1} parent=5 // pred_check_branch
        %234 = sbr.rel (%p231) target = $region40
      $region39: #{tpu_custom_call.1} parent=5 // pred_region
        %s235 = ssub.s32 %s19, 1
        %s236 = sand.u32 %s44, 1
        %s237 = scalar_lea.sflag [#allocation4], %s236
        %s238 = sand.u32 %s44, 1
        %s239 = smul.addr %s238, 23
        %s240 = scalar_lea.vmem [#allocation3], %s239
        // Predicated region
        $region41: #{tpu_custom_call.1} parent=39 // pred_check
          %p241 = pneg %p57
        $region42: #{tpu_custom_call.1} parent=39 // pred_check_branch
          %243 = sbr.rel (%p241) target = $region44
        $region43: #{tpu_custom_call.1} parent=39 // pred_region
          %244 = dma.done %s237, 368
        $region44: #{tpu_custom_call.1} parent=39 // pred_fallthru
          _
        // Predicated region
        $region45: #{tpu_custom_call.1} parent=39 // pred_check
          %p245 = pneg %p78
        $region46: #{tpu_custom_call.1} parent=39 // pred_check_branch
          %247 = sbr.rel (%p245) target = $region48
        $region47: #{tpu_custom_call.1} parent=39 // pred_region
          %248 = dma.done [#allocation7], 1792
        $region48: #{tpu_custom_call.1} parent=39 // pred_fallthru
          _
        %s249 = sand.u32 %s44, 1
        %s250 = scalar_lea.sflag [#allocation4], %s249
        %s251 = sand.u32 %s44, 1
        %s252 = smul.addr %s251, 23
        %s253 = scalar_lea.vmem [#allocation3], %s252
        %p254 = pneg %p57
        %p255 = pneg %p54
        %p256 = pneg %p78
        %p257 = pneg %p75
        %p258 = pneg %p99
        %p259 = pneg %p96
        %p260 = pneg %p120
        %p261 = pneg %p117
        %p262 = pneg %p141
        %p263 = pneg %p138
        %p264 = pneg %p169
        %p265 = pneg %p166
        %s266 = sand.u32 %s156, 1
        %s267 = scalar_lea.sflag [#allocation5], %s266
        %s268 = sand.u32 %s156, 1
        %s269 = smul.addr %s268, 4
        %s270 = scalar_lea.vmem [#allocation8], %s269
        %s271 = smul.u32 4, %s29
        %s273 = smul.u32 %s29, 512
        %s274 = sshra.s32 %s273, 7
        %s275 = sand.u32 %s273, 127
        %s276 = scalar_lea.vmem %s240, %s274 [#allocation3]
        %v277 = vld [vmem:[%s276] sm:$0xff]
        %v278 = vld [vmem:[%s276 + $0x8] sm:$0xff]
        %v280 = vlaneseq
        %v281 = vshrl.u32 %v280, 7
        %v282 = vsub.s32 0, %v281
        %v283 = vrot.slane %v277, %v282
        %v284 = vlaneseq
        %v285 = vshrl.u32 %v284, 7
        %v286 = vsub.s32 1, %v285
        %v287 = vrot.slane %v277, %v286
        %v288 = vlaneseq
        %v289 = vshrl.u32 %v288, 7
        %v290 = vsub.s32 2, %v289
        %v291 = vrot.slane %v277, %v290
        %v292 = vlaneseq
        %v293 = vshrl.u32 %v292, 7
        %v294 = vsub.s32 3, %v293
        %v295 = vrot.slane %v277, %v294
        %v296 = vlaneseq
        %v297 = vshrl.u32 %v296, 7
        %v298 = vsub.s32 4, %v297
        %v299 = vrot.slane %v277, %v298
        %v305 = vlaneseq
        %v306 = vshrl.u32 %v305, 7
        %v307 = vsub.s32 5, %v306
        %v308 = vrot.slane %v277, %v307
        %309 = vrot.lane.b32.xlu0 %v283, 114
        %v310 = vpop.permute.xlu0 %309
        %311 = vrot.lane.b32.xlu0 %v287, 114
        %v312 = vpop.permute.xlu0 %311
        %313 = vrot.lane.b32.xlu0 %v291, 114
        %v314 = vpop.permute.xlu0 %313
        %315 = vrot.lane.b32.xlu0 %v295, 114
        %v316 = vpop.permute.xlu0 %315
        %317 = vrot.lane.b32.xlu0 %v299, 114
        %v318 = vpop.permute.xlu0 %317
        %319 = vrot.lane.b32.xlu0 %v308, 114
        %v320 = vpop.permute.xlu0 %319
        %vm321 = vcmask 932864
        %v322 = vsel %vm321, %v310, %v312
        %v323 = vsel %vm321, %v312, %v314
        %v324 = vsel %vm321, %v314, %v316
        %v325 = vsel %vm321, %v316, %v318
        %v326 = vsel %vm321, %v318, %v320
        %332 = vrot.lane.b32.xlu0 %v283, 100
        %v333 = vpop.permute.xlu0 %332
        %334 = vrot.lane.b32.xlu0 %v287, 100
        %v335 = vpop.permute.xlu0 %334
        %336 = vrot.lane.b32.xlu0 %v291, 100
        %v337 = vpop.permute.xlu0 %336
        %338 = vrot.lane.b32.xlu0 %v295, 100
        %v339 = vpop.permute.xlu0 %338
        %340 = vrot.lane.b32.xlu0 %v299, 100
        %v341 = vpop.permute.xlu0 %340
        %342 = vrot.lane.b32.xlu0 %v308, 100
        %v343 = vpop.permute.xlu0 %342
        %vm344 = vcmask 818176
        %v345 = vsel %vm344, %v333, %v335
        %v346 = vsel %vm344, %v335, %v337
        %v347 = vsel %vm344, %v337, %v339
        %v348 = vsel %vm344, %v339, %v341
        %v349 = vsel %vm344, %v341, %v343
        %355 = vrot.lane.b32.xlu0 %v283, 86
        %v356 = vpop.permute.xlu0 %355
        %357 = vrot.lane.b32.xlu0 %v287, 86
        %v358 = vpop.permute.xlu0 %357
        %359 = vrot.lane.b32.xlu0 %v291, 86
        %v360 = vpop.permute.xlu0 %359
        %361 = vrot.lane.b32.xlu0 %v295, 86
        %v362 = vpop.permute.xlu0 %361
        %363 = vrot.lane.b32.xlu0 %v299, 86
        %v364 = vpop.permute.xlu0 %363
        %365 = vrot.lane.b32.xlu0 %v308, 86
        %v366 = vpop.permute.xlu0 %365
        %vm367 = vcmask 703488
        %v368 = vsel %vm367, %v356, %v358
        %v369 = vsel %vm367, %v358, %v360
        %v370 = vsel %vm367, %v360, %v362
        %v371 = vsel %vm367, %v362, %v364
        %v372 = vsel %vm367, %v364, %v366
        %378 = vrot.lane.b32.xlu0 %v283, 72
        %v379 = vpop.permute.xlu0 %378
        %380 = vrot.lane.b32.xlu0 %v287, 72
        %v381 = vpop.permute.xlu0 %380
        %382 = vrot.lane.b32.xlu0 %v291, 72
        %v383 = vpop.permute.xlu0 %382
        %384 = vrot.lane.b32.xlu0 %v295, 72
        %v385 = vpop.permute.xlu0 %384
        %386 = vrot.lane.b32.xlu0 %v299, 72
        %v387 = vpop.permute.xlu0 %386
        %388 = vrot.lane.b32.xlu0 %v308, 72
        %v389 = vpop.permute.xlu0 %388
        %vm390 = vcmask 588800
        %v391 = vsel %vm390, %v379, %v381
        %v392 = vsel %vm390, %v381, %v383
        %v393 = vsel %vm390, %v383, %v385
        %v394 = vsel %vm390, %v385, %v387
        %v395 = vsel %vm390, %v387, %v389
        %401 = vrot.lane.b32.xlu0 %v283, 58
        %v402 = vpop.permute.xlu0 %401
        %403 = vrot.lane.b32.xlu0 %v287, 58
        %v404 = vpop.permute.xlu0 %403
        %405 = vrot.lane.b32.xlu0 %v291, 58
        %v406 = vpop.permute.xlu0 %405
        %407 = vrot.lane.b32.xlu0 %v295, 58
        %v408 = vpop.permute.xlu0 %407
        %409 = vrot.lane.b32.xlu0 %v299, 58
        %v410 = vpop.permute.xlu0 %409
        %411 = vrot.lane.b32.xlu0 %v308, 58
        %v412 = vpop.permute.xlu0 %411
        %vm413 = vcmask 474112
        %v414 = vsel %vm413, %v402, %v404
        %v415 = vsel %vm413, %v404, %v406
        %v416 = vsel %vm413, %v406, %v408
        %v417 = vsel %vm413, %v408, %v410
        %v418 = vsel %vm413, %v410, %v412
        %424 = vrot.lane.b32.xlu0 %v283, 44
        %v425 = vpop.permute.xlu0 %424
        %426 = vrot.lane.b32.xlu0 %v287, 44
        %v427 = vpop.permute.xlu0 %426
        %428 = vrot.lane.b32.xlu0 %v291, 44
        %v429 = vpop.permute.xlu0 %428
        %430 = vrot.lane.b32.xlu0 %v295, 44
        %v431 = vpop.permute.xlu0 %430
        %432 = vrot.lane.b32.xlu0 %v299, 44
        %v433 = vpop.permute.xlu0 %432
        %434 = vrot.lane.b32.xlu0 %v308, 44
        %v435 = vpop.permute.xlu0 %434
        %vm436 = vcmask 359424
        %v437 = vsel %vm436, %v425, %v427
        %v438 = vsel %vm436, %v427, %v429
        %v439 = vsel %vm436, %v429, %v431
        %v440 = vsel %vm436, %v431, %v433
        %v441 = vsel %vm436, %v433, %v435
        %v447 = vlaneseq
        %v448 = vshrl.u32 %v447, 7
        %v449 = vsub.s32 6, %v448
        %v450 = vrot.slane %v277, %v449
        %451 = vrot.lane.b32.xlu0 %v287, 60
        %v452 = vpop.permute.xlu0 %451
        %453 = vrot.lane.b32.xlu0 %v291, 60
        %v454 = vpop.permute.xlu0 %453
        %455 = vrot.lane.b32.xlu0 %v295, 60
        %v456 = vpop.permute.xlu0 %455
        %457 = vrot.lane.b32.xlu0 %v299, 60
        %v458 = vpop.permute.xlu0 %457
        %459 = vrot.lane.b32.xlu0 %v308, 60
        %v460 = vpop.permute.xlu0 %459
        %461 = vrot.lane.b32.xlu0 %v450, 60
        %v462 = vpop.permute.xlu0 %461
        %vm463 = vcmask 490496
        %v464 = vsel %vm463, %v452, %v454
        %v465 = vsel %vm463, %v454, %v456
        %v466 = vsel %vm463, %v456, %v458
        %v467 = vsel %vm463, %v458, %v460
        %v468 = vsel %vm463, %v460, %v462
        %474 = vrot.lane.b32.xlu0 %v287, 46
        %v475 = vpop.permute.xlu0 %474
        %476 = vrot.lane.b32.xlu0 %v291, 46
        %v477 = vpop.permute.xlu0 %476
        %478 = vrot.lane.b32.xlu0 %v295, 46
        %v479 = vpop.permute.xlu0 %478
        %480 = vrot.lane.b32.xlu0 %v299, 46
        %v481 = vpop.permute.xlu0 %480
        %482 = vrot.lane.b32.xlu0 %v308, 46
        %v483 = vpop.permute.xlu0 %482
        %484 = vrot.lane.b32.xlu0 %v450, 46
        %v485 = vpop.permute.xlu0 %484
        %vm486 = vcmask 375808
        %v487 = vsel %vm486, %v475, %v477
        %v488 = vsel %vm486, %v477, %v479
        %v489 = vsel %vm486, %v479, %v481
        %v490 = vsel %vm486, %v481, %v483
        %v491 = vsel %vm486, %v483, %v485
        %497 = vrot.lane.b32.xlu0 %v287, 32
        %v498 = vpop.permute.xlu0 %497
        %499 = vrot.lane.b32.xlu0 %v291, 32
        %v500 = vpop.permute.xlu0 %499
        %501 = vrot.lane.b32.xlu0 %v295, 32
        %v502 = vpop.permute.xlu0 %501
        %503 = vrot.lane.b32.xlu0 %v299, 32
        %v504 = vpop.permute.xlu0 %503
        %505 = vrot.lane.b32.xlu0 %v308, 32
        %v506 = vpop.permute.xlu0 %505
        %507 = vrot.lane.b32.xlu0 %v450, 32
        %v508 = vpop.permute.xlu0 %507
        %vm509 = vcmask 261120
        %v510 = vsel %vm509, %v498, %v500
        %v511 = vsel %vm509, %v500, %v502
        %v512 = vsel %vm509, %v502, %v504
        %v513 = vsel %vm509, %v504, %v506
        %v514 = vsel %vm509, %v506, %v508
        %520 = vrot.lane.b32.xlu0 %v287, 18
        %v521 = vpop.permute.xlu0 %520
        %522 = vrot.lane.b32.xlu0 %v291, 18
        %v523 = vpop.permute.xlu0 %522
        %524 = vrot.lane.b32.xlu0 %v295, 18
        %v525 = vpop.permute.xlu0 %524
        %526 = vrot.lane.b32.xlu0 %v299, 18
        %v527 = vpop.permute.xlu0 %526
        %528 = vrot.lane.b32.xlu0 %v308, 18
        %v529 = vpop.permute.xlu0 %528
        %530 = vrot.lane.b32.xlu0 %v450, 18
        %v531 = vpop.permute.xlu0 %530
        %vm532 = vcmask 146432
        %v533 = vsel %vm532, %v521, %v523
        %v534 = vsel %vm532, %v523, %v525
        %v535 = vsel %vm532, %v525, %v527
        %v536 = vsel %vm532, %v527, %v529
        %v537 = vsel %vm532, %v529, %v531
        %543 = vrot.lane.b32.xlu0 %v287, 4
        %v544 = vpop.permute.xlu0 %543
        %545 = vrot.lane.b32.xlu0 %v291, 4
        %v546 = vpop.permute.xlu0 %545
        %547 = vrot.lane.b32.xlu0 %v295, 4
        %v548 = vpop.permute.xlu0 %547
        %549 = vrot.lane.b32.xlu0 %v299, 4
        %v550 = vpop.permute.xlu0 %549
        %551 = vrot.lane.b32.xlu0 %v308, 4
        %v552 = vpop.permute.xlu0 %551
        %553 = vrot.lane.b32.xlu0 %v450, 4
        %v554 = vpop.permute.xlu0 %553
        %vm555 = vcmask 31744
        %v556 = vsel %vm555, %v544, %v546
        %v557 = vsel %vm555, %v546, %v548
        %v558 = vsel %vm555, %v548, %v550
        %v559 = vsel %vm555, %v550, %v552
        %v560 = vsel %vm555, %v552, %v554
        %v566 = vlaneseq
        %v567 = vshrl.u32 %v566, 7
        %v568 = vsub.s32 7, %v567
        %v569 = vrot.slane %v277, %v568
        %570 = vrot.lane.b32.xlu0 %v291, 118
        %v571 = vpop.permute.xlu0 %570
        %572 = vrot.lane.b32.xlu0 %v295, 118
        %v573 = vpop.permute.xlu0 %572
        %574 = vrot.lane.b32.xlu0 %v299, 118
        %v575 = vpop.permute.xlu0 %574
        %576 = vrot.lane.b32.xlu0 %v308, 118
        %v577 = vpop.permute.xlu0 %576
        %578 = vrot.lane.b32.xlu0 %v450, 118
        %v579 = vpop.permute.xlu0 %578
        %580 = vrot.lane.b32.xlu0 %v569, 118
        %v581 = vpop.permute.xlu0 %580
        %vm582 = vcmask 965632
        %v583 = vsel %vm582, %v571, %v573
        %v584 = vsel %vm582, %v573, %v575
        %v585 = vsel %vm582, %v575, %v577
        %v586 = vsel %vm582, %v577, %v579
        %v587 = vsel %vm582, %v579, %v581
        %593 = vrot.lane.b32.xlu0 %v291, 104
        %v594 = vpop.permute.xlu0 %593
        %595 = vrot.lane.b32.xlu0 %v295, 104
        %v596 = vpop.permute.xlu0 %595
        %597 = vrot.lane.b32.xlu0 %v299, 104
        %v598 = vpop.permute.xlu0 %597
        %599 = vrot.lane.b32.xlu0 %v308, 104
        %v600 = vpop.permute.xlu0 %599
        %601 = vrot.lane.b32.xlu0 %v450, 104
        %v602 = vpop.permute.xlu0 %601
        %603 = vrot.lane.b32.xlu0 %v569, 104
        %v604 = vpop.permute.xlu0 %603
        %vm605 = vcmask 850944
        %v606 = vsel %vm605, %v594, %v596
        %v607 = vsel %vm605, %v596, %v598
        %v608 = vsel %vm605, %v598, %v600
        %v609 = vsel %vm605, %v600, %v602
        %v610 = vsel %vm605, %v602, %v604
        %v617 = vlaneseq
        %v618 = vshrl.u32 %v617, 7
        %v619 = vsub.s32 0, %v618
        %v620 = vrot.slane %v278, %v619
        %621 = vrot.lane.b32.xlu0 %v295, 120
        %v622 = vpop.permute.xlu0 %621
        %623 = vrot.lane.b32.xlu0 %v299, 120
        %v624 = vpop.permute.xlu0 %623
        %625 = vrot.lane.b32.xlu0 %v308, 120
        %v626 = vpop.permute.xlu0 %625
        %627 = vrot.lane.b32.xlu0 %v450, 120
        %v628 = vpop.permute.xlu0 %627
        %629 = vrot.lane.b32.xlu0 %v569, 120
        %v630 = vpop.permute.xlu0 %629
        %631 = vrot.lane.b32.xlu0 %v620, 120
        %v632 = vpop.permute.xlu0 %631
        %vm633 = vcmask 982016
        %v634 = vsel %vm633, %v622, %v624
        %v635 = vsel %vm633, %v624, %v626
        %v636 = vsel %vm633, %v626, %v628
        %v637 = vsel %vm633, %v628, %v630
        %v638 = vsel %vm633, %v630, %v632
        %644 = vrot.lane.b32.xlu0 %v295, 106
        %v645 = vpop.permute.xlu0 %644
        %646 = vrot.lane.b32.xlu0 %v299, 106
        %v647 = vpop.permute.xlu0 %646
        %648 = vrot.lane.b32.xlu0 %v308, 106
        %v649 = vpop.permute.xlu0 %648
        %650 = vrot.lane.b32.xlu0 %v450, 106
        %v651 = vpop.permute.xlu0 %650
        %652 = vrot.lane.b32.xlu0 %v569, 106
        %v653 = vpop.permute.xlu0 %652
        %654 = vrot.lane.b32.xlu0 %v620, 106
        %v655 = vpop.permute.xlu0 %654
        %vm656 = vcmask 867328
        %v657 = vsel %vm656, %v645, %v647
        %v658 = vsel %vm656, %v647, %v649
        %v659 = vsel %vm656, %v649, %v651
        %v660 = vsel %vm656, %v651, %v653
        %v661 = vsel %vm656, %v653, %v655
        %vm667 = vcmask 1040384
        %v668 = vsel %vm667, %v283, %v322
        %v669 = vsel %vm667, %v287, %v323
        %v670 = vsel %vm667, %v291, %v324
        %v671 = vsel %vm667, %v295, %v325
        %v672 = vsel %vm667, %v299, %v326
        %vm673 = vcmask 1041408
        %v674 = vsel %vm673, %v668, %v345
        %v675 = vsel %vm673, %v669, %v346
        %v676 = vsel %vm673, %v670, %v347
        %v677 = vsel %vm673, %v671, %v348
        %v678 = vsel %vm673, %v672, %v349
        %vm679 = vcmask 1042432
        %v680 = vsel %vm679, %v674, %v368
        %v681 = vsel %vm679, %v675, %v369
        %v682 = vsel %vm679, %v676, %v370
        %v683 = vsel %vm679, %v677, %v371
        %v684 = vsel %vm679, %v678, %v372
        %vm685 = vcmask 1043456
        %v686 = vsel %vm685, %v680, %v391
        %v687 = vsel %vm685, %v681, %v392
        %v688 = vsel %vm685, %v682, %v393
        %v689 = vsel %vm685, %v683, %v394
        %v690 = vsel %vm685, %v684, %v395
        %vm691 = vcmask 1044480
        %v692 = vsel %vm691, %v686, %v414
        %v693 = vsel %vm691, %v687, %v415
        %v694 = vsel %vm691, %v688, %v416
        %v695 = vsel %vm691, %v689, %v417
        %v696 = vsel %vm691, %v690, %v418
        %vm697 = vcmask 1045504
        %v698 = vsel %vm697, %v692, %v437
        %v699 = vsel %vm697, %v693, %v438
        %v700 = vsel %vm697, %v694, %v439
        %v701 = vsel %vm697, %v695, %v440
        %v702 = vsel %vm697, %v696, %v441
        %vm703 = vcmask 1046528
        %v704 = vsel %vm703, %v698, %v464
        %v705 = vsel %vm703, %v699, %v465
        %v706 = vsel %vm703, %v700, %v466
        %v707 = vsel %vm703, %v701, %v467
        %v708 = vsel %vm703, %v702, %v468
        %v709 = vsel %vm667, %v487, %v510
        %v710 = vsel %vm667, %v488, %v511
        %v711 = vsel %vm667, %v489, %v512
        %v712 = vsel %vm667, %v490, %v513
        %v713 = vsel %vm667, %v491, %v514
        %v714 = vsel %vm673, %v709, %v533
        %v715 = vsel %vm673, %v710, %v534
        %v716 = vsel %vm673, %v711, %v535
        %v717 = vsel %vm673, %v712, %v536
        %v718 = vsel %vm673, %v713, %v537
        %v719 = vsel %vm679, %v714, %v556
        %v720 = vsel %vm679, %v715, %v557
        %v721 = vsel %vm679, %v716, %v558
        %v722 = vsel %vm679, %v717, %v559
        %v723 = vsel %vm679, %v718, %v560
        %v724 = vsel %vm685, %v719, %v583
        %v725 = vsel %vm685, %v720, %v584
        %v726 = vsel %vm685, %v721, %v585
        %v727 = vsel %vm685, %v722, %v586
        %v728 = vsel %vm685, %v723, %v587
        %v729 = vsel %vm691, %v724, %v606
        %v730 = vsel %vm691, %v725, %v607
        %v731 = vsel %vm691, %v726, %v608
        %v732 = vsel %vm691, %v727, %v609
        %v733 = vsel %vm691, %v728, %v610
        %v734 = vsel %vm697, %v729, %v634
        %v735 = vsel %vm697, %v730, %v635
        %v736 = vsel %vm697, %v731, %v636
        %v737 = vsel %vm697, %v732, %v637
        %v738 = vsel %vm697, %v733, %v638
        %v739 = vsel %vm703, %v734, %v657
        %v740 = vsel %vm703, %v735, %v658
        %v741 = vsel %vm703, %v736, %v659
        %v742 = vsel %vm703, %v737, %v660
        %v743 = vsel %vm703, %v738, %v661
        %744 = vrot.lane.b32.xlu0 %v295, 92
        %v745 = vpop.permute.xlu0 %744
        %746 = vrot.lane.b32.xlu0 %v299, 92
        %v747 = vpop.permute.xlu0 %746
        %748 = vrot.lane.b32.xlu0 %v308, 92
        %v749 = vpop.permute.xlu0 %748
        %750 = vrot.lane.b32.xlu0 %v450, 92
        %v751 = vpop.permute.xlu0 %750
        %752 = vrot.lane.b32.xlu0 %v569, 92
        %v753 = vpop.permute.xlu0 %752
        %754 = vrot.lane.b32.xlu0 %v620, 92
        %v755 = vpop.permute.xlu0 %754
        %vm756 = vcmask 752640
        %v757 = vsel %vm756, %v745, %v747
        %v758 = vsel %vm756, %v747, %v749
        %v759 = vsel %vm756, %v749, %v751
        %v760 = vsel %vm756, %v751, %v753
        %v761 = vsel %vm756, %v753, %v755
        %767 = vrot.lane.b32.xlu0 %v295, 78
        %v768 = vpop.permute.xlu0 %767
        %769 = vrot.lane.b32.xlu0 %v299, 78
        %v770 = vpop.permute.xlu0 %769
        %771 = vrot.lane.b32.xlu0 %v308, 78
        %v772 = vpop.permute.xlu0 %771
        %773 = vrot.lane.b32.xlu0 %v450, 78
        %v774 = vpop.permute.xlu0 %773
        %775 = vrot.lane.b32.xlu0 %v569, 78
        %v776 = vpop.permute.xlu0 %775
        %777 = vrot.lane.b32.xlu0 %v620, 78
        %v778 = vpop.permute.xlu0 %777
        %vm779 = vcmask 637952
        %v780 = vsel %vm779, %v768, %v770
        %v781 = vsel %vm779, %v770, %v772
        %v782 = vsel %vm779, %v772, %v774
        %v783 = vsel %vm779, %v774, %v776
        %v784 = vsel %vm779, %v776, %v778
        %790 = vrot.lane.b32.xlu0 %v295, 64
        %v791 = vpop.permute.xlu0 %790
        %792 = vrot.lane.b32.xlu0 %v299, 64
        %v793 = vpop.permute.xlu0 %792
        %794 = vrot.lane.b32.xlu0 %v308, 64
        %v795 = vpop.permute.xlu0 %794
        %796 = vrot.lane.b32.xlu0 %v450, 64
        %v797 = vpop.permute.xlu0 %796
        %798 = vrot.lane.b32.xlu0 %v569, 64
        %v799 = vpop.permute.xlu0 %798
        %800 = vrot.lane.b32.xlu0 %v620, 64
        %v801 = vpop.permute.xlu0 %800
        %vm802 = vcmask 523264
        %v803 = vsel %vm802, %v791, %v793
        %v804 = vsel %vm802, %v793, %v795
        %v805 = vsel %vm802, %v795, %v797
        %v806 = vsel %vm802, %v797, %v799
        %v807 = vsel %vm802, %v799, %v801
        %813 = vrot.lane.b32.xlu0 %v295, 50
        %v814 = vpop.permute.xlu0 %813
        %815 = vrot.lane.b32.xlu0 %v299, 50
        %v816 = vpop.permute.xlu0 %815
        %817 = vrot.lane.b32.xlu0 %v308, 50
        %v818 = vpop.permute.xlu0 %817
        %819 = vrot.lane.b32.xlu0 %v450, 50
        %v820 = vpop.permute.xlu0 %819
        %821 = vrot.lane.b32.xlu0 %v569, 50
        %v822 = vpop.permute.xlu0 %821
        %823 = vrot.lane.b32.xlu0 %v620, 50
        %v824 = vpop.permute.xlu0 %823
        %vm825 = vcmask 408576
        %v826 = vsel %vm825, %v814, %v816
        %v827 = vsel %vm825, %v816, %v818
        %v828 = vsel %vm825, %v818, %v820
        %v829 = vsel %vm825, %v820, %v822
        %v830 = vsel %vm825, %v822, %v824
        %836 = vrot.lane.b32.xlu0 %v295, 36
        %v837 = vpop.permute.xlu0 %836
        %838 = vrot.lane.b32.xlu0 %v299, 36
        %v839 = vpop.permute.xlu0 %838
        %840 = vrot.lane.b32.xlu0 %v308, 36
        %v841 = vpop.permute.xlu0 %840
        %842 = vrot.lane.b32.xlu0 %v450, 36
        %v843 = vpop.permute.xlu0 %842
        %844 = vrot.lane.b32.xlu0 %v569, 36
        %v845 = vpop.permute.xlu0 %844
        %846 = vrot.lane.b32.xlu0 %v620, 36
        %v847 = vpop.permute.xlu0 %846
        %vm848 = vcmask 293888
        %v849 = vsel %vm848, %v837, %v839
        %v850 = vsel %vm848, %v839, %v841
        %v851 = vsel %vm848, %v841, %v843
        %v852 = vsel %vm848, %v843, %v845
        %v853 = vsel %vm848, %v845, %v847
        %v859 = vlaneseq
        %v860 = vshrl.u32 %v859, 7
        %v861 = vsub.s32 1, %v860
        %v862 = vrot.slane %v278, %v861
        %863 = vrot.lane.b32.xlu0 %v299, 52
        %v864 = vpop.permute.xlu0 %863
        %865 = vrot.lane.b32.xlu0 %v308, 52
        %v866 = vpop.permute.xlu0 %865
        %867 = vrot.lane.b32.xlu0 %v450, 52
        %v868 = vpop.permute.xlu0 %867
        %869 = vrot.lane.b32.xlu0 %v569, 52
        %v870 = vpop.permute.xlu0 %869
        %871 = vrot.lane.b32.xlu0 %v620, 52
        %v872 = vpop.permute.xlu0 %871
        %873 = vrot.lane.b32.xlu0 %v862, 52
        %v874 = vpop.permute.xlu0 %873
        %vm875 = vcmask 424960
        %v876 = vsel %vm875, %v864, %v866
        %v877 = vsel %vm875, %v866, %v868
        %v878 = vsel %vm875, %v868, %v870
        %v879 = vsel %vm875, %v870, %v872
        %v880 = vsel %vm875, %v872, %v874
        %886 = vrot.lane.b32.xlu0 %v299, 38
        %v887 = vpop.permute.xlu0 %886
        %888 = vrot.lane.b32.xlu0 %v308, 38
        %v889 = vpop.permute.xlu0 %888
        %890 = vrot.lane.b32.xlu0 %v450, 38
        %v891 = vpop.permute.xlu0 %890
        %892 = vrot.lane.b32.xlu0 %v569, 38
        %v893 = vpop.permute.xlu0 %892
        %894 = vrot.lane.b32.xlu0 %v620, 38
        %v895 = vpop.permute.xlu0 %894
        %896 = vrot.lane.b32.xlu0 %v862, 38
        %v897 = vpop.permute.xlu0 %896
        %vm898 = vcmask 310272
        %v899 = vsel %vm898, %v887, %v889
        %v900 = vsel %vm898, %v889, %v891
        %v901 = vsel %vm898, %v891, %v893
        %v902 = vsel %vm898, %v893, %v895
        %v903 = vsel %vm898, %v895, %v897
        %909 = vrot.lane.b32.xlu0 %v299, 24
        %v910 = vpop.permute.xlu0 %909
        %911 = vrot.lane.b32.xlu0 %v308, 24
        %v912 = vpop.permute.xlu0 %911
        %913 = vrot.lane.b32.xlu0 %v450, 24
        %v914 = vpop.permute.xlu0 %913
        %915 = vrot.lane.b32.xlu0 %v569, 24
        %v916 = vpop.permute.xlu0 %915
        %917 = vrot.lane.b32.xlu0 %v620, 24
        %v918 = vpop.permute.xlu0 %917
        %919 = vrot.lane.b32.xlu0 %v862, 24
        %v920 = vpop.permute.xlu0 %919
        %vm921 = vcmask 195584
        %v922 = vsel %vm921, %v910, %v912
        %v923 = vsel %vm921, %v912, %v914
        %v924 = vsel %vm921, %v914, %v916
        %v925 = vsel %vm921, %v916, %v918
        %v926 = vsel %vm921, %v918, %v920
        %932 = vrot.lane.b32.xlu0 %v299, 10
        %v933 = vpop.permute.xlu0 %932
        %934 = vrot.lane.b32.xlu0 %v308, 10
        %v935 = vpop.permute.xlu0 %934
        %936 = vrot.lane.b32.xlu0 %v450, 10
        %v937 = vpop.permute.xlu0 %936
        %938 = vrot.lane.b32.xlu0 %v569, 10
        %v939 = vpop.permute.xlu0 %938
        %940 = vrot.lane.b32.xlu0 %v620, 10
        %v941 = vpop.permute.xlu0 %940
        %942 = vrot.lane.b32.xlu0 %v862, 10
        %v943 = vpop.permute.xlu0 %942
        %vm944 = vcmask 80896
        %v945 = vsel %vm944, %v933, %v935
        %v946 = vsel %vm944, %v935, %v937
        %v947 = vsel %vm944, %v937, %v939
        %v948 = vsel %vm944, %v939, %v941
        %v949 = vsel %vm944, %v941, %v943
        %v955 = vlaneseq
        %v956 = vshrl.u32 %v955, 7
        %v957 = vsub.s32 2, %v956
        %v958 = vrot.slane %v278, %v957
        %959 = vrot.lane.b32.xlu0 %v308, 124
        %v960 = vpop.permute.xlu0 %959
        %961 = vrot.lane.b32.xlu0 %v450, 124
        %v962 = vpop.permute.xlu0 %961
        %963 = vrot.lane.b32.xlu0 %v569, 124
        %v964 = vpop.permute.xlu0 %963
        %965 = vrot.lane.b32.xlu0 %v620, 124
        %v966 = vpop.permute.xlu0 %965
        %967 = vrot.lane.b32.xlu0 %v862, 124
        %v968 = vpop.permute.xlu0 %967
        %969 = vrot.lane.b32.xlu0 %v958, 124
        %v970 = vpop.permute.xlu0 %969
        %vm971 = vcmask 1014784
        %v972 = vsel %vm971, %v960, %v962
        %v973 = vsel %vm971, %v962, %v964
        %v974 = vsel %vm971, %v964, %v966
        %v975 = vsel %vm971, %v966, %v968
        %v976 = vsel %vm971, %v968, %v970
        %982 = vrot.lane.b32.xlu0 %v308, 110
        %v983 = vpop.permute.xlu0 %982
        %984 = vrot.lane.b32.xlu0 %v450, 110
        %v985 = vpop.permute.xlu0 %984
        %986 = vrot.lane.b32.xlu0 %v569, 110
        %v987 = vpop.permute.xlu0 %986
        %988 = vrot.lane.b32.xlu0 %v620, 110
        %v989 = vpop.permute.xlu0 %988
        %990 = vrot.lane.b32.xlu0 %v862, 110
        %v991 = vpop.permute.xlu0 %990
        %992 = vrot.lane.b32.xlu0 %v958, 110
        %v993 = vpop.permute.xlu0 %992
        %vm994 = vcmask 900096
        %v995 = vsel %vm994, %v983, %v985
        %v996 = vsel %vm994, %v985, %v987
        %v997 = vsel %vm994, %v987, %v989
        %v998 = vsel %vm994, %v989, %v991
        %v999 = vsel %vm994, %v991, %v993
        %1005 = vrot.lane.b32.xlu0 %v308, 96
        %v1006 = vpop.permute.xlu0 %1005
        %1007 = vrot.lane.b32.xlu0 %v450, 96
        %v1008 = vpop.permute.xlu0 %1007
        %1009 = vrot.lane.b32.xlu0 %v569, 96
        %v1010 = vpop.permute.xlu0 %1009
        %1011 = vrot.lane.b32.xlu0 %v620, 96
        %v1012 = vpop.permute.xlu0 %1011
        %1013 = vrot.lane.b32.xlu0 %v862, 96
        %v1014 = vpop.permute.xlu0 %1013
        %1015 = vrot.lane.b32.xlu0 %v958, 96
        %v1016 = vpop.permute.xlu0 %1015
        %vm1017 = vcmask 785408
        %v1018 = vsel %vm1017, %v1006, %v1008
        %v1019 = vsel %vm1017, %v1008, %v1010
        %v1020 = vsel %vm1017, %v1010, %v1012
        %v1021 = vsel %vm1017, %v1012, %v1014
        %v1022 = vsel %vm1017, %v1014, %v1016
        %v1028 = vlaneseq
        %v1029 = vshrl.u32 %v1028, 7
        %v1030 = vsub.s32 3, %v1029
        %v1031 = vrot.slane %v278, %v1030
        %1032 = vrot.lane.b32.xlu0 %v450, 112
        %v1033 = vpop.permute.xlu0 %1032
        %1034 = vrot.lane.b32.xlu0 %v569, 112
        %v1035 = vpop.permute.xlu0 %1034
        %1036 = vrot.lane.b32.xlu0 %v620, 112
        %v1037 = vpop.permute.xlu0 %1036
        %1038 = vrot.lane.b32.xlu0 %v862, 112
        %v1039 = vpop.permute.xlu0 %1038
        %1040 = vrot.lane.b32.xlu0 %v958, 112
        %v1041 = vpop.permute.xlu0 %1040
        %1042 = vrot.lane.b32.xlu0 %v1031, 112
        %v1043 = vpop.permute.xlu0 %1042
        %vm1044 = vcmask 916480
        %v1045 = vsel %vm1044, %v1033, %v1035
        %v1046 = vsel %vm1044, %v1035, %v1037
        %v1047 = vsel %vm1044, %v1037, %v1039
        %v1048 = vsel %vm1044, %v1039, %v1041
        %v1049 = vsel %vm1044, %v1041, %v1043
        %1055 = vrot.lane.b32.xlu0 %v450, 98
        %v1056 = vpop.permute.xlu0 %1055
        %1057 = vrot.lane.b32.xlu0 %v569, 98
        %v1058 = vpop.permute.xlu0 %1057
        %1059 = vrot.lane.b32.xlu0 %v620, 98
        %v1060 = vpop.permute.xlu0 %1059
        %1061 = vrot.lane.b32.xlu0 %v862, 98
        %v1062 = vpop.permute.xlu0 %1061
        %1063 = vrot.lane.b32.xlu0 %v958, 98
        %v1064 = vpop.permute.xlu0 %1063
        %1065 = vrot.lane.b32.xlu0 %v1031, 98
        %v1066 = vpop.permute.xlu0 %1065
        %vm1067 = vcmask 801792
        %v1068 = vsel %vm1067, %v1056, %v1058
        %v1069 = vsel %vm1067, %v1058, %v1060
        %v1070 = vsel %vm1067, %v1060, %v1062
        %v1071 = vsel %vm1067, %v1062, %v1064
        %v1072 = vsel %vm1067, %v1064, %v1066
        %1078 = vrot.lane.b32.xlu0 %v450, 84
        %v1079 = vpop.permute.xlu0 %1078
        %1080 = vrot.lane.b32.xlu0 %v569, 84
        %v1081 = vpop.permute.xlu0 %1080
        %1082 = vrot.lane.b32.xlu0 %v620, 84
        %v1083 = vpop.permute.xlu0 %1082
        %1084 = vrot.lane.b32.xlu0 %v862, 84
        %v1085 = vpop.permute.xlu0 %1084
        %1086 = vrot.lane.b32.xlu0 %v958, 84
        %v1087 = vpop.permute.xlu0 %1086
        %1088 = vrot.lane.b32.xlu0 %v1031, 84
        %v1089 = vpop.permute.xlu0 %1088
        %vm1090 = vcmask 687104
        %v1091 = vsel %vm1090, %v1079, %v1081
        %v1092 = vsel %vm1090, %v1081, %v1083
        %v1093 = vsel %vm1090, %v1083, %v1085
        %v1094 = vsel %vm1090, %v1085, %v1087
        %v1095 = vsel %vm1090, %v1087, %v1089
        %1101 = vrot.lane.b32.xlu0 %v450, 70
        %v1102 = vpop.permute.xlu0 %1101
        %1103 = vrot.lane.b32.xlu0 %v569, 70
        %v1104 = vpop.permute.xlu0 %1103
        %1105 = vrot.lane.b32.xlu0 %v620, 70
        %v1106 = vpop.permute.xlu0 %1105
        %1107 = vrot.lane.b32.xlu0 %v862, 70
        %v1108 = vpop.permute.xlu0 %1107
        %1109 = vrot.lane.b32.xlu0 %v958, 70
        %v1110 = vpop.permute.xlu0 %1109
        %1111 = vrot.lane.b32.xlu0 %v1031, 70
        %v1112 = vpop.permute.xlu0 %1111
        %vm1113 = vcmask 572416
        %v1114 = vsel %vm1113, %v1102, %v1104
        %v1115 = vsel %vm1113, %v1104, %v1106
        %v1116 = vsel %vm1113, %v1106, %v1108
        %v1117 = vsel %vm1113, %v1108, %v1110
        %v1118 = vsel %vm1113, %v1110, %v1112
        %v1124 = vsel %vm667, %v757, %v780
        %v1125 = vsel %vm667, %v758, %v781
        %v1126 = vsel %vm667, %v759, %v782
        %v1127 = vsel %vm667, %v760, %v783
        %v1128 = vsel %vm667, %v761, %v784
        %v1129 = vsel %vm673, %v1124, %v803
        %v1130 = vsel %vm673, %v1125, %v804
        %v1131 = vsel %vm673, %v1126, %v805
        %v1132 = vsel %vm673, %v1127, %v806
        %v1133 = vsel %vm673, %v1128, %v807
        %v1134 = vsel %vm679, %v1129, %v826
        %v1135 = vsel %vm679, %v1130, %v827
        %v1136 = vsel %vm679, %v1131, %v828
        %v1137 = vsel %vm679, %v1132, %v829
        %v1138 = vsel %vm679, %v1133, %v830
        %v1139 = vsel %vm685, %v1134, %v849
        %v1140 = vsel %vm685, %v1135, %v850
        %v1141 = vsel %vm685, %v1136, %v851
        %v1142 = vsel %vm685, %v1137, %v852
        %v1143 = vsel %vm685, %v1138, %v853
        %v1144 = vsel %vm691, %v1139, %v876
        %v1145 = vsel %vm691, %v1140, %v877
        %v1146 = vsel %vm691, %v1141, %v878
        %v1147 = vsel %vm691, %v1142, %v879
        %v1148 = vsel %vm691, %v1143, %v880
        %v1149 = vsel %vm697, %v1144, %v899
        %v1150 = vsel %vm697, %v1145, %v900
        %v1151 = vsel %vm697, %v1146, %v901
        %v1152 = vsel %vm697, %v1147, %v902
        %v1153 = vsel %vm697, %v1148, %v903
        %v1154 = vsel %vm703, %v1149, %v922
        %v1155 = vsel %vm703, %v1150, %v923
        %v1156 = vsel %vm703, %v1151, %v924
        %v1157 = vsel %vm703, %v1152, %v925
        %v1158 = vsel %vm703, %v1153, %v926
        %v1159 = vsel %vm667, %v945, %v972
        %v1160 = vsel %vm667, %v946, %v973
        %v1161 = vsel %vm667, %v947, %v974
        %v1162 = vsel %vm667, %v948, %v975
        %v1163 = vsel %vm667, %v949, %v976
        %v1164 = vsel %vm673, %v1159, %v995
        %v1165 = vsel %vm673, %v1160, %v996
        %v1166 = vsel %vm673, %v1161, %v997
        %v1167 = vsel %vm673, %v1162, %v998
        %v1168 = vsel %vm673, %v1163, %v999
        %v1169 = vsel %vm679, %v1164, %v1018
        %v1170 = vsel %vm679, %v1165, %v1019
        %v1171 = vsel %vm679, %v1166, %v1020
        %v1172 = vsel %vm679, %v1167, %v1021
        %v1173 = vsel %vm679, %v1168, %v1022
        %v1174 = vsel %vm685, %v1169, %v1045
        %v1175 = vsel %vm685, %v1170, %v1046
        %v1176 = vsel %vm685, %v1171, %v1047
        %v1177 = vsel %vm685, %v1172, %v1048
        %v1178 = vsel %vm685, %v1173, %v1049
        %v1179 = vsel %vm691, %v1174, %v1068
        %v1180 = vsel %vm691, %v1175, %v1069
        %v1181 = vsel %vm691, %v1176, %v1070
        %v1182 = vsel %vm691, %v1177, %v1071
        %v1183 = vsel %vm691, %v1178, %v1072
        %v1184 = vsel %vm697, %v1179, %v1091
        %v1185 = vsel %vm697, %v1180, %v1092
        %v1186 = vsel %vm697, %v1181, %v1093
        %v1187 = vsel %vm697, %v1182, %v1094
        %v1188 = vsel %vm697, %v1183, %v1095
        %v1189 = vsel %vm703, %v1184, %v1114
        %v1190 = vsel %vm703, %v1185, %v1115
        %v1191 = vsel %vm703, %v1186, %v1116
        %v1192 = vsel %vm703, %v1187, %v1117
        %v1193 = vsel %vm703, %v1188, %v1118
        %1194 = vrot.lane.b32.xlu0 %v450, 56
        %v1195 = vpop.permute.xlu0 %1194
        %1196 = vrot.lane.b32.xlu0 %v569, 56
        %v1197 = vpop.permute.xlu0 %1196
        %1198 = vrot.lane.b32.xlu0 %v620, 56
        %v1199 = vpop.permute.xlu0 %1198
        %1200 = vrot.lane.b32.xlu0 %v862, 56
        %v1201 = vpop.permute.xlu0 %1200
        %1202 = vrot.lane.b32.xlu0 %v958, 56
        %v1203 = vpop.permute.xlu0 %1202
        %1204 = vrot.lane.b32.xlu0 %v1031, 56
        %v1205 = vpop.permute.xlu0 %1204
        %vm1206 = vcmask 457728
        %v1207 = vsel %vm1206, %v1195, %v1197
        %v1208 = vsel %vm1206, %v1197, %v1199
        %v1209 = vsel %vm1206, %v1199, %v1201
        %v1210 = vsel %vm1206, %v1201, %v1203
        %v1211 = vsel %vm1206, %v1203, %v1205
        %1217 = vrot.lane.b32.xlu0 %v450, 42
        %v1218 = vpop.permute.xlu0 %1217
        %1219 = vrot.lane.b32.xlu0 %v569, 42
        %v1220 = vpop.permute.xlu0 %1219
        %1221 = vrot.lane.b32.xlu0 %v620, 42
        %v1222 = vpop.permute.xlu0 %1221
        %1223 = vrot.lane.b32.xlu0 %v862, 42
        %v1224 = vpop.permute.xlu0 %1223
        %1225 = vrot.lane.b32.xlu0 %v958, 42
        %v1226 = vpop.permute.xlu0 %1225
        %1227 = vrot.lane.b32.xlu0 %v1031, 42
        %v1228 = vpop.permute.xlu0 %1227
        %vm1229 = vcmask 343040
        %v1230 = vsel %vm1229, %v1218, %v1220
        %v1231 = vsel %vm1229, %v1220, %v1222
        %v1232 = vsel %vm1229, %v1222, %v1224
        %v1233 = vsel %vm1229, %v1224, %v1226
        %v1234 = vsel %vm1229, %v1226, %v1228
        %1240 = vrot.lane.b32.xlu0 %v450, 28
        %v1241 = vpop.permute.xlu0 %1240
        %1242 = vrot.lane.b32.xlu0 %v569, 28
        %v1243 = vpop.permute.xlu0 %1242
        %1244 = vrot.lane.b32.xlu0 %v620, 28
        %v1245 = vpop.permute.xlu0 %1244
        %1246 = vrot.lane.b32.xlu0 %v862, 28
        %v1247 = vpop.permute.xlu0 %1246
        %1248 = vrot.lane.b32.xlu0 %v958, 28
        %v1249 = vpop.permute.xlu0 %1248
        %1250 = vrot.lane.b32.xlu0 %v1031, 28
        %v1251 = vpop.permute.xlu0 %1250
        %vm1252 = vcmask 228352
        %v1253 = vsel %vm1252, %v1241, %v1243
        %v1254 = vsel %vm1252, %v1243, %v1245
        %v1255 = vsel %vm1252, %v1245, %v1247
        %v1256 = vsel %vm1252, %v1247, %v1249
        %v1257 = vsel %vm1252, %v1249, %v1251
        %v1263 = vlaneseq
        %v1264 = vshrl.u32 %v1263, 7
        %v1265 = vsub.s32 4, %v1264
        %v1266 = vrot.slane %v278, %v1265
        %1267 = vrot.lane.b32.xlu0 %v569, 44
        %v1268 = vpop.permute.xlu0 %1267
        %1269 = vrot.lane.b32.xlu0 %v620, 44
        %v1270 = vpop.permute.xlu0 %1269
        %1271 = vrot.lane.b32.xlu0 %v862, 44
        %v1272 = vpop.permute.xlu0 %1271
        %1273 = vrot.lane.b32.xlu0 %v958, 44
        %v1274 = vpop.permute.xlu0 %1273
        %1275 = vrot.lane.b32.xlu0 %v1031, 44
        %v1276 = vpop.permute.xlu0 %1275
        %1277 = vrot.lane.b32.xlu0 %v1266, 44
        %v1278 = vpop.permute.xlu0 %1277
        %v1279 = vsel %vm436, %v1268, %v1270
        %v1280 = vsel %vm436, %v1270, %v1272
        %v1281 = vsel %vm436, %v1272, %v1274
        %v1282 = vsel %vm436, %v1274, %v1276
        %v1283 = vsel %vm436, %v1276, %v1278
        %1289 = vrot.lane.b32.xlu0 %v569, 30
        %v1290 = vpop.permute.xlu0 %1289
        %1291 = vrot.lane.b32.xlu0 %v620, 30
        %v1292 = vpop.permute.xlu0 %1291
        %1293 = vrot.lane.b32.xlu0 %v862, 30
        %v1294 = vpop.permute.xlu0 %1293
        %1295 = vrot.lane.b32.xlu0 %v958, 30
        %v1296 = vpop.permute.xlu0 %1295
        %1297 = vrot.lane.b32.xlu0 %v1031, 30
        %v1298 = vpop.permute.xlu0 %1297
        %1299 = vrot.lane.b32.xlu0 %v1266, 30
        %v1300 = vpop.permute.xlu0 %1299
        %vm1301 = vcmask 244736
        %v1302 = vsel %vm1301, %v1290, %v1292
        %v1303 = vsel %vm1301, %v1292, %v1294
        %v1304 = vsel %vm1301, %v1294, %v1296
        %v1305 = vsel %vm1301, %v1296, %v1298
        %v1306 = vsel %vm1301, %v1298, %v1300
        %1312 = vrot.lane.b32.xlu0 %v569, 16
        %v1313 = vpop.permute.xlu0 %1312
        %1314 = vrot.lane.b32.xlu0 %v620, 16
        %v1315 = vpop.permute.xlu0 %1314
        %1316 = vrot.lane.b32.xlu0 %v862, 16
        %v1317 = vpop.permute.xlu0 %1316
        %1318 = vrot.lane.b32.xlu0 %v958, 16
        %v1319 = vpop.permute.xlu0 %1318
        %1320 = vrot.lane.b32.xlu0 %v1031, 16
        %v1321 = vpop.permute.xlu0 %1320
        %1322 = vrot.lane.b32.xlu0 %v1266, 16
        %v1323 = vpop.permute.xlu0 %1322
        %vm1324 = vcmask 130048
        %v1325 = vsel %vm1324, %v1313, %v1315
        %v1326 = vsel %vm1324, %v1315, %v1317
        %v1327 = vsel %vm1324, %v1317, %v1319
        %v1328 = vsel %vm1324, %v1319, %v1321
        %v1329 = vsel %vm1324, %v1321, %v1323
        %1335 = vrot.lane.b32.xlu0 %v569, 2
        %v1336 = vpop.permute.xlu0 %1335
        %1337 = vrot.lane.b32.xlu0 %v620, 2
        %v1338 = vpop.permute.xlu0 %1337
        %1339 = vrot.lane.b32.xlu0 %v862, 2
        %v1340 = vpop.permute.xlu0 %1339
        %1341 = vrot.lane.b32.xlu0 %v958, 2
        %v1342 = vpop.permute.xlu0 %1341
        %1343 = vrot.lane.b32.xlu0 %v1031, 2
        %v1344 = vpop.permute.xlu0 %1343
        %1345 = vrot.lane.b32.xlu0 %v1266, 2
        %v1346 = vpop.permute.xlu0 %1345
        %vm1347 = vcmask 15360
        %v1348 = vsel %vm1347, %v1336, %v1338
        %v1349 = vsel %vm1347, %v1338, %v1340
        %v1350 = vsel %vm1347, %v1340, %v1342
        %v1351 = vsel %vm1347, %v1342, %v1344
        %v1352 = vsel %vm1347, %v1344, %v1346
        %v1358 = vlaneseq
        %v1359 = vshrl.u32 %v1358, 7
        %v1360 = vsub.s32 5, %v1359
        %v1361 = vrot.slane %v278, %v1360
        %1362 = vrot.lane.b32.xlu0 %v620, 116
        %v1363 = vpop.permute.xlu0 %1362
        %1364 = vrot.lane.b32.xlu0 %v862, 116
        %v1365 = vpop.permute.xlu0 %1364
        %1366 = vrot.lane.b32.xlu0 %v958, 116
        %v1367 = vpop.permute.xlu0 %1366
        %1368 = vrot.lane.b32.xlu0 %v1031, 116
        %v1369 = vpop.permute.xlu0 %1368
        %1370 = vrot.lane.b32.xlu0 %v1266, 116
        %v1371 = vpop.permute.xlu0 %1370
        %1372 = vrot.lane.b32.xlu0 %v1361, 116
        %v1373 = vpop.permute.xlu0 %1372
        %vm1374 = vcmask 949248
        %v1375 = vsel %vm1374, %v1363, %v1365
        %v1376 = vsel %vm1374, %v1365, %v1367
        %v1377 = vsel %vm1374, %v1367, %v1369
        %v1378 = vsel %vm1374, %v1369, %v1371
        %v1379 = vsel %vm1374, %v1371, %v1373
        %1385 = vrot.lane.b32.xlu0 %v620, 102
        %v1386 = vpop.permute.xlu0 %1385
        %1387 = vrot.lane.b32.xlu0 %v862, 102
        %v1388 = vpop.permute.xlu0 %1387
        %1389 = vrot.lane.b32.xlu0 %v958, 102
        %v1390 = vpop.permute.xlu0 %1389
        %1391 = vrot.lane.b32.xlu0 %v1031, 102
        %v1392 = vpop.permute.xlu0 %1391
        %1393 = vrot.lane.b32.xlu0 %v1266, 102
        %v1394 = vpop.permute.xlu0 %1393
        %1395 = vrot.lane.b32.xlu0 %v1361, 102
        %v1396 = vpop.permute.xlu0 %1395
        %vm1397 = vcmask 834560
        %v1398 = vsel %vm1397, %v1386, %v1388
        %v1399 = vsel %vm1397, %v1388, %v1390
        %v1400 = vsel %vm1397, %v1390, %v1392
        %v1401 = vsel %vm1397, %v1392, %v1394
        %v1402 = vsel %vm1397, %v1394, %v1396
        %1408 = vrot.lane.b32.xlu0 %v620, 88
        %v1409 = vpop.permute.xlu0 %1408
        %1410 = vrot.lane.b32.xlu0 %v862, 88
        %v1411 = vpop.permute.xlu0 %1410
        %1412 = vrot.lane.b32.xlu0 %v958, 88
        %v1413 = vpop.permute.xlu0 %1412
        %1414 = vrot.lane.b32.xlu0 %v1031, 88
        %v1415 = vpop.permute.xlu0 %1414
        %1416 = vrot.lane.b32.xlu0 %v1266, 88
        %v1417 = vpop.permute.xlu0 %1416
        %1418 = vrot.lane.b32.xlu0 %v1361, 88
        %v1419 = vpop.permute.xlu0 %1418
        %vm1420 = vcmask 719872
        %v1421 = vsel %vm1420, %v1409, %v1411
        %v1422 = vsel %vm1420, %v1411, %v1413
        %v1423 = vsel %vm1420, %v1413, %v1415
        %v1424 = vsel %vm1420, %v1415, %v1417
        %v1425 = vsel %vm1420, %v1417, %v1419
        %v1431 = vlaneseq
        %v1432 = vshrl.u32 %v1431, 7
        %v1433 = vsub.s32 6, %v1432
        %v1434 = vrot.slane %v278, %v1433
        %1435 = vrot.lane.b32.xlu0 %v862, 104
        %v1436 = vpop.permute.xlu0 %1435
        %1437 = vrot.lane.b32.xlu0 %v958, 104
        %v1438 = vpop.permute.xlu0 %1437
        %1439 = vrot.lane.b32.xlu0 %v1031, 104
        %v1440 = vpop.permute.xlu0 %1439
        %1441 = vrot.lane.b32.xlu0 %v1266, 104
        %v1442 = vpop.permute.xlu0 %1441
        %1443 = vrot.lane.b32.xlu0 %v1361, 104
        %v1444 = vpop.permute.xlu0 %1443
        %1445 = vrot.lane.b32.xlu0 %v1434, 104
        %v1446 = vpop.permute.xlu0 %1445
        %v1447 = vsel %vm605, %v1436, %v1438
        %v1448 = vsel %vm605, %v1438, %v1440
        %v1449 = vsel %vm605, %v1440, %v1442
        %v1450 = vsel %vm605, %v1442, %v1444
        %v1451 = vsel %vm605, %v1444, %v1446
        %1457 = vrot.lane.b32.xlu0 %v862, 90
        %v1458 = vpop.permute.xlu0 %1457
        %1459 = vrot.lane.b32.xlu0 %v958, 90
        %v1460 = vpop.permute.xlu0 %1459
        %1461 = vrot.lane.b32.xlu0 %v1031, 90
        %v1462 = vpop.permute.xlu0 %1461
        %1463 = vrot.lane.b32.xlu0 %v1266, 90
        %v1464 = vpop.permute.xlu0 %1463
        %1465 = vrot.lane.b32.xlu0 %v1361, 90
        %v1466 = vpop.permute.xlu0 %1465
        %1467 = vrot.lane.b32.xlu0 %v1434, 90
        %v1468 = vpop.permute.xlu0 %1467
        %vm1469 = vcmask 736256
        %v1470 = vsel %vm1469, %v1458, %v1460
        %v1471 = vsel %vm1469, %v1460, %v1462
        %v1472 = vsel %vm1469, %v1462, %v1464
        %v1473 = vsel %vm1469, %v1464, %v1466
        %v1474 = vsel %vm1469, %v1466, %v1468
        %1480 = vrot.lane.b32.xlu0 %v862, 76
        %v1481 = vpop.permute.xlu0 %1480
        %1482 = vrot.lane.b32.xlu0 %v958, 76
        %v1483 = vpop.permute.xlu0 %1482
        %1484 = vrot.lane.b32.xlu0 %v1031, 76
        %v1485 = vpop.permute.xlu0 %1484
        %1486 = vrot.lane.b32.xlu0 %v1266, 76
        %v1487 = vpop.permute.xlu0 %1486
        %1488 = vrot.lane.b32.xlu0 %v1361, 76
        %v1489 = vpop.permute.xlu0 %1488
        %1490 = vrot.lane.b32.xlu0 %v1434, 76
        %v1491 = vpop.permute.xlu0 %1490
        %vm1492 = vcmask 621568
        %v1493 = vsel %vm1492, %v1481, %v1483
        %v1494 = vsel %vm1492, %v1483, %v1485
        %v1495 = vsel %vm1492, %v1485, %v1487
        %v1496 = vsel %vm1492, %v1487, %v1489
        %v1497 = vsel %vm1492, %v1489, %v1491
        %1503 = vrot.lane.b32.xlu0 %v862, 62
        %v1504 = vpop.permute.xlu0 %1503
        %1505 = vrot.lane.b32.xlu0 %v958, 62
        %v1506 = vpop.permute.xlu0 %1505
        %1507 = vrot.lane.b32.xlu0 %v1031, 62
        %v1508 = vpop.permute.xlu0 %1507
        %1509 = vrot.lane.b32.xlu0 %v1266, 62
        %v1510 = vpop.permute.xlu0 %1509
        %1511 = vrot.lane.b32.xlu0 %v1361, 62
        %v1512 = vpop.permute.xlu0 %1511
        %1513 = vrot.lane.b32.xlu0 %v1434, 62
        %v1514 = vpop.permute.xlu0 %1513
        %vm1515 = vcmask 506880
        %v1516 = vsel %vm1515, %v1504, %v1506
        %v1517 = vsel %vm1515, %v1506, %v1508
        %v1518 = vsel %vm1515, %v1508, %v1510
        %v1519 = vsel %vm1515, %v1510, %v1512
        %v1520 = vsel %vm1515, %v1512, %v1514
        %1526 = vrot.lane.b32.xlu0 %v862, 48
        %v1527 = vpop.permute.xlu0 %1526
        %1528 = vrot.lane.b32.xlu0 %v958, 48
        %v1529 = vpop.permute.xlu0 %1528
        %1530 = vrot.lane.b32.xlu0 %v1031, 48
        %v1531 = vpop.permute.xlu0 %1530
        %1532 = vrot.lane.b32.xlu0 %v1266, 48
        %v1533 = vpop.permute.xlu0 %1532
        %1534 = vrot.lane.b32.xlu0 %v1361, 48
        %v1535 = vpop.permute.xlu0 %1534
        %1536 = vrot.lane.b32.xlu0 %v1434, 48
        %v1537 = vpop.permute.xlu0 %1536
        %vm1538 = vcmask 392192
        %v1539 = vsel %vm1538, %v1527, %v1529
        %v1540 = vsel %vm1538, %v1529, %v1531
        %v1541 = vsel %vm1538, %v1531, %v1533
        %v1542 = vsel %vm1538, %v1533, %v1535
        %v1543 = vsel %vm1538, %v1535, %v1537
        %1549 = vrot.lane.b32.xlu0 %v862, 34
        %v1550 = vpop.permute.xlu0 %1549
        %1551 = vrot.lane.b32.xlu0 %v958, 34
        %v1552 = vpop.permute.xlu0 %1551
        %1553 = vrot.lane.b32.xlu0 %v1031, 34
        %v1554 = vpop.permute.xlu0 %1553
        %1555 = vrot.lane.b32.xlu0 %v1266, 34
        %v1556 = vpop.permute.xlu0 %1555
        %1557 = vrot.lane.b32.xlu0 %v1361, 34
        %v1558 = vpop.permute.xlu0 %1557
        %1559 = vrot.lane.b32.xlu0 %v1434, 34
        %v1560 = vpop.permute.xlu0 %1559
        %vm1561 = vcmask 277504
        %v1562 = vsel %vm1561, %v1550, %v1552
        %v1563 = vsel %vm1561, %v1552, %v1554
        %v1564 = vsel %vm1561, %v1554, %v1556
        %v1565 = vsel %vm1561, %v1556, %v1558
        %v1566 = vsel %vm1561, %v1558, %v1560
        %v1572 = vsel %vm667, %v1207, %v1230
        %v1573 = vsel %vm667, %v1208, %v1231
        %v1574 = vsel %vm667, %v1209, %v1232
        %v1575 = vsel %vm667, %v1210, %v1233
        %v1576 = vsel %vm667, %v1211, %v1234
        %v1577 = vsel %vm673, %v1572, %v1253
        %v1578 = vsel %vm673, %v1573, %v1254
        %v1579 = vsel %vm673, %v1574, %v1255
        %v1580 = vsel %vm673, %v1575, %v1256
        %v1581 = vsel %vm673, %v1576, %v1257
        %v1582 = vsel %vm679, %v1577, %v1279
        %v1583 = vsel %vm679, %v1578, %v1280
        %v1584 = vsel %vm679, %v1579, %v1281
        %v1585 = vsel %vm679, %v1580, %v1282
        %v1586 = vsel %vm679, %v1581, %v1283
        %v1587 = vsel %vm685, %v1582, %v1302
        %v1588 = vsel %vm685, %v1583, %v1303
        %v1589 = vsel %vm685, %v1584, %v1304
        %v1590 = vsel %vm685, %v1585, %v1305
        %v1591 = vsel %vm685, %v1586, %v1306
        %v1592 = vsel %vm691, %v1587, %v1325
        %v1593 = vsel %vm691, %v1588, %v1326
        %v1594 = vsel %vm691, %v1589, %v1327
        %v1595 = vsel %vm691, %v1590, %v1328
        %v1596 = vsel %vm691, %v1591, %v1329
        %v1597 = vsel %vm697, %v1592, %v1348
        %v1598 = vsel %vm697, %v1593, %v1349
        %v1599 = vsel %vm697, %v1594, %v1350
        %v1600 = vsel %vm697, %v1595, %v1351
        %v1601 = vsel %vm697, %v1596, %v1352
        %v1602 = vsel %vm703, %v1597, %v1375
        %v1603 = vsel %vm703, %v1598, %v1376
        %v1604 = vsel %vm703, %v1599, %v1377
        %v1605 = vsel %vm703, %v1600, %v1378
        %v1606 = vsel %vm703, %v1601, %v1379
        %v1607 = vsel %vm667, %v1398, %v1421
        %v1608 = vsel %vm667, %v1399, %v1422
        %v1609 = vsel %vm667, %v1400, %v1423
        %v1610 = vsel %vm667, %v1401, %v1424
        %v1611 = vsel %vm667, %v1402, %v1425
        %v1612 = vsel %vm673, %v1607, %v1447
        %v1613 = vsel %vm673, %v1608, %v1448
        %v1614 = vsel %vm673, %v1609, %v1449
        %v1615 = vsel %vm673, %v1610, %v1450
        %v1616 = vsel %vm673, %v1611, %v1451
        %v1617 = vsel %vm679, %v1612, %v1470
        %v1618 = vsel %vm679, %v1613, %v1471
        %v1619 = vsel %vm679, %v1614, %v1472
        %v1620 = vsel %vm679, %v1615, %v1473
        %v1621 = vsel %vm679, %v1616, %v1474
        %v1622 = vsel %vm685, %v1617, %v1493
        %v1623 = vsel %vm685, %v1618, %v1494
        %v1624 = vsel %vm685, %v1619, %v1495
        %v1625 = vsel %vm685, %v1620, %v1496
        %v1626 = vsel %vm685, %v1621, %v1497
        %v1627 = vsel %vm691, %v1622, %v1516
        %v1628 = vsel %vm691, %v1623, %v1517
        %v1629 = vsel %vm691, %v1624, %v1518
        %v1630 = vsel %vm691, %v1625, %v1519
        %v1631 = vsel %vm691, %v1626, %v1520
        %v1632 = vsel %vm697, %v1627, %v1539
        %v1633 = vsel %vm697, %v1628, %v1540
        %v1634 = vsel %vm697, %v1629, %v1541
        %v1635 = vsel %vm697, %v1630, %v1542
        %v1636 = vsel %vm697, %v1631, %v1543
        %v1637 = vsel %vm703, %v1632, %v1562
        %v1638 = vsel %vm703, %v1633, %v1563
        %v1639 = vsel %vm703, %v1634, %v1564
        %v1640 = vsel %vm703, %v1635, %v1565
        %v1641 = vsel %vm703, %v1636, %v1566
        %1642 = vrot.lane.b32.xlu0 %v862, 20
        %v1643 = vpop.permute.xlu0 %1642
        %1644 = vrot.lane.b32.xlu0 %v958, 20
        %v1645 = vpop.permute.xlu0 %1644
        %1646 = vrot.lane.b32.xlu0 %v1031, 20
        %v1647 = vpop.permute.xlu0 %1646
        %1648 = vrot.lane.b32.xlu0 %v1266, 20
        %v1649 = vpop.permute.xlu0 %1648
        %1650 = vrot.lane.b32.xlu0 %v1361, 20
        %v1651 = vpop.permute.xlu0 %1650
        %1652 = vrot.lane.b32.xlu0 %v1434, 20
        %v1653 = vpop.permute.xlu0 %1652
        %vm1654 = vcmask 162816
        %v1655 = vsel %vm1654, %v1643, %v1645
        %v1656 = vsel %vm1654, %v1645, %v1647
        %v1657 = vsel %vm1654, %v1647, %v1649
        %v1658 = vsel %vm1654, %v1649, %v1651
        %v1659 = vsel %vm1654, %v1651, %v1653
        %v1665 = vsel %vm667, %v1655, 0.0
        %v1666 = vsel %vm667, %v1656, 0.0
        %v1667 = vsel %vm667, %v1657, 0.0
        %v1668 = vsel %vm667, %v1658, 0.0
        %v1669 = vsel %vm667, %v1659, 0.0
        %v1670 = vpack.c.bf16 %v739, %v704
        %v1671 = vpack.c.bf16 %v740, %v705
        %v1672 = vpack.c.bf16 %v741, %v706
        %v1673 = vpack.c.bf16 %v742, %v707
        %v1674 = vpack.c.bf16 %v743, %v708
        %v1675 = vpack.c.bf16 %v1189, %v1154
        %v1676 = vpack.c.bf16 %v1190, %v1155
        %v1677 = vpack.c.bf16 %v1191, %v1156
        %v1678 = vpack.c.bf16 %v1192, %v1157
        %v1679 = vpack.c.bf16 %v1193, %v1158
        %v1680 = vpack.c.bf16 %v1637, %v1602
        %v1681 = vpack.c.bf16 %v1638, %v1603
        %v1682 = vpack.c.bf16 %v1639, %v1604
        %v1683 = vpack.c.bf16 %v1640, %v1605
        %v1684 = vpack.c.bf16 %v1641, %v1606
        %v1685 = vpack.c.bf16 %v1665, %v1665
        %v1686 = vpack.c.bf16 %v1666, %v1666
        %v1687 = vpack.c.bf16 %v1667, %v1667
        %v1688 = vpack.c.bf16 %v1668, %v1668
        %v1689 = vpack.c.bf16 %v1669, %v1669
        %v1690 = vld [vmem:[#allocation6] sm:$0xf]
        %v1691 = vld [vmem:[#allocation6 + $0x4] sm:$0xf]
        %v1692 = vld [vmem:[#allocation6 + $0x8] sm:$0xf]
        %v1693 = vld [vmem:[#allocation6 + $0xc] sm:$0xf]
        %s1694 = scalar_lea.vmem [#allocation6], 16
        %v1695 = vld [vmem:[%s1694] sm:$0xf]
        %v1696 = vld [vmem:[%s1694 + $0x4] sm:$0xf]
        %v1697 = vld [vmem:[%s1694 + $0x8] sm:$0xf]
        %v1698 = vld [vmem:[%s1694 + $0xc] sm:$0xf]
        %v1703 = vunpack.c.l.b16 %v1695
        %v1704 = vunpack.c.l.b16 %v1696
        %v1705 = vunpack.c.l.b16 %v1697
        %v1706 = vunpack.c.l.b16 %v1698
        %v1707 = vpack.c.b16 %v1704, %v1703
        %v1708 = vpack.c.b16 %v1706, %v1705
        %1729 = vrot.lane.b32.xlu0 %v1670, 127
        %v1730 = vpop.permute.xlu0 %1729
        %1731 = vrot.lane.b32.xlu0 %v1671, 127
        %v1732 = vpop.permute.xlu0 %1731
        %1733 = vrot.lane.b32.xlu0 %v1672, 127
        %v1734 = vpop.permute.xlu0 %1733
        %1735 = vrot.lane.b32.xlu0 %v1673, 127
        %v1736 = vpop.permute.xlu0 %1735
        %1737 = vrot.lane.b32.xlu0 %v1674, 127
        %v1738 = vpop.permute.xlu0 %1737
        %1739 = vrot.lane.b32.xlu0 %v1675, 127
        %v1740 = vpop.permute.xlu0 %1739
        %1741 = vrot.lane.b32.xlu0 %v1676, 127
        %v1742 = vpop.permute.xlu0 %1741
        %1743 = vrot.lane.b32.xlu0 %v1677, 127
        %v1744 = vpop.permute.xlu0 %1743
        %1745 = vrot.lane.b32.xlu0 %v1678, 127
        %v1746 = vpop.permute.xlu0 %1745
        %1747 = vrot.lane.b32.xlu0 %v1679, 127
        %v1748 = vpop.permute.xlu0 %1747
        %1749 = vrot.lane.b32.xlu0 %v1680, 127
        %v1750 = vpop.permute.xlu0 %1749
        %1751 = vrot.lane.b32.xlu0 %v1681, 127
        %v1752 = vpop.permute.xlu0 %1751
        %1753 = vrot.lane.b32.xlu0 %v1682, 127
        %v1754 = vpop.permute.xlu0 %1753
        %1755 = vrot.lane.b32.xlu0 %v1683, 127
        %v1756 = vpop.permute.xlu0 %1755
        %1757 = vrot.lane.b32.xlu0 %v1684, 127
        %v1758 = vpop.permute.xlu0 %1757
        %1759 = vrot.lane.b32.xlu0 %v1685, 127
        %v1760 = vpop.permute.xlu0 %1759
        %1761 = vrot.lane.b32.xlu0 %v1686, 127
        %v1762 = vpop.permute.xlu0 %1761
        %1763 = vrot.lane.b32.xlu0 %v1687, 127
        %v1764 = vpop.permute.xlu0 %1763
        %1765 = vrot.lane.b32.xlu0 %v1688, 127
        %v1766 = vpop.permute.xlu0 %1765
        %1767 = vrot.lane.b32.xlu0 %v1689, 127
        %v1768 = vpop.permute.xlu0 %1767
        %vm1769 = vcmask 1039360
        %v1770 = vsel %vm1769, %v1730, %v1732
        %v1771 = vsel %vm1769, %v1732, %v1734
        %v1772 = vsel %vm1769, %v1734, %v1736
        %v1773 = vsel %vm1769, %v1736, %v1738
        %v1774 = vsel %vm1769, %v1740, %v1742
        %v1775 = vsel %vm1769, %v1742, %v1744
        %v1776 = vsel %vm1769, %v1744, %v1746
        %v1777 = vsel %vm1769, %v1746, %v1748
        %v1778 = vsel %vm1769, %v1750, %v1752
        %v1779 = vsel %vm1769, %v1752, %v1754
        %v1780 = vsel %vm1769, %v1754, %v1756
        %v1781 = vsel %vm1769, %v1756, %v1758
        %v1782 = vsel %vm1769, %v1760, %v1762
        %v1783 = vsel %vm1769, %v1762, %v1764
        %v1784 = vsel %vm1769, %v1764, %v1766
        %v1785 = vsel %vm1769, %v1766, %v1768
        %v1799 = vsel %vm1206, %v1707, 0
        %v1802 = vsel %vm1206, %v1708, 0
        %v1805 = vsel %vm685, %v1782, 0
        %v1808 = vsel %vm685, %v1783, 0
        %v1811 = vsel %vm685, %v1784, 0
        %v1814 = vsel %vm685, %v1785, 0
        %1816 = vmatprep.subr.bf16.mxu0 %v1771
        %1817 = vmatpush1.bf16.msra.mxu0 %v1770
        %1818 = vmatprep.subr.bf16.mxu0 %v1775
        %1819 = vmatpush1.bf16.msra.mxu0 %v1774
        %1820 = vmatprep.subr.bf16.mxu0 %v1779
        %1821 = vmatpush1.bf16.msra.mxu0 %v1778
        %1822 = vmatprep.subr.bf16.mxu0 %v1808
        %1823 = vmatpush1.bf16.msra.mxu0 %v1805
        %1824 = vmatprep.subr.bf16.mxu0 0
        %1825 = vmatpush1.bf16.msra.mxu0 0
        %1826 = vmatprep.subr.bf16.mxu0 0
        %1827 = vmatpush1.bf16.msra.mxu0 0
        %1828 = vmatprep.subr.bf16.mxu0 0
        %1829 = vmatpush1.bf16.msra.mxu0 0
        %1830 = vmatprep.subr.bf16.mxu0 0
        %1831 = vmatpush1.bf16.msra.mxu0 0
        %1832 = vmatprep.subr.bf16.mxu0 0
        %1833 = vmatpush1.bf16.msra.mxu0 0
        %1834 = vmatprep.subr.bf16.mxu0 0
        %1835 = vmatpush1.bf16.msra.mxu0 0
        %1836 = vmatprep.subr.bf16.mxu0 0
        %1837 = vmatpush1.bf16.msra.mxu0 0
        %1838 = vmatprep.subr.bf16.mxu0 0
        %1839 = vmatpush1.bf16.msra.mxu0 0
        %1840 = vmatprep.subr.bf16.mxu0 0
        %1841 = vmatpush1.bf16.msra.mxu0 0
        %1842 = vmatprep.subr.bf16.mxu0 0
        %1843 = vmatpush1.bf16.msra.mxu0 0
        %1844 = vmatprep.subr.bf16.mxu0 0
        %1845 = vmatpush1.bf16.msra.mxu0 0
        %1846 = vmatprep.subr.bf16.mxu0 0
        %1847 = vmatpush1.bf16.msra.mxu0 0
        %1848 = vmatprep.mubr.bf16.mxu0 0
        %1849 = vmatmul.mubr.bf16.gmra.mrb[0].mxu0 %v1799
        %v1850 = vpop.f32.mrb[0].mxu0
        %v1851 = vadd.f32 0.0, %v1850
        %v1852 = vpop.f32.mrb[0].mxu0
        %v1853 = vadd.f32 0.0, %v1852
        %v1854 = vpop.f32.mrb[0].mxu0
        %v1855 = vadd.f32 0.0, %v1854
        %v1856 = vpop.f32.mrb[0].mxu0
        %v1857 = vadd.f32 0.0, %v1856
        %1858 = vmatprep.mubr.bf16.mxu0 0
        %1859 = vmatmul.mubr.bf16.gmra.mrb[0].mxu0 %v1802
        %v1860 = vpop.f32.mrb[0].mxu0
        %v1861 = vadd.f32 0.0, %v1860
        %v1862 = vpop.f32.mrb[0].mxu0
        %v1863 = vadd.f32 0.0, %v1862
        %v1864 = vpop.f32.mrb[0].mxu0
        %v1865 = vadd.f32 0.0, %v1864
        %v1866 = vpop.f32.mrb[0].mxu0
        %v1867 = vadd.f32 0.0, %v1866
        %1868 = vdwg.mxu0
        %1869 = vmatprep.subr.bf16.mxu0 %v1773
        %1870 = vmatpush1.bf16.msra.mxu0 %v1772
        %1871 = vmatprep.subr.bf16.mxu0 %v1777
        %1872 = vmatpush1.bf16.msra.mxu0 %v1776
        %1873 = vmatprep.subr.bf16.mxu0 %v1781
        %1874 = vmatpush1.bf16.msra.mxu0 %v1780
        %1875 = vmatprep.subr.bf16.mxu0 %v1814
        %1876 = vmatpush1.bf16.msra.mxu0 %v1811
        %1877 = vmatprep.subr.bf16.mxu0 0
        %1878 = vmatpush1.bf16.msra.mxu0 0
        %1879 = vmatprep.subr.bf16.mxu0 0
        %1880 = vmatpush1.bf16.msra.mxu0 0
        %1881 = vmatprep.subr.bf16.mxu0 0
        %1882 = vmatpush1.bf16.msra.mxu0 0
        %1883 = vmatprep.subr.bf16.mxu0 0
        %1884 = vmatpush1.bf16.msra.mxu0 0
        %1885 = vmatprep.subr.bf16.mxu0 0
        %1886 = vmatpush1.bf16.msra.mxu0 0
        %1887 = vmatprep.subr.bf16.mxu0 0
        %1888 = vmatpush1.bf16.msra.mxu0 0
        %1889 = vmatprep.subr.bf16.mxu0 0
        %1890 = vmatpush1.bf16.msra.mxu0 0
        %1891 = vmatprep.subr.bf16.mxu0 0
        %1892 = vmatpush1.bf16.msra.mxu0 0
        %1893 = vmatprep.subr.bf16.mxu0 0
        %1894 = vmatpush1.bf16.msra.mxu0 0
        %1895 = vmatprep.subr.bf16.mxu0 0
        %1896 = vmatpush1.bf16.msra.mxu0 0
        %1897 = vmatprep.subr.bf16.mxu0 0
        %1898 = vmatpush1.bf16.msra.mxu0 0
        %1899 = vmatprep.subr.bf16.mxu0 0
        %1900 = vmatpush1.bf16.msra.mxu0 0
        %1901 = vmatprep.mubr.bf16.mxu0 0
        %1902 = vmatmul.mubr.bf16.gmra.mrb[0].mxu0 %v1799
        %v1903 = vpop.f32.mrb[0].mxu0
        %v1904 = vadd.f32 0.0, %v1903
        %v1905 = vpop.f32.mrb[0].mxu0
        %v1906 = vadd.f32 0.0, %v1905
        %v1907 = vpop.f32.mrb[0].mxu0
        %v1908 = vadd.f32 0.0, %v1907
        %v1909 = vpop.f32.mrb[0].mxu0
        %v1910 = vadd.f32 0.0, %v1909
        %1911 = vmatprep.mubr.bf16.mxu0 0
        %1912 = vmatmul.mubr.bf16.gmra.mrb[0].mxu0 %v1802
        %v1913 = vpop.f32.mrb[0].mxu0
        %v1914 = vadd.f32 0.0, %v1913
        %v1915 = vpop.f32.mrb[0].mxu0
        %v1916 = vadd.f32 0.0, %v1915
        %v1917 = vpop.f32.mrb[0].mxu0
        %v1918 = vadd.f32 0.0, %v1917
        %v1919 = vpop.f32.mrb[0].mxu0
        %v1920 = vadd.f32 0.0, %v1919
        %1921 = vdwg.mxu0
        %v1926 = vunpack.c.l.b16 %v1690
        %v1927 = vunpack.c.l.b16 %v1691
        %v1928 = vunpack.c.l.b16 %v1692
        %v1929 = vunpack.c.l.b16 %v1693
        %v1930 = vpack.c.b16 %v1927, %v1926
        %v1931 = vpack.c.b16 %v1929, %v1928
        %v1933 = vsel %vm1206, %v1930, 0
        %v1936 = vsel %vm1206, %v1931, 0
        %v1939 = vsel %vm685, %v1685, 0
        %v1942 = vsel %vm685, %v1686, 0
        %v1945 = vsel %vm685, %v1687, 0
        %v1948 = vsel %vm685, %v1688, 0
        %1950 = vmatprep.subr.bf16.mxu0 %v1671
        %1951 = vmatpush1.bf16.msra.mxu0 %v1670
        %1952 = vmatprep.subr.bf16.mxu0 %v1676
        %1953 = vmatpush1.bf16.msra.mxu0 %v1675
        %1954 = vmatprep.subr.bf16.mxu0 %v1681
        %1955 = vmatpush1.bf16.msra.mxu0 %v1680
        %1956 = vmatprep.subr.bf16.mxu0 %v1942
        %1957 = vmatpush1.bf16.msra.mxu0 %v1939
        %1958 = vmatprep.subr.bf16.mxu0 0
        %1959 = vmatpush1.bf16.msra.mxu0 0
        %1960 = vmatprep.subr.bf16.mxu0 0
        %1961 = vmatpush1.bf16.msra.mxu0 0
        %1962 = vmatprep.subr.bf16.mxu0 0
        %1963 = vmatpush1.bf16.msra.mxu0 0
        %1964 = vmatprep.subr.bf16.mxu0 0
        %1965 = vmatpush1.bf16.msra.mxu0 0
        %1966 = vmatprep.subr.bf16.mxu0 0
        %1967 = vmatpush1.bf16.msra.mxu0 0
        %1968 = vmatprep.subr.bf16.mxu0 0
        %1969 = vmatpush1.bf16.msra.mxu0 0
        %1970 = vmatprep.subr.bf16.mxu0 0
        %1971 = vmatpush1.bf16.msra.mxu0 0
        %1972 = vmatprep.subr.bf16.mxu0 0
        %1973 = vmatpush1.bf16.msra.mxu0 0
        %1974 = vmatprep.subr.bf16.mxu0 0
        %1975 = vmatpush1.bf16.msra.mxu0 0
        %1976 = vmatprep.subr.bf16.mxu0 0
        %1977 = vmatpush1.bf16.msra.mxu0 0
        %1978 = vmatprep.subr.bf16.mxu0 0
        %1979 = vmatpush1.bf16.msra.mxu0 0
        %1980 = vmatprep.subr.bf16.mxu0 0
        %1981 = vmatpush1.bf16.msra.mxu0 0
        %1982 = vmatprep.mubr.bf16.mxu0 0
        %1983 = vmatmul.mubr.bf16.gmra.mrb[0].mxu0 %v1933
        %v1984 = vpop.f32.mrb[0].mxu0
        %v1985 = vadd.f32 %v1851, %v1984
        %v1986 = vpop.f32.mrb[0].mxu0
        %v1987 = vadd.f32 %v1853, %v1986
        %v1988 = vpop.f32.mrb[0].mxu0
        %v1989 = vadd.f32 %v1855, %v1988
        %v1990 = vpop.f32.mrb[0].mxu0
        %v1991 = vadd.f32 %v1857, %v1990
        %1992 = vmatprep.mubr.bf16.mxu0 0
        %1993 = vmatmul.mubr.bf16.gmra.mrb[0].mxu0 %v1936
        %v1994 = vpop.f32.mrb[0].mxu0
        %v1995 = vadd.f32 %v1861, %v1994
        %v1996 = vpop.f32.mrb[0].mxu0
        %v1997 = vadd.f32 %v1863, %v1996
        %v1998 = vpop.f32.mrb[0].mxu0
        %v1999 = vadd.f32 %v1865, %v1998
        %v2000 = vpop.f32.mrb[0].mxu0
        %v2001 = vadd.f32 %v1867, %v2000
        %2002 = vdwg.mxu0
        %2003 = vmatprep.subr.bf16.mxu0 %v1673
        %2004 = vmatpush1.bf16.msra.mxu0 %v1672
        %2005 = vmatprep.subr.bf16.mxu0 %v1678
        %2006 = vmatpush1.bf16.msra.mxu0 %v1677
        %2007 = vmatprep.subr.bf16.mxu0 %v1683
        %2008 = vmatpush1.bf16.msra.mxu0 %v1682
        %2009 = vmatprep.subr.bf16.mxu0 %v1948
        %2010 = vmatpush1.bf16.msra.mxu0 %v1945
        %2011 = vmatprep.subr.bf16.mxu0 0
        %2012 = vmatpush1.bf16.msra.mxu0 0
        %2013 = vmatprep.subr.bf16.mxu0 0
        %2014 = vmatpush1.bf16.msra.mxu0 0
        %2015 = vmatprep.subr.bf16.mxu0 0
        %2016 = vmatpush1.bf16.msra.mxu0 0
        %2017 = vmatprep.subr.bf16.mxu0 0
        %2018 = vmatpush1.bf16.msra.mxu0 0
        %2019 = vmatprep.subr.bf16.mxu0 0
        %2020 = vmatpush1.bf16.msra.mxu0 0
        %2021 = vmatprep.subr.bf16.mxu0 0
        %2022 = vmatpush1.bf16.msra.mxu0 0
        %2023 = vmatprep.subr.bf16.mxu0 0
        %2024 = vmatpush1.bf16.msra.mxu0 0
        %2025 = vmatprep.subr.bf16.mxu0 0
        %2026 = vmatpush1.bf16.msra.mxu0 0
        %2027 = vmatprep.subr.bf16.mxu0 0
        %2028 = vmatpush1.bf16.msra.mxu0 0
        %2029 = vmatprep.subr.bf16.mxu0 0
        %2030 = vmatpush1.bf16.msra.mxu0 0
        %2031 = vmatprep.subr.bf16.mxu0 0
        %2032 = vmatpush1.bf16.msra.mxu0 0
        %2033 = vmatprep.subr.bf16.mxu0 0
        %2034 = vmatpush1.bf16.msra.mxu0 0
        %2035 = vmatprep.mubr.bf16.mxu0 0
        %2036 = vmatmul.mubr.bf16.gmra.mrb[0].mxu0 %v1933
        %v2037 = vpop.f32.mrb[0].mxu0
        %v2038 = vadd.f32 %v1904, %v2037
        %v2039 = vpop.f32.mrb[0].mxu0
        %v2040 = vadd.f32 %v1906, %v2039
        %v2041 = vpop.f32.mrb[0].mxu0
        %v2042 = vadd.f32 %v1908, %v2041
        %v2043 = vpop.f32.mrb[0].mxu0
        %v2044 = vadd.f32 %v1910, %v2043
        %2045 = vmatprep.mubr.bf16.mxu0 0
        %2046 = vmatmul.mubr.bf16.gmra.mrb[0].mxu0 %v1936
        %v2047 = vpop.f32.mrb[0].mxu0
        %v2048 = vadd.f32 %v1914, %v2047
        %v2049 = vpop.f32.mrb[0].mxu0
        %v2050 = vadd.f32 %v1916, %v2049
        %v2051 = vpop.f32.mrb[0].mxu0
        %v2052 = vadd.f32 %v1918, %v2051
        %v2053 = vpop.f32.mrb[0].mxu0
        %v2054 = vadd.f32 %v1920, %v2053
        %2055 = vdwg.mxu0
        %s2056 = scalar_lea.vmem [#allocation6], 32
        %v2057 = vld [vmem:[%s2056] sm:$0xf]
        %v2058 = vld [vmem:[%s2056 + $0x4] sm:$0xf]
        %v2059 = vld [vmem:[%s2056 + $0x8] sm:$0xf]
        %v2060 = vld [vmem:[%s2056 + $0xc] sm:$0xf]
        %v2065 = vunpack.c.l.b16 %v2057
        %v2066 = vunpack.c.l.b16 %v2058
        %v2067 = vunpack.c.l.b16 %v2059
        %v2068 = vunpack.c.l.b16 %v2060
        %v2069 = vpack.c.b16 %v2066, %v2065
        %v2070 = vpack.c.b16 %v2068, %v2067
        %2071 = vrot.lane.b32.xlu0 %v1670, 126
        %v2072 = vpop.permute.xlu0 %2071
        %2073 = vrot.lane.b32.xlu0 %v1671, 126
        %v2074 = vpop.permute.xlu0 %2073
        %2075 = vrot.lane.b32.xlu0 %v1672, 126
        %v2076 = vpop.permute.xlu0 %2075
        %2077 = vrot.lane.b32.xlu0 %v1673, 126
        %v2078 = vpop.permute.xlu0 %2077
        %2079 = vrot.lane.b32.xlu0 %v1674, 126
        %v2080 = vpop.permute.xlu0 %2079
        %2081 = vrot.lane.b32.xlu0 %v1675, 126
        %v2082 = vpop.permute.xlu0 %2081
        %2083 = vrot.lane.b32.xlu0 %v1676, 126
        %v2084 = vpop.permute.xlu0 %2083
        %2085 = vrot.lane.b32.xlu0 %v1677, 126
        %v2086 = vpop.permute.xlu0 %2085
        %2087 = vrot.lane.b32.xlu0 %v1678, 126
        %v2088 = vpop.permute.xlu0 %2087
        %2089 = vrot.lane.b32.xlu0 %v1679, 126
        %v2090 = vpop.permute.xlu0 %2089
        %2091 = vrot.lane.b32.xlu0 %v1680, 126
        %v2092 = vpop.permute.xlu0 %2091
        %2093 = vrot.lane.b32.xlu0 %v1681, 126
        %v2094 = vpop.permute.xlu0 %2093
        %2095 = vrot.lane.b32.xlu0 %v1682, 126
        %v2096 = vpop.permute.xlu0 %2095
        %2097 = vrot.lane.b32.xlu0 %v1683, 126
        %v2098 = vpop.permute.xlu0 %2097
        %2099 = vrot.lane.b32.xlu0 %v1684, 126
        %v2100 = vpop.permute.xlu0 %2099
        %2101 = vrot.lane.b32.xlu0 %v1685, 126
        %v2102 = vpop.permute.xlu0 %2101
        %2103 = vrot.lane.b32.xlu0 %v1686, 126
        %v2104 = vpop.permute.xlu0 %2103
        %2105 = vrot.lane.b32.xlu0 %v1687, 126
        %v2106 = vpop.permute.xlu0 %2105
        %2107 = vrot.lane.b32.xlu0 %v1688, 126
        %v2108 = vpop.permute.xlu0 %2107
        %2109 = vrot.lane.b32.xlu0 %v1689, 126
        %v2110 = vpop.permute.xlu0 %2109
        %vm2111 = vcmask 1031168
        %v2112 = vsel %vm2111, %v2072, %v2074
        %v2113 = vsel %vm2111, %v2074, %v2076
        %v2114 = vsel %vm2111, %v2076, %v2078
        %v2115 = vsel %vm2111, %v2078, %v2080
        %v2116 = vsel %vm2111, %v2082, %v2084
        %v2117 = vsel %vm2111, %v2084, %v2086
        %v2118 = vsel %vm2111, %v2086, %v2088
        %v2119 = vsel %vm2111, %v2088, %v2090
        %v2120 = vsel %vm2111, %v2092, %v2094
        %v2121 = vsel %vm2111, %v2094, %v2096
        %v2122 = vsel %vm2111, %v2096, %v2098
        %v2123 = vsel %vm2111, %v2098, %v2100
        %v2124 = vsel %vm2111, %v2102, %v2104
        %v2125 = vsel %vm2111, %v2104, %v2106
        %v2126 = vsel %vm2111, %v2106, %v2108
        %v2127 = vsel %vm2111, %v2108, %v2110
        %v2141 = vsel %vm1206, %v2069, 0
        %v2144 = vsel %vm1206, %v2070, 0
        %v2147 = vsel %vm685, %v2124, 0
        %v2150 = vsel %vm685, %v2125, 0
        %v2153 = vsel %vm685, %v2126, 0
        %v2156 = vsel %vm685, %v2127, 0
        %2158 = vmatprep.subr.bf16.mxu0 %v2113
        %2159 = vmatpush1.bf16.msra.mxu0 %v2112
        %2160 = vmatprep.subr.bf16.mxu0 %v2117
        %2161 = vmatpush1.bf16.msra.mxu0 %v2116
        %2162 = vmatprep.subr.bf16.mxu0 %v2121
        %2163 = vmatpush1.bf16.msra.mxu0 %v2120
        %2164 = vmatprep.subr.bf16.mxu0 %v2150
        %2165 = vmatpush1.bf16.msra.mxu0 %v2147
        %2166 = vmatprep.subr.bf16.mxu0 0
        %2167 = vmatpush1.bf16.msra.mxu0 0
        %2168 = vmatprep.subr.bf16.mxu0 0
        %2169 = vmatpush1.bf16.msra.mxu0 0
        %2170 = vmatprep.subr.bf16.mxu0 0
        %2171 = vmatpush1.bf16.msra.mxu0 0
        %2172 = vmatprep.subr.bf16.mxu0 0
        %2173 = vmatpush1.bf16.msra.mxu0 0
        %2174 = vmatprep.subr.bf16.mxu0 0
        %2175 = vmatpush1.bf16.msra.mxu0 0
        %2176 = vmatprep.subr.bf16.mxu0 0
        %2177 = vmatpush1.bf16.msra.mxu0 0
        %2178 = vmatprep.subr.bf16.mxu0 0
        %2179 = vmatpush1.bf16.msra.mxu0 0
        %2180 = vmatprep.subr.bf16.mxu0 0
        %2181 = vmatpush1.bf16.msra.mxu0 0
        %2182 = vmatprep.subr.bf16.mxu0 0
        %2183 = vmatpush1.bf16.msra.mxu0 0
        %2184 = vmatprep.subr.bf16.mxu0 0
        %2185 = vmatpush1.bf16.msra.mxu0 0
        %2186 = vmatprep.subr.bf16.mxu0 0
        %2187 = vmatpush1.bf16.msra.mxu0 0
        %2188 = vmatprep.subr.bf16.mxu0 0
        %2189 = vmatpush1.bf16.msra.mxu0 0
        %2190 = vmatprep.mubr.bf16.mxu0 0
        %2191 = vmatmul.mubr.bf16.gmra.mrb[0].mxu0 %v2141
        %v2192 = vpop.f32.mrb[0].mxu0
        %v2193 = vadd.f32 0.0, %v2192
        %v2194 = vpop.f32.mrb[0].mxu0
        %v2195 = vadd.f32 0.0, %v2194
        %v2196 = vpop.f32.mrb[0].mxu0
        %v2197 = vadd.f32 0.0, %v2196
        %v2198 = vpop.f32.mrb[0].mxu0
        %v2199 = vadd.f32 0.0, %v2198
        %2200 = vmatprep.mubr.bf16.mxu0 0
        %2201 = vmatmul.mubr.bf16.gmra.mrb[0].mxu0 %v2144
        %v2202 = vpop.f32.mrb[0].mxu0
        %v2203 = vadd.f32 0.0, %v2202
        %v2204 = vpop.f32.mrb[0].mxu0
        %v2205 = vadd.f32 0.0, %v2204
        %v2206 = vpop.f32.mrb[0].mxu0
        %v2207 = vadd.f32 0.0, %v2206
        %v2208 = vpop.f32.mrb[0].mxu0
        %v2209 = vadd.f32 0.0, %v2208
        %2210 = vdwg.mxu0
        %2211 = vmatprep.subr.bf16.mxu0 %v2115
        %2212 = vmatpush1.bf16.msra.mxu0 %v2114
        %2213 = vmatprep.subr.bf16.mxu0 %v2119
        %2214 = vmatpush1.bf16.msra.mxu0 %v2118
        %2215 = vmatprep.subr.bf16.mxu0 %v2123
        %2216 = vmatpush1.bf16.msra.mxu0 %v2122
        %2217 = vmatprep.subr.bf16.mxu0 %v2156
        %2218 = vmatpush1.bf16.msra.mxu0 %v2153
        %2219 = vmatprep.subr.bf16.mxu0 0
        %2220 = vmatpush1.bf16.msra.mxu0 0
        %2221 = vmatprep.subr.bf16.mxu0 0
        %2222 = vmatpush1.bf16.msra.mxu0 0
        %2223 = vmatprep.subr.bf16.mxu0 0
        %2224 = vmatpush1.bf16.msra.mxu0 0
        %2225 = vmatprep.subr.bf16.mxu0 0
        %2226 = vmatpush1.bf16.msra.mxu0 0
        %2227 = vmatprep.subr.bf16.mxu0 0
        %2228 = vmatpush1.bf16.msra.mxu0 0
        %2229 = vmatprep.subr.bf16.mxu0 0
        %2230 = vmatpush1.bf16.msra.mxu0 0
        %2231 = vmatprep.subr.bf16.mxu0 0
        %2232 = vmatpush1.bf16.msra.mxu0 0
        %2233 = vmatprep.subr.bf16.mxu0 0
        %2234 = vmatpush1.bf16.msra.mxu0 0
        %2235 = vmatprep.subr.bf16.mxu0 0
        %2236 = vmatpush1.bf16.msra.mxu0 0
        %2237 = vmatprep.subr.bf16.mxu0 0
        %2238 = vmatpush1.bf16.msra.mxu0 0
        %2239 = vmatprep.subr.bf16.mxu0 0
        %2240 = vmatpush1.bf16.msra.mxu0 0
        %2241 = vmatprep.subr.bf16.mxu0 0
        %2242 = vmatpush1.bf16.msra.mxu0 0
        %2243 = vmatprep.mubr.bf16.mxu0 0
        %2244 = vmatmul.mubr.bf16.gmra.mrb[0].mxu0 %v2141
        %v2245 = vpop.f32.mrb[0].mxu0
        %v2246 = vadd.f32 0.0, %v2245
        %v2247 = vpop.f32.mrb[0].mxu0
        %v2248 = vadd.f32 0.0, %v2247
        %v2249 = vpop.f32.mrb[0].mxu0
        %v2250 = vadd.f32 0.0, %v2249
        %v2251 = vpop.f32.mrb[0].mxu0
        %v2252 = vadd.f32 0.0, %v2251
        %2253 = vmatprep.mubr.bf16.mxu0 0
        %2254 = vmatmul.mubr.bf16.gmra.mrb[0].mxu0 %v2144
        %v2255 = vpop.f32.mrb[0].mxu0
        %v2256 = vadd.f32 0.0, %v2255
        %v2257 = vpop.f32.mrb[0].mxu0
        %v2258 = vadd.f32 0.0, %v2257
        %v2259 = vpop.f32.mrb[0].mxu0
        %v2260 = vadd.f32 0.0, %v2259
        %v2261 = vpop.f32.mrb[0].mxu0
        %v2262 = vadd.f32 0.0, %v2261
        %2263 = vdwg.mxu0
        %v2264 = vadd.f32 %v1985, %v2193
        %v2265 = vadd.f32 %v1987, %v2195
        %v2266 = vadd.f32 %v2038, %v2246
        %v2267 = vadd.f32 %v2040, %v2248
        %v2268 = vadd.f32 %v1989, %v2197
        %v2269 = vadd.f32 %v1991, %v2199
        %v2270 = vadd.f32 %v2042, %v2250
        %v2271 = vadd.f32 %v2044, %v2252
        %v2272 = vadd.f32 %v1995, %v2203
        %v2273 = vadd.f32 %v1997, %v2205
        %v2274 = vadd.f32 %v2048, %v2256
        %v2275 = vadd.f32 %v2050, %v2258
        %v2276 = vadd.f32 %v1999, %v2207
        %v2277 = vadd.f32 %v2001, %v2209
        %v2278 = vadd.f32 %v2052, %v2260
        %v2279 = vadd.f32 %v2054, %v2262
        %s2280 = scalar_lea.vmem [#allocation6], 48
        %v2281 = vld [vmem:[%s2280] sm:$0xf]
        %v2282 = vld [vmem:[%s2280 + $0x4] sm:$0xf]
        %v2283 = vld [vmem:[%s2280 + $0x8] sm:$0xf]
        %v2284 = vld [vmem:[%s2280 + $0xc] sm:$0xf]
        %v2289 = vunpack.c.l.b16 %v2281
        %v2290 = vunpack.c.l.b16 %v2282
        %v2291 = vunpack.c.l.b16 %v2283
        %v2292 = vunpack.c.l.b16 %v2284
        %v2293 = vpack.c.b16 %v2290, %v2289
        %v2294 = vpack.c.b16 %v2292, %v2291
        %2295 = vrot.lane.b32.xlu0 %v1670, 125
        %v2296 = vpop.permute.xlu0 %2295
        %2297 = vrot.lane.b32.xlu0 %v1671, 125
        %v2298 = vpop.permute.xlu0 %2297
        %2299 = vrot.lane.b32.xlu0 %v1672, 125
        %v2300 = vpop.permute.xlu0 %2299
        %2301 = vrot.lane.b32.xlu0 %v1673, 125
        %v2302 = vpop.permute.xlu0 %2301
        %2303 = vrot.lane.b32.xlu0 %v1674, 125
        %v2304 = vpop.permute.xlu0 %2303
        %2305 = vrot.lane.b32.xlu0 %v1675, 125
        %v2306 = vpop.permute.xlu0 %2305
        %2307 = vrot.lane.b32.xlu0 %v1676, 125
        %v2308 = vpop.permute.xlu0 %2307
        %2309 = vrot.lane.b32.xlu0 %v1677, 125
        %v2310 = vpop.permute.xlu0 %2309
        %2311 = vrot.lane.b32.xlu0 %v1678, 125
        %v2312 = vpop.permute.xlu0 %2311
        %2313 = vrot.lane.b32.xlu0 %v1679, 125
        %v2314 = vpop.permute.xlu0 %2313
        %2315 = vrot.lane.b32.xlu0 %v1680, 125
        %v2316 = vpop.permute.xlu0 %2315
        %2317 = vrot.lane.b32.xlu0 %v1681, 125
        %v2318 = vpop.permute.xlu0 %2317
        %2319 = vrot.lane.b32.xlu0 %v1682, 125
        %v2320 = vpop.permute.xlu0 %2319
        %2321 = vrot.lane.b32.xlu0 %v1683, 125
        %v2322 = vpop.permute.xlu0 %2321
        %2323 = vrot.lane.b32.xlu0 %v1684, 125
        %v2324 = vpop.permute.xlu0 %2323
        %2325 = vrot.lane.b32.xlu0 %v1685, 125
        %v2326 = vpop.permute.xlu0 %2325
        %2327 = vrot.lane.b32.xlu0 %v1686, 125
        %v2328 = vpop.permute.xlu0 %2327
        %2329 = vrot.lane.b32.xlu0 %v1687, 125
        %v2330 = vpop.permute.xlu0 %2329
        %2331 = vrot.lane.b32.xlu0 %v1688, 125
        %v2332 = vpop.permute.xlu0 %2331
        %2333 = vrot.lane.b32.xlu0 %v1689, 125
        %v2334 = vpop.permute.xlu0 %2333
        %vm2335 = vcmask 1022976
        %v2336 = vsel %vm2335, %v2296, %v2298
        %v2337 = vsel %vm2335, %v2298, %v2300
        %v2338 = vsel %vm2335, %v2300, %v2302
        %v2339 = vsel %vm2335, %v2302, %v2304
        %v2340 = vsel %vm2335, %v2306, %v2308
        %v2341 = vsel %vm2335, %v2308, %v2310
        %v2342 = vsel %vm2335, %v2310, %v2312
        %v2343 = vsel %vm2335, %v2312, %v2314
        %v2344 = vsel %vm2335, %v2316, %v2318
        %v2345 = vsel %vm2335, %v2318, %v2320
        %v2346 = vsel %vm2335, %v2320, %v2322
        %v2347 = vsel %vm2335, %v2322, %v2324
        %v2348 = vsel %vm2335, %v2326, %v2328
        %v2349 = vsel %vm2335, %v2328, %v2330
        %v2350 = vsel %vm2335, %v2330, %v2332
        %v2351 = vsel %vm2335, %v2332, %v2334
        %v2365 = vsel %vm1206, %v2293, 0
        %v2368 = vsel %vm1206, %v2294, 0
        %v2371 = vsel %vm685, %v2348, 0
        %v2374 = vsel %vm685, %v2349, 0
        %v2377 = vsel %vm685, %v2350, 0
        %v2380 = vsel %vm685, %v2351, 0
        %2382 = vmatprep.subr.bf16.mxu0 %v2337
        %2383 = vmatpush1.bf16.msra.mxu0 %v2336
        %2384 = vmatprep.subr.bf16.mxu0 %v2341
        %2385 = vmatpush1.bf16.msra.mxu0 %v2340
        %2386 = vmatprep.subr.bf16.mxu0 %v2345
        %2387 = vmatpush1.bf16.msra.mxu0 %v2344
        %2388 = vmatprep.subr.bf16.mxu0 %v2374
        %2389 = vmatpush1.bf16.msra.mxu0 %v2371
        %2390 = vmatprep.subr.bf16.mxu0 0
        %2391 = vmatpush1.bf16.msra.mxu0 0
        %2392 = vmatprep.subr.bf16.mxu0 0
        %2393 = vmatpush1.bf16.msra.mxu0 0
        %2394 = vmatprep.subr.bf16.mxu0 0
        %2395 = vmatpush1.bf16.msra.mxu0 0
        %2396 = vmatprep.subr.bf16.mxu0 0
        %2397 = vmatpush1.bf16.msra.mxu0 0
        %2398 = vmatprep.subr.bf16.mxu0 0
        %2399 = vmatpush1.bf16.msra.mxu0 0
        %2400 = vmatprep.subr.bf16.mxu0 0
        %2401 = vmatpush1.bf16.msra.mxu0 0
        %2402 = vmatprep.subr.bf16.mxu0 0
        %2403 = vmatpush1.bf16.msra.mxu0 0
        %2404 = vmatprep.subr.bf16.mxu0 0
        %2405 = vmatpush1.bf16.msra.mxu0 0
        %2406 = vmatprep.subr.bf16.mxu0 0
        %2407 = vmatpush1.bf16.msra.mxu0 0
        %2408 = vmatprep.subr.bf16.mxu0 0
        %2409 = vmatpush1.bf16.msra.mxu0 0
        %2410 = vmatprep.subr.bf16.mxu0 0
        %2411 = vmatpush1.bf16.msra.mxu0 0
        %2412 = vmatprep.subr.bf16.mxu0 0
        %2413 = vmatpush1.bf16.msra.mxu0 0
        %2414 = vmatprep.mubr.bf16.mxu0 0
        %2415 = vmatmul.mubr.bf16.gmra.mrb[0].mxu0 %v2365
        %v2416 = vpop.f32.mrb[0].mxu0
        %v2417 = vadd.f32 0.0, %v2416
        %v2418 = vpop.f32.mrb[0].mxu0
        %v2419 = vadd.f32 0.0, %v2418
        %v2420 = vpop.f32.mrb[0].mxu0
        %v2421 = vadd.f32 0.0, %v2420
        %v2422 = vpop.f32.mrb[0].mxu0
        %v2423 = vadd.f32 0.0, %v2422
        %2424 = vmatprep.mubr.bf16.mxu0 0
        %2425 = vmatmul.mubr.bf16.gmra.mrb[0].mxu0 %v2368
        %v2426 = vpop.f32.mrb[0].mxu0
        %v2427 = vadd.f32 0.0, %v2426
        %v2428 = vpop.f32.mrb[0].mxu0
        %v2429 = vadd.f32 0.0, %v2428
        %v2430 = vpop.f32.mrb[0].mxu0
        %v2431 = vadd.f32 0.0, %v2430
        %v2432 = vpop.f32.mrb[0].mxu0
        %v2433 = vadd.f32 0.0, %v2432
        %2434 = vdwg.mxu0
        %2435 = vmatprep.subr.bf16.mxu0 %v2339
        %2436 = vmatpush1.bf16.msra.mxu0 %v2338
        %2437 = vmatprep.subr.bf16.mxu0 %v2343
        %2438 = vmatpush1.bf16.msra.mxu0 %v2342
        %2439 = vmatprep.subr.bf16.mxu0 %v2347
        %2440 = vmatpush1.bf16.msra.mxu0 %v2346
        %2441 = vmatprep.subr.bf16.mxu0 %v2380
        %2442 = vmatpush1.bf16.msra.mxu0 %v2377
        %2443 = vmatprep.subr.bf16.mxu0 0
        %2444 = vmatpush1.bf16.msra.mxu0 0
        %2445 = vmatprep.subr.bf16.mxu0 0
        %2446 = vmatpush1.bf16.msra.mxu0 0
        %2447 = vmatprep.subr.bf16.mxu0 0
        %2448 = vmatpush1.bf16.msra.mxu0 0
        %2449 = vmatprep.subr.bf16.mxu0 0
        %2450 = vmatpush1.bf16.msra.mxu0 0
        %2451 = vmatprep.subr.bf16.mxu0 0
        %2452 = vmatpush1.bf16.msra.mxu0 0
        %2453 = vmatprep.subr.bf16.mxu0 0
        %2454 = vmatpush1.bf16.msra.mxu0 0
        %2455 = vmatprep.subr.bf16.mxu0 0
        %2456 = vmatpush1.bf16.msra.mxu0 0
        %2457 = vmatprep.subr.bf16.mxu0 0
        %2458 = vmatpush1.bf16.msra.mxu0 0
        %2459 = vmatprep.subr.bf16.mxu0 0
        %2460 = vmatpush1.bf16.msra.mxu0 0
        %2461 = vmatprep.subr.bf16.mxu0 0
        %2462 = vmatpush1.bf16.msra.mxu0 0
        %2463 = vmatprep.subr.bf16.mxu0 0
        %2464 = vmatpush1.bf16.msra.mxu0 0
        %2465 = vmatprep.subr.bf16.mxu0 0
        %2466 = vmatpush1.bf16.msra.mxu0 0
        %2467 = vmatprep.mubr.bf16.mxu0 0
        %2468 = vmatmul.mubr.bf16.gmra.mrb[0].mxu0 %v2365
        %v2469 = vpop.f32.mrb[0].mxu0
        %v2470 = vadd.f32 0.0, %v2469
        %v2471 = vpop.f32.mrb[0].mxu0
        %v2472 = vadd.f32 0.0, %v2471
        %v2473 = vpop.f32.mrb[0].mxu0
        %v2474 = vadd.f32 0.0, %v2473
        %v2475 = vpop.f32.mrb[0].mxu0
        %v2476 = vadd.f32 0.0, %v2475
        %2477 = vmatprep.mubr.bf16.mxu0 0
        %2478 = vmatmul.mubr.bf16.gmra.mrb[0].mxu0 %v2368
        %v2479 = vpop.f32.mrb[0].mxu0
        %v2480 = vadd.f32 0.0, %v2479
        %v2481 = vpop.f32.mrb[0].mxu0
        %v2482 = vadd.f32 0.0, %v2481
        %v2483 = vpop.f32.mrb[0].mxu0
        %v2484 = vadd.f32 0.0, %v2483
        %v2485 = vpop.f32.mrb[0].mxu0
        %v2486 = vadd.f32 0.0, %v2485
        %2487 = vdwg.mxu0
        %v2488 = vadd.f32 %v2264, %v2417
        %v2489 = vadd.f32 %v2265, %v2419
        %v2490 = vadd.f32 %v2266, %v2470
        %v2491 = vadd.f32 %v2267, %v2472
        %v2492 = vadd.f32 %v2268, %v2421
        %v2493 = vadd.f32 %v2269, %v2423
        %v2494 = vadd.f32 %v2270, %v2474
        %v2495 = vadd.f32 %v2271, %v2476
        %v2496 = vadd.f32 %v2272, %v2427
        %v2497 = vadd.f32 %v2273, %v2429
        %v2498 = vadd.f32 %v2274, %v2480
        %v2499 = vadd.f32 %v2275, %v2482
        %v2500 = vadd.f32 %v2276, %v2431
        %v2501 = vadd.f32 %v2277, %v2433
        %v2502 = vadd.f32 %v2278, %v2484
        %v2503 = vadd.f32 %v2279, %v2486
        %s2504 = scalar_lea.vmem [#allocation6], 64
        %v2505 = vld [vmem:[%s2504] sm:$0xf]
        %v2506 = vld [vmem:[%s2504 + $0x4] sm:$0xf]
        %v2507 = vld [vmem:[%s2504 + $0x8] sm:$0xf]
        %v2508 = vld [vmem:[%s2504 + $0xc] sm:$0xf]
        %v2513 = vunpack.c.l.b16 %v2505
        %v2514 = vunpack.c.l.b16 %v2506
        %v2515 = vunpack.c.l.b16 %v2507
        %v2516 = vunpack.c.l.b16 %v2508
        %v2517 = vpack.c.b16 %v2514, %v2513
        %v2518 = vpack.c.b16 %v2516, %v2515
        %2519 = vrot.lane.b32.xlu0 %v1670, 124
        %v2520 = vpop.permute.xlu0 %2519
        %2521 = vrot.lane.b32.xlu0 %v1671, 124
        %v2522 = vpop.permute.xlu0 %2521
        %2523 = vrot.lane.b32.xlu0 %v1672, 124
        %v2524 = vpop.permute.xlu0 %2523
        %2525 = vrot.lane.b32.xlu0 %v1673, 124
        %v2526 = vpop.permute.xlu0 %2525
        %2527 = vrot.lane.b32.xlu0 %v1674, 124
        %v2528 = vpop.permute.xlu0 %2527
        %2529 = vrot.lane.b32.xlu0 %v1675, 124
        %v2530 = vpop.permute.xlu0 %2529
        %2531 = vrot.lane.b32.xlu0 %v1676, 124
        %v2532 = vpop.permute.xlu0 %2531
        %2533 = vrot.lane.b32.xlu0 %v1677, 124
        %v2534 = vpop.permute.xlu0 %2533
        %2535 = vrot.lane.b32.xlu0 %v1678, 124
        %v2536 = vpop.permute.xlu0 %2535
        %2537 = vrot.lane.b32.xlu0 %v1679, 124
        %v2538 = vpop.permute.xlu0 %2537
        %2539 = vrot.lane.b32.xlu0 %v1680, 124
        %v2540 = vpop.permute.xlu0 %2539
        %2541 = vrot.lane.b32.xlu0 %v1681, 124
        %v2542 = vpop.permute.xlu0 %2541
        %2543 = vrot.lane.b32.xlu0 %v1682, 124
        %v2544 = vpop.permute.xlu0 %2543
        %2545 = vrot.lane.b32.xlu0 %v1683, 124
        %v2546 = vpop.permute.xlu0 %2545
        %2547 = vrot.lane.b32.xlu0 %v1684, 124
        %v2548 = vpop.permute.xlu0 %2547
        %2549 = vrot.lane.b32.xlu0 %v1685, 124
        %v2550 = vpop.permute.xlu0 %2549
        %2551 = vrot.lane.b32.xlu0 %v1686, 124
        %v2552 = vpop.permute.xlu0 %2551
        %2553 = vrot.lane.b32.xlu0 %v1687, 124
        %v2554 = vpop.permute.xlu0 %2553
        %2555 = vrot.lane.b32.xlu0 %v1688, 124
        %v2556 = vpop.permute.xlu0 %2555
        %2557 = vrot.lane.b32.xlu0 %v1689, 124
        %v2558 = vpop.permute.xlu0 %2557
        %vm2559 = vcmask 1014784
        %v2560 = vsel %vm2559, %v2520, %v2522
        %v2561 = vsel %vm2559, %v2522, %v2524
        %v2562 = vsel %vm2559, %v2524, %v2526
        %v2563 = vsel %vm2559, %v2526, %v2528
        %v2564 = vsel %vm2559, %v2530, %v2532
        %v2565 = vsel %vm2559, %v2532, %v2534
        %v2566 = vsel %vm2559, %v2534, %v2536
        %v2567 = vsel %vm2559, %v2536, %v2538
        %v2568 = vsel %vm2559, %v2540, %v2542
        %v2569 = vsel %vm2559, %v2542, %v2544
        %v2570 = vsel %vm2559, %v2544, %v2546
        %v2571 = vsel %vm2559, %v2546, %v2548
        %v2572 = vsel %vm2559, %v2550, %v2552
        %v2573 = vsel %vm2559, %v2552, %v2554
        %v2574 = vsel %vm2559, %v2554, %v2556
        %v2575 = vsel %vm2559, %v2556, %v2558
        %v2589 = vsel %vm1206, %v2517, 0
        %v2592 = vsel %vm1206, %v2518, 0
        %v2595 = vsel %vm685, %v2572, 0
        %v2598 = vsel %vm685, %v2573, 0
        %v2601 = vsel %vm685, %v2574, 0
        %v2604 = vsel %vm685, %v2575, 0
        %2606 = vmatprep.subr.bf16.mxu0 %v2561
        %2607 = vmatpush1.bf16.msra.mxu0 %v2560
        %2608 = vmatprep.subr.bf16.mxu0 %v2565
        %2609 = vmatpush1.bf16.msra.mxu0 %v2564
        %2610 = vmatprep.subr.bf16.mxu0 %v2569
        %2611 = vmatpush1.bf16.msra.mxu0 %v2568
        %2612 = vmatprep.subr.bf16.mxu0 %v2598
        %2613 = vmatpush1.bf16.msra.mxu0 %v2595
        %2614 = vmatprep.subr.bf16.mxu0 0
        %2615 = vmatpush1.bf16.msra.mxu0 0
        %2616 = vmatprep.subr.bf16.mxu0 0
        %2617 = vmatpush1.bf16.msra.mxu0 0
        %2618 = vmatprep.subr.bf16.mxu0 0
        %2619 = vmatpush1.bf16.msra.mxu0 0
        %2620 = vmatprep.subr.bf16.mxu0 0
        %2621 = vmatpush1.bf16.msra.mxu0 0
        %2622 = vmatprep.subr.bf16.mxu0 0
        %2623 = vmatpush1.bf16.msra.mxu0 0
        %2624 = vmatprep.subr.bf16.mxu0 0
        %2625 = vmatpush1.bf16.msra.mxu0 0
        %2626 = vmatprep.subr.bf16.mxu0 0
        %2627 = vmatpush1.bf16.msra.mxu0 0
        %2628 = vmatprep.subr.bf16.mxu0 0
        %2629 = vmatpush1.bf16.msra.mxu0 0
        %2630 = vmatprep.subr.bf16.mxu0 0
        %2631 = vmatpush1.bf16.msra.mxu0 0
        %2632 = vmatprep.subr.bf16.mxu0 0
        %2633 = vmatpush1.bf16.msra.mxu0 0
        %2634 = vmatprep.subr.bf16.mxu0 0
        %2635 = vmatpush1.bf16.msra.mxu0 0
        %2636 = vmatprep.subr.bf16.mxu0 0
        %2637 = vmatpush1.bf16.msra.mxu0 0
        %2638 = vmatprep.mubr.bf16.mxu0 0
        %2639 = vmatmul.mubr.bf16.gmra.mrb[0].mxu0 %v2589
        %v2640 = vpop.f32.mrb[0].mxu0
        %v2641 = vadd.f32 0.0, %v2640
        %v2642 = vpop.f32.mrb[0].mxu0
        %v2643 = vadd.f32 0.0, %v2642
        %v2644 = vpop.f32.mrb[0].mxu0
        %v2645 = vadd.f32 0.0, %v2644
        %v2646 = vpop.f32.mrb[0].mxu0
        %v2647 = vadd.f32 0.0, %v2646
        %2648 = vmatprep.mubr.bf16.mxu0 0
        %2649 = vmatmul.mubr.bf16.gmra.mrb[0].mxu0 %v2592
        %v2650 = vpop.f32.mrb[0].mxu0
        %v2651 = vadd.f32 0.0, %v2650
        %v2652 = vpop.f32.mrb[0].mxu0
        %v2653 = vadd.f32 0.0, %v2652
        %v2654 = vpop.f32.mrb[0].mxu0
        %v2655 = vadd.f32 0.0, %v2654
        %v2656 = vpop.f32.mrb[0].mxu0
        %v2657 = vadd.f32 0.0, %v2656
        %2658 = vdwg.mxu0
        %2659 = vmatprep.subr.bf16.mxu0 %v2563
        %2660 = vmatpush1.bf16.msra.mxu0 %v2562
        %2661 = vmatprep.subr.bf16.mxu0 %v2567
        %2662 = vmatpush1.bf16.msra.mxu0 %v2566
        %2663 = vmatprep.subr.bf16.mxu0 %v2571
        %2664 = vmatpush1.bf16.msra.mxu0 %v2570
        %2665 = vmatprep.subr.bf16.mxu0 %v2604
        %2666 = vmatpush1.bf16.msra.mxu0 %v2601
        %2667 = vmatprep.subr.bf16.mxu0 0
        %2668 = vmatpush1.bf16.msra.mxu0 0
        %2669 = vmatprep.subr.bf16.mxu0 0
        %2670 = vmatpush1.bf16.msra.mxu0 0
        %2671 = vmatprep.subr.bf16.mxu0 0
        %2672 = vmatpush1.bf16.msra.mxu0 0
        %2673 = vmatprep.subr.bf16.mxu0 0
        %2674 = vmatpush1.bf16.msra.mxu0 0
        %2675 = vmatprep.subr.bf16.mxu0 0
        %2676 = vmatpush1.bf16.msra.mxu0 0
        %2677 = vmatprep.subr.bf16.mxu0 0
        %2678 = vmatpush1.bf16.msra.mxu0 0
        %2679 = vmatprep.subr.bf16.mxu0 0
        %2680 = vmatpush1.bf16.msra.mxu0 0
        %2681 = vmatprep.subr.bf16.mxu0 0
        %2682 = vmatpush1.bf16.msra.mxu0 0
        %2683 = vmatprep.subr.bf16.mxu0 0
        %2684 = vmatpush1.bf16.msra.mxu0 0
        %2685 = vmatprep.subr.bf16.mxu0 0
        %2686 = vmatpush1.bf16.msra.mxu0 0
        %2687 = vmatprep.subr.bf16.mxu0 0
        %2688 = vmatpush1.bf16.msra.mxu0 0
        %2689 = vmatprep.subr.bf16.mxu0 0
        %2690 = vmatpush1.bf16.msra.mxu0 0
        %2691 = vmatprep.mubr.bf16.mxu0 0
        %2692 = vmatmul.mubr.bf16.gmra.mrb[0].mxu0 %v2589
        %v2693 = vpop.f32.mrb[0].mxu0
        %v2694 = vadd.f32 0.0, %v2693
        %v2695 = vpop.f32.mrb[0].mxu0
        %v2696 = vadd.f32 0.0, %v2695
        %v2697 = vpop.f32.mrb[0].mxu0
        %v2698 = vadd.f32 0.0, %v2697
        %v2699 = vpop.f32.mrb[0].mxu0
        %v2700 = vadd.f32 0.0, %v2699
        %2701 = vmatprep.mubr.bf16.mxu0 0
        %2702 = vmatmul.mubr.bf16.gmra.mrb[0].mxu0 %v2592
        %v2703 = vpop.f32.mrb[0].mxu0
        %v2704 = vadd.f32 0.0, %v2703
        %v2705 = vpop.f32.mrb[0].mxu0
        %v2706 = vadd.f32 0.0, %v2705
        %v2707 = vpop.f32.mrb[0].mxu0
        %v2708 = vadd.f32 0.0, %v2707
        %v2709 = vpop.f32.mrb[0].mxu0
        %v2710 = vadd.f32 0.0, %v2709
        %2711 = vdwg.mxu0
        %v2712 = vadd.f32 %v2488, %v2641
        %v2713 = vadd.f32 %v2489, %v2643
        %v2714 = vadd.f32 %v2490, %v2694
        %v2715 = vadd.f32 %v2491, %v2696
        %v2716 = vadd.f32 %v2492, %v2645
        %v2717 = vadd.f32 %v2493, %v2647
        %v2718 = vadd.f32 %v2494, %v2698
        %v2719 = vadd.f32 %v2495, %v2700
        %v2720 = vadd.f32 %v2496, %v2651
        %v2721 = vadd.f32 %v2497, %v2653
        %v2722 = vadd.f32 %v2498, %v2704
        %v2723 = vadd.f32 %v2499, %v2706
        %v2724 = vadd.f32 %v2500, %v2655
        %v2725 = vadd.f32 %v2501, %v2657
        %v2726 = vadd.f32 %v2502, %v2708
        %v2727 = vadd.f32 %v2503, %v2710
        %s2728 = scalar_lea.vmem [#allocation6], 80
        %v2729 = vld [vmem:[%s2728] sm:$0xf]
        %v2730 = vld [vmem:[%s2728 + $0x4] sm:$0xf]
        %v2731 = vld [vmem:[%s2728 + $0x8] sm:$0xf]
        %v2732 = vld [vmem:[%s2728 + $0xc] sm:$0xf]
        %v2737 = vunpack.c.l.b16 %v2729
        %v2738 = vunpack.c.l.b16 %v2730
        %v2739 = vunpack.c.l.b16 %v2731
        %v2740 = vunpack.c.l.b16 %v2732
        %v2741 = vpack.c.b16 %v2738, %v2737
        %v2742 = vpack.c.b16 %v2740, %v2739
        %2743 = vrot.lane.b32.xlu0 %v1670, 123
        %v2744 = vpop.permute.xlu0 %2743
        %2745 = vrot.lane.b32.xlu0 %v1671, 123
        %v2746 = vpop.permute.xlu0 %2745
        %2747 = vrot.lane.b32.xlu0 %v1672, 123
        %v2748 = vpop.permute.xlu0 %2747
        %2749 = vrot.lane.b32.xlu0 %v1673, 123
        %v2750 = vpop.permute.xlu0 %2749
        %2751 = vrot.lane.b32.xlu0 %v1674, 123
        %v2752 = vpop.permute.xlu0 %2751
        %2753 = vrot.lane.b32.xlu0 %v1675, 123
        %v2754 = vpop.permute.xlu0 %2753
        %2755 = vrot.lane.b32.xlu0 %v1676, 123
        %v2756 = vpop.permute.xlu0 %2755
        %2757 = vrot.lane.b32.xlu0 %v1677, 123
        %v2758 = vpop.permute.xlu0 %2757
        %2759 = vrot.lane.b32.xlu0 %v1678, 123
        %v2760 = vpop.permute.xlu0 %2759
        %2761 = vrot.lane.b32.xlu0 %v1679, 123
        %v2762 = vpop.permute.xlu0 %2761
        %2763 = vrot.lane.b32.xlu0 %v1680, 123
        %v2764 = vpop.permute.xlu0 %2763
        %2765 = vrot.lane.b32.xlu0 %v1681, 123
        %v2766 = vpop.permute.xlu0 %2765
        %2767 = vrot.lane.b32.xlu0 %v1682, 123
        %v2768 = vpop.permute.xlu0 %2767
        %2769 = vrot.lane.b32.xlu0 %v1683, 123
        %v2770 = vpop.permute.xlu0 %2769
        %2771 = vrot.lane.b32.xlu0 %v1684, 123
        %v2772 = vpop.permute.xlu0 %2771
        %2773 = vrot.lane.b32.xlu0 %v1685, 123
        %v2774 = vpop.permute.xlu0 %2773
        %2775 = vrot.lane.b32.xlu0 %v1686, 123
        %v2776 = vpop.permute.xlu0 %2775
        %2777 = vrot.lane.b32.xlu0 %v1687, 123
        %v2778 = vpop.permute.xlu0 %2777
        %2779 = vrot.lane.b32.xlu0 %v1688, 123
        %v2780 = vpop.permute.xlu0 %2779
        %2781 = vrot.lane.b32.xlu0 %v1689, 123
        %v2782 = vpop.permute.xlu0 %2781
        %vm2783 = vcmask 1006592
        %v2784 = vsel %vm2783, %v2744, %v2746
        %v2785 = vsel %vm2783, %v2746, %v2748
        %v2786 = vsel %vm2783, %v2748, %v2750
        %v2787 = vsel %vm2783, %v2750, %v2752
        %v2788 = vsel %vm2783, %v2754, %v2756
        %v2789 = vsel %vm2783, %v2756, %v2758
        %v2790 = vsel %vm2783, %v2758, %v2760
        %v2791 = vsel %vm2783, %v2760, %v2762
        %v2792 = vsel %vm2783, %v2764, %v2766
        %v2793 = vsel %vm2783, %v2766, %v2768
        %v2794 = vsel %vm2783, %v2768, %v2770
        %v2795 = vsel %vm2783, %v2770, %v2772
        %v2796 = vsel %vm2783, %v2774, %v2776
        %v2797 = vsel %vm2783, %v2776, %v2778
        %v2798 = vsel %vm2783, %v2778, %v2780
        %v2799 = vsel %vm2783, %v2780, %v2782
        %v2813 = vsel %vm1206, %v2741, 0
        %v2816 = vsel %vm1206, %v2742, 0
        %v2819 = vsel %vm685, %v2796, 0
        %v2822 = vsel %vm685, %v2797, 0
        %v2825 = vsel %vm685, %v2798, 0
        %v2828 = vsel %vm685, %v2799, 0
        %2830 = vmatprep.subr.bf16.mxu0 %v2785
        %2831 = vmatpush1.bf16.msra.mxu0 %v2784
        %2832 = vmatprep.subr.bf16.mxu0 %v2789
        %2833 = vmatpush1.bf16.msra.mxu0 %v2788
        %2834 = vmatprep.subr.bf16.mxu0 %v2793
        %2835 = vmatpush1.bf16.msra.mxu0 %v2792
        %2836 = vmatprep.subr.bf16.mxu0 %v2822
        %2837 = vmatpush1.bf16.msra.mxu0 %v2819
        %2838 = vmatprep.subr.bf16.mxu0 0
        %2839 = vmatpush1.bf16.msra.mxu0 0
        %2840 = vmatprep.subr.bf16.mxu0 0
        %2841 = vmatpush1.bf16.msra.mxu0 0
        %2842 = vmatprep.subr.bf16.mxu0 0
        %2843 = vmatpush1.bf16.msra.mxu0 0
        %2844 = vmatprep.subr.bf16.mxu0 0
        %2845 = vmatpush1.bf16.msra.mxu0 0
        %2846 = vmatprep.subr.bf16.mxu0 0
        %2847 = vmatpush1.bf16.msra.mxu0 0
        %2848 = vmatprep.subr.bf16.mxu0 0
        %2849 = vmatpush1.bf16.msra.mxu0 0
        %2850 = vmatprep.subr.bf16.mxu0 0
        %2851 = vmatpush1.bf16.msra.mxu0 0
        %2852 = vmatprep.subr.bf16.mxu0 0
        %2853 = vmatpush1.bf16.msra.mxu0 0
        %2854 = vmatprep.subr.bf16.mxu0 0
        %2855 = vmatpush1.bf16.msra.mxu0 0
        %2856 = vmatprep.subr.bf16.mxu0 0
        %2857 = vmatpush1.bf16.msra.mxu0 0
        %2858 = vmatprep.subr.bf16.mxu0 0
        %2859 = vmatpush1.bf16.msra.mxu0 0
        %2860 = vmatprep.subr.bf16.mxu0 0
        %2861 = vmatpush1.bf16.msra.mxu0 0
        %2862 = vmatprep.mubr.bf16.mxu0 0
        %2863 = vmatmul.mubr.bf16.gmra.mrb[0].mxu0 %v2813
        %v2864 = vpop.f32.mrb[0].mxu0
        %v2865 = vadd.f32 0.0, %v2864
        %v2866 = vpop.f32.mrb[0].mxu0
        %v2867 = vadd.f32 0.0, %v2866
        %v2868 = vpop.f32.mrb[0].mxu0
        %v2869 = vadd.f32 0.0, %v2868
        %v2870 = vpop.f32.mrb[0].mxu0
        %v2871 = vadd.f32 0.0, %v2870
        %2872 = vmatprep.mubr.bf16.mxu0 0
        %2873 = vmatmul.mubr.bf16.gmra.mrb[0].mxu0 %v2816
        %v2874 = vpop.f32.mrb[0].mxu0
        %v2875 = vadd.f32 0.0, %v2874
        %v2876 = vpop.f32.mrb[0].mxu0
        %v2877 = vadd.f32 0.0, %v2876
        %v2878 = vpop.f32.mrb[0].mxu0
        %v2879 = vadd.f32 0.0, %v2878
        %v2880 = vpop.f32.mrb[0].mxu0
        %v2881 = vadd.f32 0.0, %v2880
        %2882 = vdwg.mxu0
        %2883 = vmatprep.subr.bf16.mxu0 %v2787
        %2884 = vmatpush1.bf16.msra.mxu0 %v2786
        %2885 = vmatprep.subr.bf16.mxu0 %v2791
        %2886 = vmatpush1.bf16.msra.mxu0 %v2790
        %2887 = vmatprep.subr.bf16.mxu0 %v2795
        %2888 = vmatpush1.bf16.msra.mxu0 %v2794
        %2889 = vmatprep.subr.bf16.mxu0 %v2828
        %2890 = vmatpush1.bf16.msra.mxu0 %v2825
        %2891 = vmatprep.subr.bf16.mxu0 0
        %2892 = vmatpush1.bf16.msra.mxu0 0
        %2893 = vmatprep.subr.bf16.mxu0 0
        %2894 = vmatpush1.bf16.msra.mxu0 0
        %2895 = vmatprep.subr.bf16.mxu0 0
        %2896 = vmatpush1.bf16.msra.mxu0 0
        %2897 = vmatprep.subr.bf16.mxu0 0
        %2898 = vmatpush1.bf16.msra.mxu0 0
        %2899 = vmatprep.subr.bf16.mxu0 0
        %2900 = vmatpush1.bf16.msra.mxu0 0
        %2901 = vmatprep.subr.bf16.mxu0 0
        %2902 = vmatpush1.bf16.msra.mxu0 0
        %2903 = vmatprep.subr.bf16.mxu0 0
        %2904 = vmatpush1.bf16.msra.mxu0 0
        %2905 = vmatprep.subr.bf16.mxu0 0
        %2906 = vmatpush1.bf16.msra.mxu0 0
        %2907 = vmatprep.subr.bf16.mxu0 0
        %2908 = vmatpush1.bf16.msra.mxu0 0
        %2909 = vmatprep.subr.bf16.mxu0 0
        %2910 = vmatpush1.bf16.msra.mxu0 0
        %2911 = vmatprep.subr.bf16.mxu0 0
        %2912 = vmatpush1.bf16.msra.mxu0 0
        %2913 = vmatprep.subr.bf16.mxu0 0
        %2914 = vmatpush1.bf16.msra.mxu0 0
        %2915 = vmatprep.mubr.bf16.mxu0 0
        %2916 = vmatmul.mubr.bf16.gmra.mrb[0].mxu0 %v2813
        %v2917 = vpop.f32.mrb[0].mxu0
        %v2918 = vadd.f32 0.0, %v2917
        %v2919 = vpop.f32.mrb[0].mxu0
        %v2920 = vadd.f32 0.0, %v2919
        %v2921 = vpop.f32.mrb[0].mxu0
        %v2922 = vadd.f32 0.0, %v2921
        %v2923 = vpop.f32.mrb[0].mxu0
        %v2924 = vadd.f32 0.0, %v2923
        %2925 = vmatprep.mubr.bf16.mxu0 0
        %2926 = vmatmul.mubr.bf16.gmra.mrb[0].mxu0 %v2816
        %v2927 = vpop.f32.mrb[0].mxu0
        %v2928 = vadd.f32 0.0, %v2927
        %v2929 = vpop.f32.mrb[0].mxu0
        %v2930 = vadd.f32 0.0, %v2929
        %v2931 = vpop.f32.mrb[0].mxu0
        %v2932 = vadd.f32 0.0, %v2931
        %v2933 = vpop.f32.mrb[0].mxu0
        %v2934 = vadd.f32 0.0, %v2933
        %2935 = vdwg.mxu0
        %v2936 = vadd.f32 %v2712, %v2865
        %v2937 = vadd.f32 %v2713, %v2867
        %v2938 = vadd.f32 %v2714, %v2918
        %v2939 = vadd.f32 %v2715, %v2920
        %v2940 = vadd.f32 %v2716, %v2869
        %v2941 = vadd.f32 %v2717, %v2871
        %v2942 = vadd.f32 %v2718, %v2922
        %v2943 = vadd.f32 %v2719, %v2924
        %v2944 = vadd.f32 %v2720, %v2875
        %v2945 = vadd.f32 %v2721, %v2877
        %v2946 = vadd.f32 %v2722, %v2928
        %v2947 = vadd.f32 %v2723, %v2930
        %v2948 = vadd.f32 %v2724, %v2879
        %v2949 = vadd.f32 %v2725, %v2881
        %v2950 = vadd.f32 %v2726, %v2932
        %v2951 = vadd.f32 %v2727, %v2934
        %s2952 = scalar_lea.vmem [#allocation6], 96
        %v2953 = vld [vmem:[%s2952] sm:$0xf]
        %v2954 = vld [vmem:[%s2952 + $0x4] sm:$0xf]
        %v2955 = vld [vmem:[%s2952 + $0x8] sm:$0xf]
        %v2956 = vld [vmem:[%s2952 + $0xc] sm:$0xf]
        %v2961 = vunpack.c.l.b16 %v2953
        %v2962 = vunpack.c.l.b16 %v2954
        %v2963 = vunpack.c.l.b16 %v2955
        %v2964 = vunpack.c.l.b16 %v2956
        %v2965 = vpack.c.b16 %v2962, %v2961
        %v2966 = vpack.c.b16 %v2964, %v2963
        %2967 = vrot.lane.b32.xlu0 %v1670, 122
        %v2968 = vpop.permute.xlu0 %2967
        %2969 = vrot.lane.b32.xlu0 %v1671, 122
        %v2970 = vpop.permute.xlu0 %2969
        %2971 = vrot.lane.b32.xlu0 %v1672, 122
        %v2972 = vpop.permute.xlu0 %2971
        %2973 = vrot.lane.b32.xlu0 %v1673, 122
        %v2974 = vpop.permute.xlu0 %2973
        %2975 = vrot.lane.b32.xlu0 %v1674, 122
        %v2976 = vpop.permute.xlu0 %2975
        %2977 = vrot.lane.b32.xlu0 %v1675, 122
        %v2978 = vpop.permute.xlu0 %2977
        %2979 = vrot.lane.b32.xlu0 %v1676, 122
        %v2980 = vpop.permute.xlu0 %2979
        %2981 = vrot.lane.b32.xlu0 %v1677, 122
        %v2982 = vpop.permute.xlu0 %2981
        %2983 = vrot.lane.b32.xlu0 %v1678, 122
        %v2984 = vpop.permute.xlu0 %2983
        %2985 = vrot.lane.b32.xlu0 %v1679, 122
        %v2986 = vpop.permute.xlu0 %2985
        %2987 = vrot.lane.b32.xlu0 %v1680, 122
        %v2988 = vpop.permute.xlu0 %2987
        %2989 = vrot.lane.b32.xlu0 %v1681, 122
        %v2990 = vpop.permute.xlu0 %2989
        %2991 = vrot.lane.b32.xlu0 %v1682, 122
        %v2992 = vpop.permute.xlu0 %2991
        %2993 = vrot.lane.b32.xlu0 %v1683, 122
        %v2994 = vpop.permute.xlu0 %2993
        %2995 = vrot.lane.b32.xlu0 %v1684, 122
        %v2996 = vpop.permute.xlu0 %2995
        %2997 = vrot.lane.b32.xlu0 %v1685, 122
        %v2998 = vpop.permute.xlu0 %2997
        %2999 = vrot.lane.b32.xlu0 %v1686, 122
        %v3000 = vpop.permute.xlu0 %2999
        %3001 = vrot.lane.b32.xlu0 %v1687, 122
        %v3002 = vpop.permute.xlu0 %3001
        %3003 = vrot.lane.b32.xlu0 %v1688, 122
        %v3004 = vpop.permute.xlu0 %3003
        %3005 = vrot.lane.b32.xlu0 %v1689, 122
        %v3006 = vpop.permute.xlu0 %3005
        %vm3007 = vcmask 998400
        %v3008 = vsel %vm3007, %v2968, %v2970
        %v3009 = vsel %vm3007, %v2970, %v2972
        %v3010 = vsel %vm3007, %v2972, %v2974
        %v3011 = vsel %vm3007, %v2974, %v2976
        %v3012 = vsel %vm3007, %v2978, %v2980
        %v3013 = vsel %vm3007, %v2980, %v2982
        %v3014 = vsel %vm3007, %v2982, %v2984
        %v3015 = vsel %vm3007, %v2984, %v2986
        %v3016 = vsel %vm3007, %v2988, %v2990
        %v3017 = vsel %vm3007, %v2990, %v2992
        %v3018 = vsel %vm3007, %v2992, %v2994
        %v3019 = vsel %vm3007, %v2994, %v2996
        %v3020 = vsel %vm3007, %v2998, %v3000
        %v3021 = vsel %vm3007, %v3000, %v3002
        %v3022 = vsel %vm3007, %v3002, %v3004
        %v3023 = vsel %vm3007, %v3004, %v3006
        %v3037 = vsel %vm1206, %v2965, 0
        %v3040 = vsel %vm1206, %v2966, 0
        %v3043 = vsel %vm685, %v3020, 0
        %v3046 = vsel %vm685, %v3021, 0
        %v3049 = vsel %vm685, %v3022, 0
        %v3052 = vsel %vm685, %v3023, 0
        %3054 = vmatprep.subr.bf16.mxu0 %v3009
        %3055 = vmatpush1.bf16.msra.mxu0 %v3008
        %3056 = vmatprep.subr.bf16.mxu0 %v3013
        %3057 = vmatpush1.bf16.msra.mxu0 %v3012
        %3058 = vmatprep.subr.bf16.mxu0 %v3017
        %3059 = vmatpush1.bf16.msra.mxu0 %v3016
        %3060 = vmatprep.subr.bf16.mxu0 %v3046
        %3061 = vmatpush1.bf16.msra.mxu0 %v3043
        %3062 = vmatprep.subr.bf16.mxu0 0
        %3063 = vmatpush1.bf16.msra.mxu0 0
        %3064 = vmatprep.subr.bf16.mxu0 0
        %3065 = vmatpush1.bf16.msra.mxu0 0
        %3066 = vmatprep.subr.bf16.mxu0 0
        %3067 = vmatpush1.bf16.msra.mxu0 0
        %3068 = vmatprep.subr.bf16.mxu0 0
        %3069 = vmatpush1.bf16.msra.mxu0 0
        %3070 = vmatprep.subr.bf16.mxu0 0
        %3071 = vmatpush1.bf16.msra.mxu0 0
        %3072 = vmatprep.subr.bf16.mxu0 0
        %3073 = vmatpush1.bf16.msra.mxu0 0
        %3074 = vmatprep.subr.bf16.mxu0 0
        %3075 = vmatpush1.bf16.msra.mxu0 0
        %3076 = vmatprep.subr.bf16.mxu0 0
        %3077 = vmatpush1.bf16.msra.mxu0 0
        %3078 = vmatprep.subr.bf16.mxu0 0
        %3079 = vmatpush1.bf16.msra.mxu0 0
        %3080 = vmatprep.subr.bf16.mxu0 0
        %3081 = vmatpush1.bf16.msra.mxu0 0
        %3082 = vmatprep.subr.bf16.mxu0 0
        %3083 = vmatpush1.bf16.msra.mxu0 0
        %3084 = vmatprep.subr.bf16.mxu0 0
        %3085 = vmatpush1.bf16.msra.mxu0 0
        %3086 = vmatprep.mubr.bf16.mxu0 0
        %3087 = vmatmul.mubr.bf16.gmra.mrb[0].mxu0 %v3037
        %v3088 = vpop.f32.mrb[0].mxu0
        %v3089 = vadd.f32 0.0, %v3088
        %v3090 = vpop.f32.mrb[0].mxu0
        %v3091 = vadd.f32 0.0, %v3090
        %v3092 = vpop.f32.mrb[0].mxu0
        %v3093 = vadd.f32 0.0, %v3092
        %v3094 = vpop.f32.mrb[0].mxu0
        %v3095 = vadd.f32 0.0, %v3094
        %3096 = vmatprep.mubr.bf16.mxu0 0
        %3097 = vmatmul.mubr.bf16.gmra.mrb[0].mxu0 %v3040
        %v3098 = vpop.f32.mrb[0].mxu0
        %v3099 = vadd.f32 0.0, %v3098
        %v3100 = vpop.f32.mrb[0].mxu0
        %v3101 = vadd.f32 0.0, %v3100
        %v3102 = vpop.f32.mrb[0].mxu0
        %v3103 = vadd.f32 0.0, %v3102
        %v3104 = vpop.f32.mrb[0].mxu0
        %v3105 = vadd.f32 0.0, %v3104
        %3106 = vdwg.mxu0
        %3107 = vmatprep.subr.bf16.mxu0 %v3011
        %3108 = vmatpush1.bf16.msra.mxu0 %v3010
        %3109 = vmatprep.subr.bf16.mxu0 %v3015
        %3110 = vmatpush1.bf16.msra.mxu0 %v3014
        %3111 = vmatprep.subr.bf16.mxu0 %v3019
        %3112 = vmatpush1.bf16.msra.mxu0 %v3018
        %3113 = vmatprep.subr.bf16.mxu0 %v3052
        %3114 = vmatpush1.bf16.msra.mxu0 %v3049
        %3115 = vmatprep.subr.bf16.mxu0 0
        %3116 = vmatpush1.bf16.msra.mxu0 0
        %3117 = vmatprep.subr.bf16.mxu0 0
        %3118 = vmatpush1.bf16.msra.mxu0 0
        %3119 = vmatprep.subr.bf16.mxu0 0
        %3120 = vmatpush1.bf16.msra.mxu0 0
        %3121 = vmatprep.subr.bf16.mxu0 0
        %3122 = vmatpush1.bf16.msra.mxu0 0
        %3123 = vmatprep.subr.bf16.mxu0 0
        %3124 = vmatpush1.bf16.msra.mxu0 0
        %3125 = vmatprep.subr.bf16.mxu0 0
        %3126 = vmatpush1.bf16.msra.mxu0 0
        %3127 = vmatprep.subr.bf16.mxu0 0
        %3128 = vmatpush1.bf16.msra.mxu0 0
        %3129 = vmatprep.subr.bf16.mxu0 0
        %3130 = vmatpush1.bf16.msra.mxu0 0
        %3131 = vmatprep.subr.bf16.mxu0 0
        %3132 = vmatpush1.bf16.msra.mxu0 0
        %3133 = vmatprep.subr.bf16.mxu0 0
        %3134 = vmatpush1.bf16.msra.mxu0 0
        %3135 = vmatprep.subr.bf16.mxu0 0
        %3136 = vmatpush1.bf16.msra.mxu0 0
        %3137 = vmatprep.subr.bf16.mxu0 0
        %3138 = vmatpush1.bf16.msra.mxu0 0
        %3139 = vmatprep.mubr.bf16.mxu0 0
        %3140 = vmatmul.mubr.bf16.gmra.mrb[0].mxu0 %v3037
        %v3141 = vpop.f32.mrb[0].mxu0
        %v3142 = vadd.f32 0.0, %v3141
        %v3143 = vpop.f32.mrb[0].mxu0
        %v3144 = vadd.f32 0.0, %v3143
        %v3145 = vpop.f32.mrb[0].mxu0
        %v3146 = vadd.f32 0.0, %v3145
        %v3147 = vpop.f32.mrb[0].mxu0
        %v3148 = vadd.f32 0.0, %v3147
        %3149 = vmatprep.mubr.bf16.mxu0 0
        %3150 = vmatmul.mubr.bf16.gmra.mrb[0].mxu0 %v3040
        %v3151 = vpop.f32.mrb[0].mxu0
        %v3152 = vadd.f32 0.0, %v3151
        %v3153 = vpop.f32.mrb[0].mxu0
        %v3154 = vadd.f32 0.0, %v3153
        %v3155 = vpop.f32.mrb[0].mxu0
        %v3156 = vadd.f32 0.0, %v3155
        %v3157 = vpop.f32.mrb[0].mxu0
        %v3158 = vadd.f32 0.0, %v3157
        %3159 = vdwg.mxu0
        %v3160 = vadd.f32 %v2936, %v3089
        %v3161 = vadd.f32 %v2937, %v3091
        %v3162 = vadd.f32 %v2938, %v3142
        %v3163 = vadd.f32 %v2939, %v3144
        %v3164 = vadd.f32 %v2940, %v3093
        %v3165 = vadd.f32 %v2941, %v3095
        %v3166 = vadd.f32 %v2942, %v3146
        %v3167 = vadd.f32 %v2943, %v3148
        %v3168 = vadd.f32 %v2944, %v3099
        %v3169 = vadd.f32 %v2945, %v3101
        %v3170 = vadd.f32 %v2946, %v3152
        %v3171 = vadd.f32 %v2947, %v3154
        %v3172 = vadd.f32 %v2948, %v3103
        %v3173 = vadd.f32 %v2949, %v3105
        %v3174 = vadd.f32 %v2950, %v3156
        %v3175 = vadd.f32 %v2951, %v3158
        %v3176 = vld [vmem:[%s2] sm:$0xff]
        %v3177 = vld [vmem:[%s2 + $0x8] sm:$0xff]
        %v3178 = vld [vmem:[%s2 + $0x10] sm:$0xff]
        %v3179 = vld [vmem:[%s2 + $0x18] sm:$0xff]
        %3181 = vset.pattern.permute.xlu0 0
        %3182 = vperm.xlu0 %3181, %v3176
        %v3183 = vpop.permute.xlu0 %3182
        %3186 = vset.pattern.permute.xlu0 0
        %3187 = vperm.xlu0 %3186, %v3177
        %v3188 = vpop.permute.xlu0 %3187
        %3191 = vset.pattern.permute.xlu0 0
        %3192 = vperm.xlu0 %3191, %v3178
        %v3193 = vpop.permute.xlu0 %3192
        %3196 = vset.pattern.permute.xlu0 0
        %3197 = vperm.xlu0 %3196, %v3179
        %v3198 = vpop.permute.xlu0 %3197
        %v3200 = vadd.f32 %v3160, %v3183
        %v3201 = vadd.f32 %v3161, %v3183
        %v3202 = vadd.f32 %v3162, %v3183
        %v3203 = vadd.f32 %v3163, %v3183
        %v3204 = vadd.f32 %v3164, %v3188
        %v3205 = vadd.f32 %v3165, %v3188
        %v3206 = vadd.f32 %v3166, %v3188
        %v3207 = vadd.f32 %v3167, %v3188
        %v3208 = vadd.f32 %v3168, %v3193
        %v3209 = vadd.f32 %v3169, %v3193
        %v3210 = vadd.f32 %v3170, %v3193
        %v3211 = vadd.f32 %v3171, %v3193
        %v3212 = vadd.f32 %v3172, %v3198
        %v3213 = vadd.f32 %v3173, %v3198
        %v3214 = vadd.f32 %v3174, %v3198
        %v3215 = vadd.f32 %v3175, %v3198
        %v3216 = vmax.f32 %v3200, 0.0
        %v3217 = vmax.f32 %v3201, 0.0
        %v3218 = vmax.f32 %v3202, 0.0
        %v3219 = vmax.f32 %v3203, 0.0
        %v3220 = vmax.f32 %v3204, 0.0
        %v3221 = vmax.f32 %v3205, 0.0
        %v3222 = vmax.f32 %v3206, 0.0
        %v3223 = vmax.f32 %v3207, 0.0
        %v3224 = vmax.f32 %v3208, 0.0
        %v3225 = vmax.f32 %v3209, 0.0
        %v3226 = vmax.f32 %v3210, 0.0
        %v3227 = vmax.f32 %v3211, 0.0
        %v3228 = vmax.f32 %v3212, 0.0
        %v3229 = vmax.f32 %v3213, 0.0
        %v3230 = vmax.f32 %v3214, 0.0
        %v3231 = vmax.f32 %v3215, 0.0
        %v3232 = vld [vmem:[%s3] sm:$0x1]
        %s3233 = sld [smem:[#allocation2]]
        %v3234 = vstv %s3233
        %v3236 = vsel %vm509, %v3232, 0
        %3238 = vmatprep.subr.mxu0 %v3217
        %3239 = vmatpush1.msra.mxu0 %v3216
        %3240 = vmatprep.subr.mxu0 %v3221
        %3241 = vmatpush1.msra.mxu0 %v3220
        %3242 = vmatprep.subr.mxu0 %v3225
        %3243 = vmatpush1.msra.mxu0 %v3224
        %3244 = vmatprep.subr.mxu0 %v3229
        %3245 = vmatpush1.msra.mxu0 %v3228
        %3246 = vmatprep.subr.mxu0 0.0
        %3247 = vmatpush1.msra.mxu0 0.0
        %3248 = vmatprep.subr.mxu0 0.0
        %3249 = vmatpush1.msra.mxu0 0.0
        %3250 = vmatprep.subr.mxu0 0.0
        %3251 = vmatpush1.msra.mxu0 0.0
        %3252 = vmatprep.subr.mxu0 0.0
        %3253 = vmatpush1.msra.mxu0 0.0
        %3254 = vmatprep.subr.mxu0 0.0
        %3255 = vmatpush1.msra.mxu0 0.0
        %3256 = vmatprep.subr.mxu0 0.0
        %3257 = vmatpush1.msra.mxu0 0.0
        %3258 = vmatprep.subr.mxu0 0.0
        %3259 = vmatpush1.msra.mxu0 0.0
        %3260 = vmatprep.subr.mxu0 0.0
        %3261 = vmatpush1.msra.mxu0 0.0
        %3262 = vmatprep.subr.mxu0 0.0
        %3263 = vmatpush1.msra.mxu0 0.0
        %3264 = vmatprep.subr.mxu0 0.0
        %3265 = vmatpush1.msra.mxu0 0.0
        %3266 = vmatprep.subr.mxu0 0.0
        %3267 = vmatpush1.msra.mxu0 0.0
        %3268 = vmatprep.subr.mxu0 0.0
        %3269 = vmatpush1.msra.mxu0 0.0
        %3270 = vmatprep.subr.mxu0 0.0
        %3271 = vmatpush1.msra.mxu0 0.0
        %3272 = vmatprep.subr.mxu0 0.0
        %3273 = vmatpush1.msra.mxu0 0.0
        %3274 = vmatprep.subr.mxu0 0.0
        %3275 = vmatpush1.msra.mxu0 0.0
        %3276 = vmatprep.subr.mxu0 0.0
        %3277 = vmatpush1.msra.mxu0 0.0
        %3278 = vmatprep.subr.mxu0 0.0
        %3279 = vmatpush1.msra.mxu0 0.0
        %3280 = vmatprep.subr.mxu0 0.0
        %3281 = vmatpush1.msra.mxu0 0.0
        %3282 = vmatprep.subr.mxu0 0.0
        %3283 = vmatpush1.msra.mxu0 0.0
        %3284 = vmatprep.subr.mxu0 0.0
        %3285 = vmatpush1.msra.mxu0 0.0
        %3286 = vmatprep.subr.mxu0 0.0
        %3287 = vmatpush1.msra.mxu0 0.0
        %3288 = vmatprep.subr.mxu0 0.0
        %3289 = vmatpush1.msra.mxu0 0.0
        %3290 = vmatprep.subr.mxu0 0.0
        %3291 = vmatpush1.msra.mxu0 0.0
        %3292 = vmatprep.subr.mxu0 0.0
        %3293 = vmatpush1.msra.mxu0 0.0
        %3294 = vmatprep.subr.mxu0 0.0
        %3295 = vmatpush1.msra.mxu0 0.0
        %3296 = vmatprep.subr.mxu0 0.0
        %3297 = vmatpush1.msra.mxu0 0.0
        %3298 = vmatprep.subr.mxu0 0.0
        %3299 = vmatpush1.msra.mxu0 0.0
        %3300 = vmatprep.subr.mxu0 0.0
        %3301 = vmatpush1.msra.mxu0 0.0
        %3302 = vmatprep.mubr.f32.mxu0 0.0
        %3303 = vmatmul.mubr.f32.gmra.mrb[0].mxu0 %v3236
        %v3304 = vpop.f32.mrb[0].mxu0
        %v3305 = vadd.f32 %v3234, %v3304
        %v3306 = vpop.f32.mrb[0].mxu0
        %v3307 = vadd.f32 %v3234, %v3306
        %3308 = vdwg.mxu0
        %3309 = vmatprep.subr.mxu0 %v3219
        %3310 = vmatpush1.msra.mxu0 %v3218
        %3311 = vmatprep.subr.mxu0 %v3223
        %3312 = vmatpush1.msra.mxu0 %v3222
        %3313 = vmatprep.subr.mxu0 %v3227
        %3314 = vmatpush1.msra.mxu0 %v3226
        %3315 = vmatprep.subr.mxu0 %v3231
        %3316 = vmatpush1.msra.mxu0 %v3230
        %3317 = vmatprep.subr.mxu0 0.0
        %3318 = vmatpush1.msra.mxu0 0.0
        %3319 = vmatprep.subr.mxu0 0.0
        %3320 = vmatpush1.msra.mxu0 0.0
        %3321 = vmatprep.subr.mxu0 0.0
        %3322 = vmatpush1.msra.mxu0 0.0
        %3323 = vmatprep.subr.mxu0 0.0
        %3324 = vmatpush1.msra.mxu0 0.0
        %3325 = vmatprep.subr.mxu0 0.0
        %3326 = vmatpush1.msra.mxu0 0.0
        %3327 = vmatprep.subr.mxu0 0.0
        %3328 = vmatpush1.msra.mxu0 0.0
        %3329 = vmatprep.subr.mxu0 0.0
        %3330 = vmatpush1.msra.mxu0 0.0
        %3331 = vmatprep.subr.mxu0 0.0
        %3332 = vmatpush1.msra.mxu0 0.0
        %3333 = vmatprep.subr.mxu0 0.0
        %3334 = vmatpush1.msra.mxu0 0.0
        %3335 = vmatprep.subr.mxu0 0.0
        %3336 = vmatpush1.msra.mxu0 0.0
        %3337 = vmatprep.subr.mxu0 0.0
        %3338 = vmatpush1.msra.mxu0 0.0
        %3339 = vmatprep.subr.mxu0 0.0
        %3340 = vmatpush1.msra.mxu0 0.0
        %3341 = vmatprep.subr.mxu0 0.0
        %3342 = vmatpush1.msra.mxu0 0.0
        %3343 = vmatprep.subr.mxu0 0.0
        %3344 = vmatpush1.msra.mxu0 0.0
        %3345 = vmatprep.subr.mxu0 0.0
        %3346 = vmatpush1.msra.mxu0 0.0
        %3347 = vmatprep.subr.mxu0 0.0
        %3348 = vmatpush1.msra.mxu0 0.0
        %3349 = vmatprep.subr.mxu0 0.0
        %3350 = vmatpush1.msra.mxu0 0.0
        %3351 = vmatprep.subr.mxu0 0.0
        %3352 = vmatpush1.msra.mxu0 0.0
        %3353 = vmatprep.subr.mxu0 0.0
        %3354 = vmatpush1.msra.mxu0 0.0
        %3355 = vmatprep.subr.mxu0 0.0
        %3356 = vmatpush1.msra.mxu0 0.0
        %3357 = vmatprep.subr.mxu0 0.0
        %3358 = vmatpush1.msra.mxu0 0.0
        %3359 = vmatprep.subr.mxu0 0.0
        %3360 = vmatpush1.msra.mxu0 0.0
        %3361 = vmatprep.subr.mxu0 0.0
        %3362 = vmatpush1.msra.mxu0 0.0
        %3363 = vmatprep.subr.mxu0 0.0
        %3364 = vmatpush1.msra.mxu0 0.0
        %3365 = vmatprep.subr.mxu0 0.0
        %3366 = vmatpush1.msra.mxu0 0.0
        %3367 = vmatprep.subr.mxu0 0.0
        %3368 = vmatpush1.msra.mxu0 0.0
        %3369 = vmatprep.subr.mxu0 0.0
        %3370 = vmatpush1.msra.mxu0 0.0
        %3371 = vmatprep.subr.mxu0 0.0
        %3372 = vmatpush1.msra.mxu0 0.0
        %3373 = vmatprep.mubr.f32.mxu0 0.0
        %3374 = vmatmul.mubr.f32.gmra.mrb[0].mxu0 %v3236
        %v3375 = vpop.f32.mrb[0].mxu0
        %v3376 = vadd.f32 %v3234, %v3375
        %v3377 = vpop.f32.mrb[0].mxu0
        %v3378 = vadd.f32 %v3234, %v3377
        %3379 = vdwg.mxu0
        %v3380 = vmax.f32 %v3305, 0.0
        %v3381 = vmax.f32 %v3307, 0.0
        %v3382 = vmax.f32 %v3376, 0.0
        %v3383 = vmax.f32 %v3378, 0.0
        %3384 = vrot.lane.b32.xlu0 %v299, 7
        %v3385 = vpop.permute.xlu0 %3384
        %3386 = vrot.lane.b32.xlu0 %v308, 7
        %v3387 = vpop.permute.xlu0 %3386
        %3388 = vrot.lane.b32.xlu0 %v450, 7
        %v3389 = vpop.permute.xlu0 %3388
        %3390 = vrot.lane.b32.xlu0 %v569, 7
        %v3391 = vpop.permute.xlu0 %3390
        %3392 = vrot.lane.b32.xlu0 %v620, 7
        %v3393 = vpop.permute.xlu0 %3392
        %vm3394 = vcmask 56320
        %v3395 = vsel %vm3394, %v3385, %v3387
        %v3396 = vsel %vm3394, %v3387, %v3389
        %v3397 = vsel %vm3394, %v3389, %v3391
        %v3398 = vsel %vm3394, %v3391, %v3393
        %v3403 = vadd.f32 %v3380, %v3395
        %v3404 = vadd.f32 %v3381, %v3396
        %v3405 = vadd.f32 %v3382, %v3397
        %v3406 = vadd.f32 %v3383, %v3398
        %v3411 = vcombine.low %v3403, %v3404
        %v3412 = vcombine.low %v3405, %v3406
        %v3414 = vunpack.c.l.s4 1966171168
        %v3415 = vunpack.c.0.s8 %v3414
        %v3416 = vlaneseq
        %v3417 = vshrl.u32 %v3416, 7
        %v3418 = vsub.s32 %v3415, %v3417
        %v3419 = vrot.slane %v3411, %v3418
        %v3421 = vunpack.c.l.s4 1966171168
        %v3422 = vunpack.c.0.s8 %v3421
        %v3423 = vlaneseq
        %v3424 = vshrl.u32 %v3423, 7
        %v3425 = vsub.s32 %v3422, %v3424
        %v3426 = vrot.slane %v3412, %v3425
        %v3427 = vcombine.low %v3419, %v3426
        %v3429 = vunpack.c.l.s4 1966171168
        %v3430 = vunpack.c.0.s8 %v3429
        %v3431 = vlaneseq
        %v3432 = vshrl.u32 %v3431, 7
        %v3433 = vsub.s32 %v3430, %v3432
        %v3434 = vrot.slane %v3427, %v3433
        %v3436 = vlaneseq
        %vm3437 = vcmp.ge.s32.totalorder %v3436, 0
        %vm3438 = vcmp.lt.s32.totalorder %v3436, 512
        %vm3439 = vmand %vm3437, %vm3438
        %3440 = vst.msk [vmem:[%s270] sm:$0xf] %vm3439, %v3434
        %s3441 = sand.u32 %s156, 1
        %s3442 = scalar_lea.sflag [#allocation5], %s3441
        %s3443 = sand.u32 %s156, 1
        %s3444 = smul.addr %s3443, 4
        %s3445 = scalar_lea.vmem [#allocation8], %s3444
        // Predicated region
        $region49: #{tpu_custom_call.1} parent=39 // pred_check
          %p3446 = pneg %p166
        $region50: #{tpu_custom_call.1} parent=39 // pred_check_branch
          %3448 = sbr.rel (%p3446) target = $region52
        $region51: #{tpu_custom_call.1} parent=39 // pred_region
          %s3449 = smul.u32 4, %s29
          %s3451 = ssub.s32 64, 64
          %3452 = vsyncadd %s3442, %s3451
          %s3453 = smul.addr %s28, 12
          %s3454 = sadd.s32 %s3449, %s3453
          %s3455 = smul.addr %s3454, 16
          %s3456 = scalar_lea.hbm %s5, %s3455
          %s3458 = sshll.u32 %s3445, 4
          %s3459 = int_to_ptr.vmem [resolvable:$true] %s3458
          %3461 = dma.vmem_to_hbm [thread:$0]  %s3459, 64, %s3456, %s3442
        $region52: #{tpu_custom_call.1} parent=39 // pred_fallthru
          _
      $region40: #{tpu_custom_call.1} parent=5 // pred_fallthru
        _
      %p3462 = scmp.le.s32.totalorder 2, %s19
      // Predicated region
      $region53: #{tpu_custom_call.1} parent=5 // pred_check
        %p3463 = pneg %p3462
      $region54: #{tpu_custom_call.1} parent=5 // pred_check_branch
        %3465 = sbr.rel (%p3463) target = $region56
      $region55: #{tpu_custom_call.1} parent=5 // pred_region
        %s3466 = ssub.s32 %s19, 2
        // Predicated region
        $region57: #{tpu_custom_call.1} parent=55 // pred_check
          %p3467 = pneg %p172
        $region58: #{tpu_custom_call.1} parent=55 // pred_check_branch
          %3469 = sbr.rel (%p3467) target = $region60
        $region59: #{tpu_custom_call.1} parent=55 // pred_region
          %s3470 = sand.u32 %s157, 1
          %s3471 = scalar_lea.sflag [#allocation5], %s3470
          %s3472 = sand.u32 %s157, 1
          %s3473 = smul.addr %s3472, 4
          %s3474 = scalar_lea.vmem [#allocation8], %s3473
          %3475 = dma.done %s3471, 64
        $region60: #{tpu_custom_call.1} parent=55 // pred_fallthru
          _
      $region56: #{tpu_custom_call.1} parent=5 // pred_fallthru
        _
    $region6: #{tpu_custom_call.1} parent=1 // loop_footer
      %s23 = sadd.s32 1, %s19
    $region7: #{tpu_custom_call.1} parent=1 // loop_footer_branch
      %18 = sbr.rel target = $region3
    $region8: #{tpu_custom_call.1} parent=1 // loop_exit
      _
    %3476 = vsyncpa [#allocation4], 1
    %s3477 = scalar_lea.sflag [#allocation4], 1
    %3478 = vsyncpa %s3477, 1
    %3479 = vsyncpa [#allocation7], 1
    %3480 = vsyncpa [#allocation5], 1
    %s3481 = scalar_lea.sflag [#allocation5], 1
    %3482 = vsyncpa %s3481, 1

</llo_original>
